<compile_context>
chip_gen: v6e
topology: v6e:2x2x1
jax: 0.10.0
libtpu: 0.0.40
codegen_flags: <defaults>
</compile_context>

<pallas_src>
import jax
import jax.numpy as jnp
from jax import lax
from jax.experimental import pallas as pl
from jax.experimental.pallas import tpu as pltpu

# ---- model sizes (small, consistent with the module) ----
T = 8          # sequence length
B = 4          # batch
OBS = 16       # flattened observation dim
H1 = 128       # input_layer width
H = 64         # hidden_layer / LSTM width
N_ACT = 6      # action dim (e.g. Discrete(6))

# ---- padded (vreg-tile aligned) sizes used inside the kernel ----
BP = 8         # batch padded to a full sublane tile
HP = 128       # per-gate / hidden lane width padded to a full 128-lane tile
NPAD = 128     # logits padded to a lane-dense width (sliced back to N_ACT)
G4 = 4 * HP    # packed gate width


def actor_kernel(x_ref, w1_ref, w2_ref, wih_ref, whh_ref, wout_ref,
                 biases_ref, h0_ref, c0_ref,
                 logits_ref, hT_ref, cT_ref,
                 gates_x_ref, hseq_ref):
    # Packed biases: row0=b1(:H1), row1=b2(:H), row2=gate bias(:G4), row3=bout(:NPAD)
    b1 = biases_ref[0:1, :H1]
    b2 = biases_ref[1:2, :H]
    bg = biases_ref[2:3, :]
    bout = biases_ref[3:4, :NPAD]

    # ---- MLP trunk on all timesteps at once: (T*BP, OBS) -> (T*BP, H) ----
    z1 = jnp.tanh(jnp.dot(x_ref[...], w1_ref[...],
                          preferred_element_type=jnp.float32) + b1)
    feat = jnp.tanh(jnp.dot(z1, w2_ref[...],
                            preferred_element_type=jnp.float32) + b2)

    # ---- Hoisted input->gate projection for the WHOLE sequence ----
    gx = jnp.dot(feat, wih_ref[...],
                 preferred_element_type=jnp.float32) + bg
    gates_x_ref[...] = gx.reshape(gates_x_ref.shape)        # (T, BP, 4*HP)

    n_steps = gates_x_ref.shape[0]
    bp = hseq_ref.shape[1]
    hp = hT_ref.shape[1]

    def sigmoid_t(v):
        # sigmoid(x) = 0.5*(tanh(0.5*x)+1): single EUP push, no divide.
        return 0.5 * (jnp.tanh(0.5 * v) + 1.0)

    # ---- Serial LSTM recurrence: only h @ Whh + gate nonlinearities ----
    def step(t, carry):
        h, c = carry                                          # (BP, HP)
        gates = (jnp.dot(h, whh_ref[...],
                         preferred_element_type=jnp.float32)
                 + gates_x_ref[t])                            # (BP, 4*HP)
        # PyTorch gate ordering i, f, g, o; each gate is a full 128-lane tile.
        i_g = sigmoid_t(gates[:, 0 * hp:1 * hp])
        f_g = sigmoid_t(gates[:, 1 * hp:2 * hp])
        g_g = jnp.tanh(gates[:, 2 * hp:3 * hp])
        o_g = sigmoid_t(gates[:, 3 * hp:4 * hp])
        c_new = f_g * c + i_g * g_g
        h_new = o_g * jnp.tanh(c_new)
        hseq_ref[t] = h_new                                   # leading-axis store
        return h_new, c_new

    h_last, c_last = lax.fori_loop(0, n_steps, step,
                                   (h0_ref[...], c0_ref[...]), unroll=True)
    hT_ref[...] = h_last
    cT_ref[...] = c_last

    # ---- Hoisted output projection: one (T*BP, HP) @ (HP, NPAD) matmul ----
    hs = hseq_ref[...].reshape(n_steps * bp, hp)
    logits_ref[...] = (jnp.dot(hs, wout_ref[...],
                               preferred_element_type=jnp.float32)
                       + bout)                                # lane-dense store


def _pad_gate_cols(w):
    """(rows, 4*H) -> (rows, 4*HP): each 64-wide gate in its own 128-lane tile."""
    rows = w.shape[0]
    out = jnp.zeros((rows, G4), jnp.float32)
    for k in range(4):
        out = out.at[:, k * HP:k * HP + H].set(w[:, k * H:(k + 1) * H])
    return out


def prepare_params(params):
    """One-time layout prep (padding / gate re-layout / bias packing).

    Call once and reuse -- keeps the per-step hot path free of wrapper-side
    pad/scatter XLA ops.
    """
    wih_p = _pad_gate_cols(params["wih"].astype(jnp.float32))      # (H, 4*HP)
    whh_p = jnp.zeros((HP, G4), jnp.float32).at[:H, :].set(
        _pad_gate_cols(params["whh"].astype(jnp.float32)))         # (HP, 4*HP)
    wout_p = jnp.zeros((HP, NPAD), jnp.float32).at[:H, :N_ACT].set(
        params["wout"].astype(jnp.float32))                        # (HP, NPAD)
    biases = jnp.zeros((4, G4), jnp.float32)
    biases = biases.at[0, :H1].set(params["b1"].reshape(H1).astype(jnp.float32))
    biases = biases.at[1, :H].set(params["b2"].reshape(H).astype(jnp.float32))
    biases = biases.at[2, :].set(
        _pad_gate_cols(params["bg"].astype(jnp.float32)).reshape(G4))
    biases = biases.at[3, :N_ACT].set(
        params["bout"].reshape(N_ACT).astype(jnp.float32))
    return {
        "w1": params["w1"].astype(jnp.float32),
        "w2": params["w2"].astype(jnp.float32),
        "wih": wih_p,
        "whh": whh_p,
        "wout": wout_p,
        "biases": biases,
    }


@jax.jit
def actor_forward(x, hidden, prep):
    """x: (T, B, OBS); hidden = (h0, c0) each (1, B, H); prep = prepare_params(...)."""
    h0, c0 = hidden

    # Per-call layout plumbing: only the activations get padded here.
    xp = jnp.zeros((T, BP, OBS), jnp.float32).at[:, :B, :].set(
        x.astype(jnp.float32))
    x2d = xp.reshape(T * BP, OBS)
    h0p = jnp.zeros((BP, HP), jnp.float32).at[:B, :H].set(
        h0.reshape(B, H).astype(jnp.float32))
    c0p = jnp.zeros((BP, HP), jnp.float32).at[:B, :H].set(
        c0.reshape(B, H).astype(jnp.float32))

    vmem = pl.BlockSpec(memory_space=pltpu.MemorySpace.VMEM)
    inputs = (x2d, prep["w1"], prep["w2"], prep["wih"], prep["whh"],
              prep["wout"], prep["biases"], h0p, c0p)

    logits_pad, hT_pad, cT_pad = pl.pallas_call(
        actor_kernel,
        out_shape=(jax.ShapeDtypeStruct((T * BP, NPAD), jnp.float32),
                   jax.ShapeDtypeStruct((BP, HP), jnp.float32),
                   jax.ShapeDtypeStruct((BP, HP), jnp.float32)),
        in_specs=[vmem] * len(inputs),
        out_specs=(vmem, vmem, vmem),
        scratch_shapes=[pltpu.VMEM((T, BP, G4), jnp.float32),   # gates_x
                        pltpu.VMEM((T, BP, HP), jnp.float32)],  # h sequence
    )(*inputs)

    logits = logits_pad.reshape(T, BP, NPAD)[:, :B, :N_ACT]
    hT = hT_pad[:B, :H]
    cT = cT_pad[:B, :H]
    return logits, (hT.reshape(1, B, H), cT.reshape(1, B, H))


def make_params(key):
    ks = jax.random.split(key, 8)
    s = 0.1
    return {
        # Linear weights stored transposed (in, out): y = x @ W + b
        "w1": s * jax.random.normal(ks[0], (OBS, H1), jnp.float32),
        "b1": s * jax.random.normal(ks[1], (1, H1), jnp.float32),
        "w2": s * jax.random.normal(ks[2], (H1, H), jnp.float32),
        "b2": s * jax.random.normal(ks[3], (1, H), jnp.float32),
        # LSTM: weight_ih (4H, H) / weight_hh (4H, H) stored transposed;
        # biases b_ih + b_hh folded together (init'd to 0 in the module).
        "wih": s * jax.random.normal(ks[4], (H, 4 * H), jnp.float32),
        "whh": s * jax.random.normal(ks[5], (H, 4 * H), jnp.float32),
        "bg": jnp.zeros((1, 4 * H), jnp.float32),
        "wout": s * jax.random.normal(ks[6], (H, N_ACT), jnp.float32),
        "bout": s * jax.random.normal(ks[7], (1, N_ACT), jnp.float32),
    }


def reference_forward(x, hidden, p):
    """Pure-JAX reference mirroring the PyTorch forward semantics."""
    h, c = hidden[0][0], hidden[1][0]
    feat = jnp.tanh(jnp.tanh(x @ p["w1"] + p["b1"]) @ p["w2"] + p["b2"])
    outs = []
    for t in range(T):
        gates = feat[t] @ p["wih"] + h @ p["whh"] + p["bg"]
        i_g = jax.nn.sigmoid(gates[:, 0 * H:1 * H])
        f_g = jax.nn.sigmoid(gates[:, 1 * H:2 * H])
        g_g = jnp.tanh(gates[:, 2 * H:3 * H])
        o_g = jax.nn.sigmoid(gates[:, 3 * H:4 * H])
        c = f_g * c + i_g * g_g
        h = o_g * jnp.tanh(c)
        outs.append(h @ p["wout"] + p["bout"])
    return jnp.stack(outs, axis=0), (h[None], c[None])


if __name__ == "__main__":
    key = jax.random.PRNGKey(0)
    k_x, k_h, k_c, k_p = jax.random.split(key, 4)

    x = jax.random.normal(k_x, (T, B, OBS), jnp.float32)
    h0 = jax.random.normal(k_h, (1, B, H), jnp.float32)
    c0 = jax.random.normal(k_c, (1, B, H), jnp.float32)
    params = make_params(k_p)

    # One-time parameter preparation (padding / packing) -- off the hot path.
    prep = jax.block_until_ready(prepare_params(params))

    logits, (hT, cT) = actor_forward(x, (h0, c0), prep)
    jax.block_until_ready((logits, hT, cT))

    ref_logits, (ref_h, ref_c) = reference_forward(x, (h0, c0), params)
    assert jnp.allclose(logits, ref_logits, rtol=1e-4, atol=1e-4)
    assert jnp.allclose(hT, ref_h, rtol=1e-4, atol=1e-4)
    assert jnp.allclose(cT, ref_c, rtol=1e-4, atol=1e-4)

    print("KERNEL_OK")
</pallas_src>

<mosaic_0001>
module attributes {stable_mosaic.version = 11 : i64} {
  func.func @actor_kernel(%arg0: memref<64x16xf32, #tpu.memory_space<vmem>>, %arg1: memref<16x128xf32, #tpu.memory_space<vmem>>, %arg2: memref<128x64xf32, #tpu.memory_space<vmem>>, %arg3: memref<64x512xf32, #tpu.memory_space<vmem>>, %arg4: memref<128x512xf32, #tpu.memory_space<vmem>>, %arg5: memref<128x128xf32, #tpu.memory_space<vmem>>, %arg6: memref<4x512xf32, #tpu.memory_space<vmem>>, %arg7: memref<8x128xf32, #tpu.memory_space<vmem>>, %arg8: memref<8x128xf32, #tpu.memory_space<vmem>>, %arg9: memref<64x128xf32, #tpu.memory_space<vmem>>, %arg10: memref<8x128xf32, #tpu.memory_space<vmem>>, %arg11: memref<8x128xf32, #tpu.memory_space<vmem>>, %arg12: memref<8x8x512xf32, #tpu.memory_space<vmem>>, %arg13: memref<8x8x128xf32, #tpu.memory_space<vmem>>) attributes {dimension_semantics = [], scalar_prefetch = 0 : i64, scratch_operands = 2 : i64, tpu.core_type = #tpu.core_type<tc>} {
    %c0 = arith.constant 0 : index
    %c0_0 = arith.constant 0 : index
    %0 = vector.load %arg6[%c0, %c0_0] : memref<4x512xf32, #tpu.memory_space<vmem>>, vector<1x128xf32>
    %c1 = arith.constant 1 : index
    %c0_1 = arith.constant 0 : index
    %1 = vector.load %arg6[%c1, %c0_1] : memref<4x512xf32, #tpu.memory_space<vmem>>, vector<1x64xf32>
    %c2 = arith.constant 2 : index
    %c0_2 = arith.constant 0 : index
    %2 = vector.load %arg6[%c2, %c0_2] : memref<4x512xf32, #tpu.memory_space<vmem>>, vector<1x512xf32>
    %c3 = arith.constant 3 : index
    %c0_3 = arith.constant 0 : index
    %3 = vector.load %arg6[%c3, %c0_3] : memref<4x512xf32, #tpu.memory_space<vmem>>, vector<1x128xf32>
    %c0_4 = arith.constant 0 : index
    %c0_5 = arith.constant 0 : index
    %4 = vector.load %arg0[%c0_4, %c0_5] : memref<64x16xf32, #tpu.memory_space<vmem>>, vector<64x16xf32>
    %c0_6 = arith.constant 0 : index
    %c0_7 = arith.constant 0 : index
    %5 = vector.load %arg1[%c0_6, %c0_7] : memref<16x128xf32, #tpu.memory_space<vmem>>, vector<16x128xf32>
    %cst = arith.constant dense<0.000000e+00> : vector<64x128xf32>
    %6 = tpu.matmul %4, %5, %cst {dimension_numbers = #tpu.dot_dimension_numbers<[1], [0], [0], [1], [0, 0, 1, 1], [], []>} : vector<64x16xf32>, vector<16x128xf32>, vector<64x128xf32> -> vector<64x128xf32>
    %7 = vector.broadcast %0 : vector<1x128xf32> to vector<64x128xf32>
    %8 = arith.addf %6, %7 : vector<64x128xf32>
    %9 = math.tanh %8 : vector<64x128xf32>
    %c0_8 = arith.constant 0 : index
    %c0_9 = arith.constant 0 : index
    %10 = vector.load %arg2[%c0_8, %c0_9] : memref<128x64xf32, #tpu.memory_space<vmem>>, vector<128x64xf32>
    %cst_10 = arith.constant dense<0.000000e+00> : vector<64x64xf32>
    %11 = tpu.matmul %9, %10, %cst_10 {dimension_numbers = #tpu.dot_dimension_numbers<[1], [0], [0], [1], [0, 0, 1, 1], [], []>} : vector<64x128xf32>, vector<128x64xf32>, vector<64x64xf32> -> vector<64x64xf32>
    %12 = vector.broadcast %1 : vector<1x64xf32> to vector<64x64xf32>
    %13 = arith.addf %11, %12 : vector<64x64xf32>
    %14 = math.tanh %13 : vector<64x64xf32>
    %c0_11 = arith.constant 0 : index
    %c0_12 = arith.constant 0 : index
    %15 = vector.load %arg3[%c0_11, %c0_12] : memref<64x512xf32, #tpu.memory_space<vmem>>, vector<64x512xf32>
    %cst_13 = arith.constant dense<0.000000e+00> : vector<64x512xf32>
    %16 = tpu.matmul %14, %15, %cst_13 {dimension_numbers = #tpu.dot_dimension_numbers<[1], [0], [0], [1], [0, 0, 1, 1], [], []>} : vector<64x64xf32>, vector<64x512xf32>, vector<64x512xf32> -> vector<64x512xf32>
    %17 = vector.broadcast %2 : vector<1x512xf32> to vector<64x512xf32>
    %18 = arith.addf %16, %17 : vector<64x512xf32>
    %19 = vector.shape_cast %18 : vector<64x512xf32> to vector<8x8x512xf32>
    %c0_14 = arith.constant 0 : index
    %c0_15 = arith.constant 0 : index
    %c0_16 = arith.constant 0 : index
    %20 = vector.load %arg12[%c0_14, %c0_15, %c0_16] : memref<8x8x512xf32, #tpu.memory_space<vmem>>, vector<8x8x512xf32>
    tpu.vector_store %arg12[%c0_14, %c0_15, %c0_16], %19 {strides = array<i32>} : memref<8x8x512xf32, #tpu.memory_space<vmem>>, vector<8x8x512xf32>,
    %c0_17 = arith.constant 0 : index
    %c0_18 = arith.constant 0 : index
    %21 = vector.load %arg7[%c0_17, %c0_18] : memref<8x128xf32, #tpu.memory_space<vmem>>, vector<8x128xf32>
    %c0_19 = arith.constant 0 : index
    %c0_20 = arith.constant 0 : index
    %22 = vector.load %arg8[%c0_19, %c0_20] : memref<8x128xf32, #tpu.memory_space<vmem>>, vector<8x128xf32>
    %c0_i32 = arith.constant 0 : i32
    %c0_21 = arith.constant 0 : index
    %c0_22 = arith.constant 0 : index
    %23 = vector.load %arg4[%c0_21, %c0_22] : memref<128x512xf32, #tpu.memory_space<vmem>>, vector<128x512xf32>
    %cst_23 = arith.constant dense<0.000000e+00> : vector<8x512xf32>
    %24 = tpu.matmul %21, %23, %cst_23 {dimension_numbers = #tpu.dot_dimension_numbers<[1], [0], [0], [1], [0, 0, 1, 1], [], []>} : vector<8x128xf32>, vector<128x512xf32>, vector<8x512xf32> -> vector<8x512xf32>
    %25 = arith.index_cast %c0_i32 : i32 to index
    %c0_24 = arith.constant 0 : index
    %c0_25 = arith.constant 0 : index
    %26 = vector.load %arg12[%25, %c0_24, %c0_25] : memref<8x8x512xf32, #tpu.memory_space<vmem>>, vector<1x8x512xf32>
    %27 = vector.shape_cast %26 : vector<1x8x512xf32> to vector<8x512xf32>
    %28 = arith.addf %24, %27 : vector<8x512xf32>
    %29 = vector.extract_strided_slice %28 {offsets = [0, 0], sizes = [8, 128], strides = [1, 1]} : vector<8x512xf32> to vector<8x128xf32>
    %cst_26 = arith.constant 5.000000e-01 : f32
    %30 = vector.broadcast %cst_26 : f32 to vector<8x128xf32>
    %31 = arith.mulf %30, %29 : vector<8x128xf32>
    %32 = math.tanh %31 : vector<8x128xf32>
    %cst_27 = arith.constant 1.000000e+00 : f32
    %33 = vector.broadcast %cst_27 : f32 to vector<8x128xf32>
    %34 = arith.addf %32, %33 : vector<8x128xf32>
    %cst_28 = arith.constant 5.000000e-01 : f32
    %35 = vector.broadcast %cst_28 : f32 to vector<8x128xf32>
    %36 = arith.mulf %35, %34 : vector<8x128xf32>
    %37 = vector.extract_strided_slice %28 {offsets = [0, 128], sizes = [8, 128], strides = [1, 1]} : vector<8x512xf32> to vector<8x128xf32>
    %cst_29 = arith.constant 5.000000e-01 : f32
    %38 = vector.broadcast %cst_29 : f32 to vector<8x128xf32>
    %39 = arith.mulf %38, %37 : vector<8x128xf32>
    %40 = math.tanh %39 : vector<8x128xf32>
    %cst_30 = arith.constant 1.000000e+00 : f32
    %41 = vector.broadcast %cst_30 : f32 to vector<8x128xf32>
    %42 = arith.addf %40, %41 : vector<8x128xf32>
    %cst_31 = arith.constant 5.000000e-01 : f32
    %43 = vector.broadcast %cst_31 : f32 to vector<8x128xf32>
    %44 = arith.mulf %43, %42 : vector<8x128xf32>
    %45 = vector.extract_strided_slice %28 {offsets = [0, 256], sizes = [8, 128], strides = [1, 1]} : vector<8x512xf32> to vector<8x128xf32>
    %46 = math.tanh %45 : vector<8x128xf32>
    %47 = vector.extract_strided_slice %28 {offsets = [0, 384], sizes = [8, 128], strides = [1, 1]} : vector<8x512xf32> to vector<8x128xf32>
    %cst_32 = arith.constant 5.000000e-01 : f32
    %48 = vector.broadcast %cst_32 : f32 to vector<8x128xf32>
    %49 = arith.mulf %48, %47 : vector<8x128xf32>
    %50 = math.tanh %49 : vector<8x128xf32>
    %cst_33 = arith.constant 1.000000e+00 : f32
    %51 = vector.broadcast %cst_33 : f32 to vector<8x128xf32>
    %52 = arith.addf %50, %51 : vector<8x128xf32>
    %cst_34 = arith.constant 5.000000e-01 : f32
    %53 = vector.broadcast %cst_34 : f32 to vector<8x128xf32>
    %54 = arith.mulf %53, %52 : vector<8x128xf32>
    %55 = arith.mulf %44, %22 : vector<8x128xf32>
    %56 = arith.mulf %36, %46 : vector<8x128xf32>
    %57 = arith.addf %55, %56 : vector<8x128xf32>
    %58 = math.tanh %57 : vector<8x128xf32>
    %59 = arith.mulf %54, %58 : vector<8x128xf32>
    %60 = arith.index_cast %c0_i32 : i32 to index
    %c0_35 = arith.constant 0 : index
    %c0_36 = arith.constant 0 : index
    %61 = vector.load %arg13[%60, %c0_35, %c0_36] : memref<8x8x128xf32, #tpu.memory_space<vmem>>, vector<1x8x128xf32>
    %62 = vector.shape_cast %61 : vector<1x8x128xf32> to vector<8x128xf32>
    %63 = vector.shape_cast %59 : vector<8x128xf32> to vector<1x8x128xf32>
    tpu.vector_store %arg13[%60, %c0_35, %c0_36], %63 {strides = array<i32>} : memref<8x8x128xf32, #tpu.memory_space<vmem>>, vector<1x8x128xf32>,
    %c1_i32 = arith.constant 1 : i32
    %c0_37 = arith.constant 0 : index
    %c0_38 = arith.constant 0 : index
    %64 = vector.load %arg4[%c0_37, %c0_38] : memref<128x512xf32, #tpu.memory_space<vmem>>, vector<128x512xf32>
    %cst_39 = arith.constant dense<0.000000e+00> : vector<8x512xf32>
    %65 = tpu.matmul %59, %64, %cst_39 {dimension_numbers = #tpu.dot_dimension_numbers<[1], [0], [0], [1], [0, 0, 1, 1], [], []>} : vector<8x128xf32>, vector<128x512xf32>, vector<8x512xf32> -> vector<8x512xf32>
    %66 = arith.index_cast %c1_i32 : i32 to index
    %c0_40 = arith.constant 0 : index
    %c0_41 = arith.constant 0 : index
    %67 = vector.load %arg12[%66, %c0_40, %c0_41] : memref<8x8x512xf32, #tpu.memory_space<vmem>>, vector<1x8x512xf32>
    %68 = vector.shape_cast %67 : vector<1x8x512xf32> to vector<8x512xf32>
    %69 = arith.addf %65, %68 : vector<8x512xf32>
    %70 = vector.extract_strided_slice %69 {offsets = [0, 0], sizes = [8, 128], strides = [1, 1]} : vector<8x512xf32> to vector<8x128xf32>
    %cst_42 = arith.constant 5.000000e-01 : f32
    %71 = vector.broadcast %cst_42 : f32 to vector<8x128xf32>
    %72 = arith.mulf %71, %70 : vector<8x128xf32>
    %73 = math.tanh %72 : vector<8x128xf32>
    %cst_43 = arith.constant 1.000000e+00 : f32
    %74 = vector.broadcast %cst_43 : f32 to vector<8x128xf32>
    %75 = arith.addf %73, %74 : vector<8x128xf32>
    %cst_44 = arith.constant 5.000000e-01 : f32
    %76 = vector.broadcast %cst_44 : f32 to vector<8x128xf32>
    %77 = arith.mulf %76, %75 : vector<8x128xf32>
    %78 = vector.extract_strided_slice %69 {offsets = [0, 128], sizes = [8, 128], strides = [1, 1]} : vector<8x512xf32> to vector<8x128xf32>
    %cst_45 = arith.constant 5.000000e-01 : f32
    %79 = vector.broadcast %cst_45 : f32 to vector<8x128xf32>
    %80 = arith.mulf %79, %78 : vector<8x128xf32>
    %81 = math.tanh %80 : vector<8x128xf32>
    %cst_46 = arith.constant 1.000000e+00 : f32
    %82 = vector.broadcast %cst_46 : f32 to vector<8x128xf32>
    %83 = arith.addf %81, %82 : vector<8x128xf32>
    %cst_47 = arith.constant 5.000000e-01 : f32
    %84 = vector.broadcast %cst_47 : f32 to vector<8x128xf32>
    %85 = arith.mulf %84, %83 : vector<8x128xf32>
    %86 = vector.extract_strided_slice %69 {offsets = [0, 256], sizes = [8, 128], strides = [1, 1]} : vector<8x512xf32> to vector<8x128xf32>
    %87 = math.tanh %86 : vector<8x128xf32>
    %88 = vector.extract_strided_slice %69 {offsets = [0, 384], sizes = [8, 128], strides = [1, 1]} : vector<8x512xf32> to vector<8x128xf32>
    %cst_48 = arith.constant 5.000000e-01 : f32
    %89 = vector.broadcast %cst_48 : f32 to vector<8x128xf32>
    %90 = arith.mulf %89, %88 : vector<8x128xf32>
    %91 = math.tanh %90 : vector<8x128xf32>
    %cst_49 = arith.constant 1.000000e+00 : f32
    %92 = vector.broadcast %cst_49 : f32 to vector<8x128xf32>
    %93 = arith.addf %91, %92 : vector<8x128xf32>
    %cst_50 = arith.constant 5.000000e-01 : f32
    %94 = vector.broadcast %cst_50 : f32 to vector<8x128xf32>
    %95 = arith.mulf %94, %93 : vector<8x128xf32>
    %96 = arith.mulf %85, %57 : vector<8x128xf32>
    %97 = arith.mulf %77, %87 : vector<8x128xf32>
    %98 = arith.addf %96, %97 : vector<8x128xf32>
    %99 = math.tanh %98 : vector<8x128xf32>
    %100 = arith.mulf %95, %99 : vector<8x128xf32>
    %101 = arith.index_cast %c1_i32 : i32 to index
    %c0_51 = arith.constant 0 : index
    %c0_52 = arith.constant 0 : index
    %102 = vector.load %arg13[%101, %c0_51, %c0_52] : memref<8x8x128xf32, #tpu.memory_space<vmem>>, vector<1x8x128xf32>
    %103 = vector.shape_cast %102 : vector<1x8x128xf32> to vector<8x128xf32>
    %104 = vector.shape_cast %100 : vector<8x128xf32> to vector<1x8x128xf32>
    tpu.vector_store %arg13[%101, %c0_51, %c0_52], %104 {strides = array<i32>} : memref<8x8x128xf32, #tpu.memory_space<vmem>>, vector<1x8x128xf32>,
    %c2_i32 = arith.constant 2 : i32
    %c0_53 = arith.constant 0 : index
    %c0_54 = arith.constant 0 : index
    %105 = vector.load %arg4[%c0_53, %c0_54] : memref<128x512xf32, #tpu.memory_space<vmem>>, vector<128x512xf32>
    %cst_55 = arith.constant dense<0.000000e+00> : vector<8x512xf32>
    %106 = tpu.matmul %100, %105, %cst_55 {dimension_numbers = #tpu.dot_dimension_numbers<[1], [0], [0], [1], [0, 0, 1, 1], [], []>} : vector<8x128xf32>, vector<128x512xf32>, vector<8x512xf32> -> vector<8x512xf32>
    %107 = arith.index_cast %c2_i32 : i32 to index
    %c0_56 = arith.constant 0 : index
    %c0_57 = arith.constant 0 : index
    %108 = vector.load %arg12[%107, %c0_56, %c0_57] : memref<8x8x512xf32, #tpu.memory_space<vmem>>, vector<1x8x512xf32>
    %109 = vector.shape_cast %108 : vector<1x8x512xf32> to vector<8x512xf32>
    %110 = arith.addf %106, %109 : vector<8x512xf32>
    %111 = vector.extract_strided_slice %110 {offsets = [0, 0], sizes = [8, 128], strides = [1, 1]} : vector<8x512xf32> to vector<8x128xf32>
    %cst_58 = arith.constant 5.000000e-01 : f32
    %112 = vector.broadcast %cst_58 : f32 to vector<8x128xf32>
    %113 = arith.mulf %112, %111 : vector<8x128xf32>
    %114 = math.tanh %113 : vector<8x128xf32>
    %cst_59 = arith.constant 1.000000e+00 : f32
    %115 = vector.broadcast %cst_59 : f32 to vector<8x128xf32>
    %116 = arith.addf %114, %115 : vector<8x128xf32>
    %cst_60 = arith.constant 5.000000e-01 : f32
    %117 = vector.broadcast %cst_60 : f32 to vector<8x128xf32>
    %118 = arith.mulf %117, %116 : vector<8x128xf32>
    %119 = vector.extract_strided_slice %110 {offsets = [0, 128], sizes = [8, 128], strides = [1, 1]} : vector<8x512xf32> to vector<8x128xf32>
    %cst_61 = arith.constant 5.000000e-01 : f32
    %120 = vector.broadcast %cst_61 : f32 to vector<8x128xf32>
    %121 = arith.mulf %120, %119 : vector<8x128xf32>
    %122 = math.tanh %121 : vector<8x128xf32>
    %cst_62 = arith.constant 1.000000e+00 : f32
    %123 = vector.broadcast %cst_62 : f32 to vector<8x128xf32>
    %124 = arith.addf %122, %123 : vector<8x128xf32>
    %cst_63 = arith.constant 5.000000e-01 : f32
    %125 = vector.broadcast %cst_63 : f32 to vector<8x128xf32>
    %126 = arith.mulf %125, %124 : vector<8x128xf32>
    %127 = vector.extract_strided_slice %110 {offsets = [0, 256], sizes = [8, 128], strides = [1, 1]} : vector<8x512xf32> to vector<8x128xf32>
    %128 = math.tanh %127 : vector<8x128xf32>
    %129 = vector.extract_strided_slice %110 {offsets = [0, 384], sizes = [8, 128], strides = [1, 1]} : vector<8x512xf32> to vector<8x128xf32>
    %cst_64 = arith.constant 5.000000e-01 : f32
    %130 = vector.broadcast %cst_64 : f32 to vector<8x128xf32>
    %131 = arith.mulf %130, %129 : vector<8x128xf32>
    %132 = math.tanh %131 : vector<8x128xf32>
    %cst_65 = arith.constant 1.000000e+00 : f32
    %133 = vector.broadcast %cst_65 : f32 to vector<8x128xf32>
    %134 = arith.addf %132, %133 : vector<8x128xf32>
    %cst_66 = arith.constant 5.000000e-01 : f32
    %135 = vector.broadcast %cst_66 : f32 to vector<8x128xf32>
    %136 = arith.mulf %135, %134 : vector<8x128xf32>
    %137 = arith.mulf %126, %98 : vector<8x128xf32>
    %138 = arith.mulf %118, %128 : vector<8x128xf32>
    %139 = arith.addf %137, %138 : vector<8x128xf32>
    %140 = math.tanh %139 : vector<8x128xf32>
    %141 = arith.mulf %136, %140 : vector<8x128xf32>
    %142 = arith.index_cast %c2_i32 : i32 to index
    %c0_67 = arith.constant 0 : index
    %c0_68 = arith.constant 0 : index
    %143 = vector.load %arg13[%142, %c0_67, %c0_68] : memref<8x8x128xf32, #tpu.memory_space<vmem>>, vector<1x8x128xf32>
    %144 = vector.shape_cast %143 : vector<1x8x128xf32> to vector<8x128xf32>
    %145 = vector.shape_cast %141 : vector<8x128xf32> to vector<1x8x128xf32>
    tpu.vector_store %arg13[%142, %c0_67, %c0_68], %145 {strides = array<i32>} : memref<8x8x128xf32, #tpu.memory_space<vmem>>, vector<1x8x128xf32>,
    %c3_i32 = arith.constant 3 : i32
    %c0_69 = arith.constant 0 : index
    %c0_70 = arith.constant 0 : index
    %146 = vector.load %arg4[%c0_69, %c0_70] : memref<128x512xf32, #tpu.memory_space<vmem>>, vector<128x512xf32>
    %cst_71 = arith.constant dense<0.000000e+00> : vector<8x512xf32>
    %147 = tpu.matmul %141, %146, %cst_71 {dimension_numbers = #tpu.dot_dimension_numbers<[1], [0], [0], [1], [0, 0, 1, 1], [], []>} : vector<8x128xf32>, vector<128x512xf32>, vector<8x512xf32> -> vector<8x512xf32>
    %148 = arith.index_cast %c3_i32 : i32 to index
    %c0_72 = arith.constant 0 : index
    %c0_73 = arith.constant 0 : index
    %149 = vector.load %arg12[%148, %c0_72, %c0_73] : memref<8x8x512xf32, #tpu.memory_space<vmem>>, vector<1x8x512xf32>
    %150 = vector.shape_cast %149 : vector<1x8x512xf32> to vector<8x512xf32>
    %151 = arith.addf %147, %150 : vector<8x512xf32>
    %152 = vector.extract_strided_slice %151 {offsets = [0, 0], sizes = [8, 128], strides = [1, 1]} : vector<8x512xf32> to vector<8x128xf32>
    %cst_74 = arith.constant 5.000000e-01 : f32
    %153 = vector.broadcast %cst_74 : f32 to vector<8x128xf32>
    %154 = arith.mulf %153, %152 : vector<8x128xf32>
    %155 = math.tanh %154 : vector<8x128xf32>
    %cst_75 = arith.constant 1.000000e+00 : f32
    %156 = vector.broadcast %cst_75 : f32 to vector<8x128xf32>
    %157 = arith.addf %155, %156 : vector<8x128xf32>
    %cst_76 = arith.constant 5.000000e-01 : f32
    %158 = vector.broadcast %cst_76 : f32 to vector<8x128xf32>
    %159 = arith.mulf %158, %157 : vector<8x128xf32>
    %160 = vector.extract_strided_slice %151 {offsets = [0, 128], sizes = [8, 128], strides = [1, 1]} : vector<8x512xf32> to vector<8x128xf32>
    %cst_77 = arith.constant 5.000000e-01 : f32
    %161 = vector.broadcast %cst_77 : f32 to vector<8x128xf32>
    %162 = arith.mulf %161, %160 : vector<8x128xf32>
    %163 = math.tanh %162 : vector<8x128xf32>
    %cst_78 = arith.constant 1.000000e+00 : f32
    %164 = vector.broadcast %cst_78 : f32 to vector<8x128xf32>
    %165 = arith.addf %163, %164 : vector<8x128xf32>
    %cst_79 = arith.constant 5.000000e-01 : f32
    %166 = vector.broadcast %cst_79 : f32 to vector<8x128xf32>
    %167 = arith.mulf %166, %165 : vector<8x128xf32>
    %168 = vector.extract_strided_slice %151 {offsets = [0, 256], sizes = [8, 128], strides = [1, 1]} : vector<8x512xf32> to vector<8x128xf32>
    %169 = math.tanh %168 : vector<8x128xf32>
    %170 = vector.extract_strided_slice %151 {offsets = [0, 384], sizes = [8, 128], strides = [1, 1]} : vector<8x512xf32> to vector<8x128xf32>
    %cst_80 = arith.constant 5.000000e-01 : f32
    %171 = vector.broadcast %cst_80 : f32 to vector<8x128xf32>
    %172 = arith.mulf %171, %170 : vector<8x128xf32>
    %173 = math.tanh %172 : vector<8x128xf32>
    %cst_81 = arith.constant 1.000000e+00 : f32
    %174 = vector.broadcast %cst_81 : f32 to vector<8x128xf32>
    %175 = arith.addf %173, %174 : vector<8x128xf32>
    %cst_82 = arith.constant 5.000000e-01 : f32
    %176 = vector.broadcast %cst_82 : f32 to vector<8x128xf32>
    %177 = arith.mulf %176, %175 : vector<8x128xf32>
    %178 = arith.mulf %167, %139 : vector<8x128xf32>
    %179 = arith.mulf %159, %169 : vector<8x128xf32>
    %180 = arith.addf %178, %179 : vector<8x128xf32>
    %181 = math.tanh %180 : vector<8x128xf32>
    %182 = arith.mulf %177, %181 : vector<8x128xf32>
    %183 = arith.index_cast %c3_i32 : i32 to index
    %c0_83 = arith.constant 0 : index
    %c0_84 = arith.constant 0 : index
    %184 = vector.load %arg13[%183, %c0_83, %c0_84] : memref<8x8x128xf32, #tpu.memory_space<vmem>>, vector<1x8x128xf32>
    %185 = vector.shape_cast %184 : vector<1x8x128xf32> to vector<8x128xf32>
    %186 = vector.shape_cast %182 : vector<8x128xf32> to vector<1x8x128xf32>
    tpu.vector_store %arg13[%183, %c0_83, %c0_84], %186 {strides = array<i32>} : memref<8x8x128xf32, #tpu.memory_space<vmem>>, vector<1x8x128xf32>,
    %c4_i32 = arith.constant 4 : i32
    %c0_85 = arith.constant 0 : index
    %c0_86 = arith.constant 0 : index
    %187 = vector.load %arg4[%c0_85, %c0_86] : memref<128x512xf32, #tpu.memory_space<vmem>>, vector<128x512xf32>
    %cst_87 = arith.constant dense<0.000000e+00> : vector<8x512xf32>
    %188 = tpu.matmul %182, %187, %cst_87 {dimension_numbers = #tpu.dot_dimension_numbers<[1], [0], [0], [1], [0, 0, 1, 1], [], []>} : vector<8x128xf32>, vector<128x512xf32>, vector<8x512xf32> -> vector<8x512xf32>
    %189 = arith.index_cast %c4_i32 : i32 to index
    %c0_88 = arith.constant 0 : index
    %c0_89 = arith.constant 0 : index
    %190 = vector.load %arg12[%189, %c0_88, %c0_89] : memref<8x8x512xf32, #tpu.memory_space<vmem>>, vector<1x8x512xf32>
    %191 = vector.shape_cast %190 : vector<1x8x512xf32> to vector<8x512xf32>
    %192 = arith.addf %188, %191 : vector<8x512xf32>
    %193 = vector.extract_strided_slice %192 {offsets = [0, 0], sizes = [8, 128], strides = [1, 1]} : vector<8x512xf32> to vector<8x128xf32>
    %cst_90 = arith.constant 5.000000e-01 : f32
    %194 = vector.broadcast %cst_90 : f32 to vector<8x128xf32>
    %195 = arith.mulf %194, %193 : vector<8x128xf32>
    %196 = math.tanh %195 : vector<8x128xf32>
    %cst_91 = arith.constant 1.000000e+00 : f32
    %197 = vector.broadcast %cst_91 : f32 to vector<8x128xf32>
    %198 = arith.addf %196, %197 : vector<8x128xf32>
    %cst_92 = arith.constant 5.000000e-01 : f32
    %199 = vector.broadcast %cst_92 : f32 to vector<8x128xf32>
    %200 = arith.mulf %199, %198 : vector<8x128xf32>
    %201 = vector.extract_strided_slice %192 {offsets = [0, 128], sizes = [8, 128], strides = [1, 1]} : vector<8x512xf32> to vector<8x128xf32>
    %cst_93 = arith.constant 5.000000e-01 : f32
    %202 = vector.broadcast %cst_93 : f32 to vector<8x128xf32>
    %203 = arith.mulf %202, %201 : vector<8x128xf32>
    %204 = math.tanh %203 : vector<8x128xf32>
    %cst_94 = arith.constant 1.000000e+00 : f32
    %205 = vector.broadcast %cst_94 : f32 to vector<8x128xf32>
    %206 = arith.addf %204, %205 : vector<8x128xf32>
    %cst_95 = arith.constant 5.000000e-01 : f32
    %207 = vector.broadcast %cst_95 : f32 to vector<8x128xf32>
    %208 = arith.mulf %207, %206 : vector<8x128xf32>
    %209 = vector.extract_strided_slice %192 {offsets = [0, 256], sizes = [8, 128], strides = [1, 1]} : vector<8x512xf32> to vector<8x128xf32>
    %210 = math.tanh %209 : vector<8x128xf32>
    %211 = vector.extract_strided_slice %192 {offsets = [0, 384], sizes = [8, 128], strides = [1, 1]} : vector<8x512xf32> to vector<8x128xf32>
    %cst_96 = arith.constant 5.000000e-01 : f32
    %212 = vector.broadcast %cst_96 : f32 to vector<8x128xf32>
    %213 = arith.mulf %212, %211 : vector<8x128xf32>
    %214 = math.tanh %213 : vector<8x128xf32>
    %cst_97 = arith.constant 1.000000e+00 : f32
    %215 = vector.broadcast %cst_97 : f32 to vector<8x128xf32>
    %216 = arith.addf %214, %215 : vector<8x128xf32>
    %cst_98 = arith.constant 5.000000e-01 : f32
    %217 = vector.broadcast %cst_98 : f32 to vector<8x128xf32>
    %218 = arith.mulf %217, %216 : vector<8x128xf32>
    %219 = arith.mulf %208, %180 : vector<8x128xf32>
    %220 = arith.mulf %200, %210 : vector<8x128xf32>
    %221 = arith.addf %219, %220 : vector<8x128xf32>
    %222 = math.tanh %221 : vector<8x128xf32>
    %223 = arith.mulf %218, %222 : vector<8x128xf32>
    %224 = arith.index_cast %c4_i32 : i32 to index
    %c0_99 = arith.constant 0 : index
    %c0_100 = arith.constant 0 : index
    %225 = vector.load %arg13[%224, %c0_99, %c0_100] : memref<8x8x128xf32, #tpu.memory_space<vmem>>, vector<1x8x128xf32>
    %226 = vector.shape_cast %225 : vector<1x8x128xf32> to vector<8x128xf32>
    %227 = vector.shape_cast %223 : vector<8x128xf32> to vector<1x8x128xf32>
    tpu.vector_store %arg13[%224, %c0_99, %c0_100], %227 {strides = array<i32>} : memref<8x8x128xf32, #tpu.memory_space<vmem>>, vector<1x8x128xf32>,
    %c5_i32 = arith.constant 5 : i32
    %c0_101 = arith.constant 0 : index
    %c0_102 = arith.constant 0 : index
    %228 = vector.load %arg4[%c0_101, %c0_102] : memref<128x512xf32, #tpu.memory_space<vmem>>, vector<128x512xf32>
    %cst_103 = arith.constant dense<0.000000e+00> : vector<8x512xf32>
    %229 = tpu.matmul %223, %228, %cst_103 {dimension_numbers = #tpu.dot_dimension_numbers<[1], [0], [0], [1], [0, 0, 1, 1], [], []>} : vector<8x128xf32>, vector<128x512xf32>, vector<8x512xf32> -> vector<8x512xf32>
    %230 = arith.index_cast %c5_i32 : i32 to index
    %c0_104 = arith.constant 0 : index
    %c0_105 = arith.constant 0 : index
    %231 = vector.load %arg12[%230, %c0_104, %c0_105] : memref<8x8x512xf32, #tpu.memory_space<vmem>>, vector<1x8x512xf32>
    %232 = vector.shape_cast %231 : vector<1x8x512xf32> to vector<8x512xf32>
    %233 = arith.addf %229, %232 : vector<8x512xf32>
    %234 = vector.extract_strided_slice %233 {offsets = [0, 0], sizes = [8, 128], strides = [1, 1]} : vector<8x512xf32> to vector<8x128xf32>
    %cst_106 = arith.constant 5.000000e-01 : f32
    %235 = vector.broadcast %cst_106 : f32 to vector<8x128xf32>
    %236 = arith.mulf %235, %234 : vector<8x128xf32>
    %237 = math.tanh %236 : vector<8x128xf32>
    %cst_107 = arith.constant 1.000000e+00 : f32
    %238 = vector.broadcast %cst_107 : f32 to vector<8x128xf32>
    %239 = arith.addf %237, %238 : vector<8x128xf32>
    %cst_108 = arith.constant 5.000000e-01 : f32
    %240 = vector.broadcast %cst_108 : f32 to vector<8x128xf32>
    %241 = arith.mulf %240, %239 : vector<8x128xf32>
    %242 = vector.extract_strided_slice %233 {offsets = [0, 128], sizes = [8, 128], strides = [1, 1]} : vector<8x512xf32> to vector<8x128xf32>
    %cst_109 = arith.constant 5.000000e-01 : f32
    %243 = vector.broadcast %cst_109 : f32 to vector<8x128xf32>
    %244 = arith.mulf %243, %242 : vector<8x128xf32>
    %245 = math.tanh %244 : vector<8x128xf32>
    %cst_110 = arith.constant 1.000000e+00 : f32
    %246 = vector.broadcast %cst_110 : f32 to vector<8x128xf32>
    %247 = arith.addf %245, %246 : vector<8x128xf32>
    %cst_111 = arith.constant 5.000000e-01 : f32
    %248 = vector.broadcast %cst_111 : f32 to vector<8x128xf32>
    %249 = arith.mulf %248, %247 : vector<8x128xf32>
    %250 = vector.extract_strided_slice %233 {offsets = [0, 256], sizes = [8, 128], strides = [1, 1]} : vector<8x512xf32> to vector<8x128xf32>
    %251 = math.tanh %250 : vector<8x128xf32>
    %252 = vector.extract_strided_slice %233 {offsets = [0, 384], sizes = [8, 128], strides = [1, 1]} : vector<8x512xf32> to vector<8x128xf32>
    %cst_112 = arith.constant 5.000000e-01 : f32
    %253 = vector.broadcast %cst_112 : f32 to vector<8x128xf32>
    %254 = arith.mulf %253, %252 : vector<8x128xf32>
    %255 = math.tanh %254 : vector<8x128xf32>
    %cst_113 = arith.constant 1.000000e+00 : f32
    %256 = vector.broadcast %cst_113 : f32 to vector<8x128xf32>
    %257 = arith.addf %255, %256 : vector<8x128xf32>
    %cst_114 = arith.constant 5.000000e-01 : f32
    %258 = vector.broadcast %cst_114 : f32 to vector<8x128xf32>
    %259 = arith.mulf %258, %257 : vector<8x128xf32>
    %260 = arith.mulf %249, %221 : vector<8x128xf32>
    %261 = arith.mulf %241, %251 : vector<8x128xf32>
    %262 = arith.addf %260, %261 : vector<8x128xf32>
    %263 = math.tanh %262 : vector<8x128xf32>
    %264 = arith.mulf %259, %263 : vector<8x128xf32>
    %265 = arith.index_cast %c5_i32 : i32 to index
    %c0_115 = arith.constant 0 : index
    %c0_116 = arith.constant 0 : index
    %266 = vector.load %arg13[%265, %c0_115, %c0_116] : memref<8x8x128xf32, #tpu.memory_space<vmem>>, vector<1x8x128xf32>
    %267 = vector.shape_cast %266 : vector<1x8x128xf32> to vector<8x128xf32>
    %268 = vector.shape_cast %264 : vector<8x128xf32> to vector<1x8x128xf32>
    tpu.vector_store %arg13[%265, %c0_115, %c0_116], %268 {strides = array<i32>} : memref<8x8x128xf32, #tpu.memory_space<vmem>>, vector<1x8x128xf32>,
    %c6_i32 = arith.constant 6 : i32
    %c0_117 = arith.constant 0 : index
    %c0_118 = arith.constant 0 : index
    %269 = vector.load %arg4[%c0_117, %c0_118] : memref<128x512xf32, #tpu.memory_space<vmem>>, vector<128x512xf32>
    %cst_119 = arith.constant dense<0.000000e+00> : vector<8x512xf32>
    %270 = tpu.matmul %264, %269, %cst_119 {dimension_numbers = #tpu.dot_dimension_numbers<[1], [0], [0], [1], [0, 0, 1, 1], [], []>} : vector<8x128xf32>, vector<128x512xf32>, vector<8x512xf32> -> vector<8x512xf32>
    %271 = arith.index_cast %c6_i32 : i32 to index
    %c0_120 = arith.constant 0 : index
    %c0_121 = arith.constant 0 : index
    %272 = vector.load %arg12[%271, %c0_120, %c0_121] : memref<8x8x512xf32, #tpu.memory_space<vmem>>, vector<1x8x512xf32>
    %273 = vector.shape_cast %272 : vector<1x8x512xf32> to vector<8x512xf32>
    %274 = arith.addf %270, %273 : vector<8x512xf32>
    %275 = vector.extract_strided_slice %274 {offsets = [0, 0], sizes = [8, 128], strides = [1, 1]} : vector<8x512xf32> to vector<8x128xf32>
    %cst_122 = arith.constant 5.000000e-01 : f32
    %276 = vector.broadcast %cst_122 : f32 to vector<8x128xf32>
    %277 = arith.mulf %276, %275 : vector<8x128xf32>
    %278 = math.tanh %277 : vector<8x128xf32>
    %cst_123 = arith.constant 1.000000e+00 : f32
    %279 = vector.broadcast %cst_123 : f32 to vector<8x128xf32>
    %280 = arith.addf %278, %279 : vector<8x128xf32>
    %cst_124 = arith.constant 5.000000e-01 : f32
    %281 = vector.broadcast %cst_124 : f32 to vector<8x128xf32>
    %282 = arith.mulf %281, %280 : vector<8x128xf32>
    %283 = vector.extract_strided_slice %274 {offsets = [0, 128], sizes = [8, 128], strides = [1, 1]} : vector<8x512xf32> to vector<8x128xf32>
    %cst_125 = arith.constant 5.000000e-01 : f32
    %284 = vector.broadcast %cst_125 : f32 to vector<8x128xf32>
    %285 = arith.mulf %284, %283 : vector<8x128xf32>
    %286 = math.tanh %285 : vector<8x128xf32>
    %cst_126 = arith.constant 1.000000e+00 : f32
    %287 = vector.broadcast %cst_126 : f32 to vector<8x128xf32>
    %288 = arith.addf %286, %287 : vector<8x128xf32>
    %cst_127 = arith.constant 5.000000e-01 : f32
    %289 = vector.broadcast %cst_127 : f32 to vector<8x128xf32>
    %290 = arith.mulf %289, %288 : vector<8x128xf32>
    %291 = vector.extract_strided_slice %274 {offsets = [0, 256], sizes = [8, 128], strides = [1, 1]} : vector<8x512xf32> to vector<8x128xf32>
    %292 = math.tanh %291 : vector<8x128xf32>
    %293 = vector.extract_strided_slice %274 {offsets = [0, 384], sizes = [8, 128], strides = [1, 1]} : vector<8x512xf32> to vector<8x128xf32>
    %cst_128 = arith.constant 5.000000e-01 : f32
    %294 = vector.broadcast %cst_128 : f32 to vector<8x128xf32>
    %295 = arith.mulf %294, %293 : vector<8x128xf32>
    %296 = math.tanh %295 : vector<8x128xf32>
    %cst_129 = arith.constant 1.000000e+00 : f32
    %297 = vector.broadcast %cst_129 : f32 to vector<8x128xf32>
    %298 = arith.addf %296, %297 : vector<8x128xf32>
    %cst_130 = arith.constant 5.000000e-01 : f32
    %299 = vector.broadcast %cst_130 : f32 to vector<8x128xf32>
    %300 = arith.mulf %299, %298 : vector<8x128xf32>
    %301 = arith.mulf %290, %262 : vector<8x128xf32>
    %302 = arith.mulf %282, %292 : vector<8x128xf32>
    %303 = arith.addf %301, %302 : vector<8x128xf32>
    %304 = math.tanh %303 : vector<8x128xf32>
    %305 = arith.mulf %300, %304 : vector<8x128xf32>
    %306 = arith.index_cast %c6_i32 : i32 to index
    %c0_131 = arith.constant 0 : index
    %c0_132 = arith.constant 0 : index
    %307 = vector.load %arg13[%306, %c0_131, %c0_132] : memref<8x8x128xf32, #tpu.memory_space<vmem>>, vector<1x8x128xf32>
    %308 = vector.shape_cast %307 : vector<1x8x128xf32> to vector<8x128xf32>
    %309 = vector.shape_cast %305 : vector<8x128xf32> to vector<1x8x128xf32>
    tpu.vector_store %arg13[%306, %c0_131, %c0_132], %309 {strides = array<i32>} : memref<8x8x128xf32, #tpu.memory_space<vmem>>, vector<1x8x128xf32>,
    %c7_i32 = arith.constant 7 : i32
    %c0_133 = arith.constant 0 : index
    %c0_134 = arith.constant 0 : index
    %310 = vector.load %arg4[%c0_133, %c0_134] : memref<128x512xf32, #tpu.memory_space<vmem>>, vector<128x512xf32>
    %cst_135 = arith.constant dense<0.000000e+00> : vector<8x512xf32>
    %311 = tpu.matmul %305, %310, %cst_135 {dimension_numbers = #tpu.dot_dimension_numbers<[1], [0], [0], [1], [0, 0, 1, 1], [], []>} : vector<8x128xf32>, vector<128x512xf32>, vector<8x512xf32> -> vector<8x512xf32>
    %312 = arith.index_cast %c7_i32 : i32 to index
    %c0_136 = arith.constant 0 : index
    %c0_137 = arith.constant 0 : index
    %313 = vector.load %arg12[%312, %c0_136, %c0_137] : memref<8x8x512xf32, #tpu.memory_space<vmem>>, vector<1x8x512xf32>
    %314 = vector.shape_cast %313 : vector<1x8x512xf32> to vector<8x512xf32>
    %315 = arith.addf %311, %314 : vector<8x512xf32>
    %316 = vector.extract_strided_slice %315 {offsets = [0, 0], sizes = [8, 128], strides = [1, 1]} : vector<8x512xf32> to vector<8x128xf32>
    %cst_138 = arith.constant 5.000000e-01 : f32
    %317 = vector.broadcast %cst_138 : f32 to vector<8x128xf32>
    %318 = arith.mulf %317, %316 : vector<8x128xf32>
    %319 = math.tanh %318 : vector<8x128xf32>
    %cst_139 = arith.constant 1.000000e+00 : f32
    %320 = vector.broadcast %cst_139 : f32 to vector<8x128xf32>
    %321 = arith.addf %319, %320 : vector<8x128xf32>
    %cst_140 = arith.constant 5.000000e-01 : f32
    %322 = vector.broadcast %cst_140 : f32 to vector<8x128xf32>
    %323 = arith.mulf %322, %321 : vector<8x128xf32>
    %324 = vector.extract_strided_slice %315 {offsets = [0, 128], sizes = [8, 128], strides = [1, 1]} : vector<8x512xf32> to vector<8x128xf32>
    %cst_141 = arith.constant 5.000000e-01 : f32
    %325 = vector.broadcast %cst_141 : f32 to vector<8x128xf32>
    %326 = arith.mulf %325, %324 : vector<8x128xf32>
    %327 = math.tanh %326 : vector<8x128xf32>
    %cst_142 = arith.constant 1.000000e+00 : f32
    %328 = vector.broadcast %cst_142 : f32 to vector<8x128xf32>
    %329 = arith.addf %327, %328 : vector<8x128xf32>
    %cst_143 = arith.constant 5.000000e-01 : f32
    %330 = vector.broadcast %cst_143 : f32 to vector<8x128xf32>
    %331 = arith.mulf %330, %329 : vector<8x128xf32>
    %332 = vector.extract_strided_slice %315 {offsets = [0, 256], sizes = [8, 128], strides = [1, 1]} : vector<8x512xf32> to vector<8x128xf32>
    %333 = math.tanh %332 : vector<8x128xf32>
    %334 = vector.extract_strided_slice %315 {offsets = [0, 384], sizes = [8, 128], strides = [1, 1]} : vector<8x512xf32> to vector<8x128xf32>
    %cst_144 = arith.constant 5.000000e-01 : f32
    %335 = vector.broadcast %cst_144 : f32 to vector<8x128xf32>
    %336 = arith.mulf %335, %334 : vector<8x128xf32>
    %337 = math.tanh %336 : vector<8x128xf32>
    %cst_145 = arith.constant 1.000000e+00 : f32
    %338 = vector.broadcast %cst_145 : f32 to vector<8x128xf32>
    %339 = arith.addf %337, %338 : vector<8x128xf32>
    %cst_146 = arith.constant 5.000000e-01 : f32
    %340 = vector.broadcast %cst_146 : f32 to vector<8x128xf32>
    %341 = arith.mulf %340, %339 : vector<8x128xf32>
    %342 = arith.mulf %331, %303 : vector<8x128xf32>
    %343 = arith.mulf %323, %333 : vector<8x128xf32>
    %344 = arith.addf %342, %343 : vector<8x128xf32>
    %345 = math.tanh %344 : vector<8x128xf32>
    %346 = arith.mulf %341, %345 : vector<8x128xf32>
    %347 = arith.index_cast %c7_i32 : i32 to index
    %c0_147 = arith.constant 0 : index
    %c0_148 = arith.constant 0 : index
    %348 = vector.load %arg13[%347, %c0_147, %c0_148] : memref<8x8x128xf32, #tpu.memory_space<vmem>>, vector<1x8x128xf32>
    %349 = vector.shape_cast %348 : vector<1x8x128xf32> to vector<8x128xf32>
    %350 = vector.shape_cast %346 : vector<8x128xf32> to vector<1x8x128xf32>
    tpu.vector_store %arg13[%347, %c0_147, %c0_148], %350 {strides = array<i32>} : memref<8x8x128xf32, #tpu.memory_space<vmem>>, vector<1x8x128xf32>,
    %c8_i32 = arith.constant 8 : i32
    %c0_149 = arith.constant 0 : index
    %c0_150 = arith.constant 0 : index
    %351 = vector.load %arg10[%c0_149, %c0_150] : memref<8x128xf32, #tpu.memory_space<vmem>>, vector<8x128xf32>
    tpu.vector_store %arg10[%c0_149, %c0_150], %346 {strides = array<i32>} : memref<8x128xf32, #tpu.memory_space<vmem>>, vector<8x128xf32>,
    %c0_151 = arith.constant 0 : index
    %c0_152 = arith.constant 0 : index
    %352 = vector.load %arg11[%c0_151, %c0_152] : memref<8x128xf32, #tpu.memory_space<vmem>>, vector<8x128xf32>
    tpu.vector_store %arg11[%c0_151, %c0_152], %344 {strides = array<i32>} : memref<8x128xf32, #tpu.memory_space<vmem>>, vector<8x128xf32>,
    %c0_153 = arith.constant 0 : index
    %c0_154 = arith.constant 0 : index
    %c0_155 = arith.constant 0 : index
    %353 = vector.load %arg13[%c0_153, %c0_154, %c0_155] : memref<8x8x128xf32, #tpu.memory_space<vmem>>, vector<8x8x128xf32>
    %354 = vector.shape_cast %353 : vector<8x8x128xf32> to vector<64x128xf32>
    %c0_156 = arith.constant 0 : index
    %c0_157 = arith.constant 0 : index
    %355 = vector.load %arg5[%c0_156, %c0_157] : memref<128x128xf32, #tpu.memory_space<vmem>>, vector<128x128xf32>
    %cst_158 = arith.constant dense<0.000000e+00> : vector<64x128xf32>
    %356 = tpu.matmul %354, %355, %cst_158 {dimension_numbers = #tpu.dot_dimension_numbers<[1], [0], [0], [1], [0, 0, 1, 1], [], []>} : vector<64x128xf32>, vector<128x128xf32>, vector<64x128xf32> -> vector<64x128xf32>
    %357 = vector.broadcast %3 : vector<1x128xf32> to vector<64x128xf32>
    %358 = arith.addf %356, %357 : vector<64x128xf32>
    %c0_159 = arith.constant 0 : index
    %c0_160 = arith.constant 0 : index
    %359 = vector.load %arg9[%c0_159, %c0_160] : memref<64x128xf32, #tpu.memory_space<vmem>>, vector<64x128xf32>
    tpu.vector_store %arg9[%c0_159, %c0_160], %358 {strides = array<i32>} : memref<64x128xf32, #tpu.memory_space<vmem>>, vector<64x128xf32>,
    return
  }
}

</mosaic_0001>

<llo_original>
// kernel: actor_forward.1
$region0: #{actor_forward.1}
  #allocation0 [shape = 'u32[]', space=smem, size = 0x4, offset = 0x4, fixed_abs, tag = 'smem constant byte address 0x4 - core index']
  #allocation1 [shape = 'u32[144,128]{1,0:T(1,128)}', space=vmem, size = 0x12000, scoped, tag = 'internal scratch']
  #allocation2 [shape = 'f32[8,8,512]{2,1,0:T(8,128)}', space=vmem, size = 0x20000, scoped, tag = 'scratch operand']
  #allocation3 [shape = 'f32[8,8,128]{2,1,0:T(8,128)}', space=vmem, size = 0x8000, scoped, tag = 'scratch operand']
  %s0 = inlined_call_operand.vmem [shape: f32[64,16], index: 0, kind: input, shape index: {}]
  %s1 = inlined_call_operand.vmem [shape: f32[16,128], index: 1, kind: input, shape index: {}]
  %s2 = inlined_call_operand.vmem [shape: f32[128,64], index: 2, kind: input, shape index: {}]
  %s3 = inlined_call_operand.vmem [shape: f32[64,512], index: 3, kind: input, shape index: {}]
  %s4 = inlined_call_operand.hbm [shape: f32[128,512], index: 4, kind: input, shape index: {}]
  %s5 = inlined_call_operand.hbm [shape: f32[128,128], index: 5, kind: input, shape index: {}]
  %s6 = inlined_call_operand.vmem [shape: f32[4,512], index: 6, kind: input, shape index: {}]
  %s7 = inlined_call_operand.vmem [shape: f32[8,128], index: 7, kind: input, shape index: {}]
  %s8 = inlined_call_operand.vmem [shape: f32[8,128], index: 8, kind: input, shape index: {}]
  %s9 = inlined_call_operand.vmem [shape: f32[64,128], index: 9, kind: output, shape index: {0}]
  %s10 = inlined_call_operand.vmem [shape: f32[8,128], index: 10, kind: output, shape index: {1}]
  %s11 = inlined_call_operand.vmem [shape: f32[8,128], index: 11, kind: output, shape index: {2}]
  %12 = xla_tuple %s9, %s10, %s11
  %s13 = sld [smem:[#allocation0]]
  $region70: #{actor_forward.1} parent=0
    _
  %s15 = ssub.s32 1, %s13
  %s16 = scalar_select 0, %s15, %s13
  $region1: #{actor_forward.1} parent=0
    #allocation4 [shape = 'u8[262144]{0}', space=vmem, size = 0x40000, scoped, tag = 'input window, operand 4, single buffered']
    #allocation5 [shape = 's32[1]{0}', space=sflag, size = 0x4, scoped, tag = 'scoped memory for actor_forward.1']
    #allocation6 [shape = 'u8[65536]{0}', space=vmem, size = 0x10000, scoped, tag = 'input window, operand 5, single buffered']
    #allocation7 [shape = 's32[1]{0}', space=sflag, size = 0x4, scoped, tag = 'scoped memory for actor_forward.1']
    %17 = vsyncpa [#allocation5], 0
    %18 = vsyncpa [#allocation7], 0
    // Predicated region
    $region2: #{actor_forward.1} parent=1 // pred_check
      _
    $region3: #{actor_forward.1} parent=1 // pred_check_branch
      %20 = sbr.rel (0) target = $region5
    $region4: #{actor_forward.1} parent=1 // pred_region
      _
    $region5: #{actor_forward.1} parent=1 // pred_fallthru
      _
    // Predicated region
    $region6: #{actor_forward.1} parent=1 // pred_check
      _
    $region7: #{actor_forward.1} parent=1 // pred_check_branch
      %22 = sbr.rel (0) target = $region9
    $region8: #{actor_forward.1} parent=1 // pred_region
      _
    $region9: #{actor_forward.1} parent=1 // pred_fallthru
      _
    // Predicated region
    $region10: #{actor_forward.1} parent=1 // pred_check
      _
    $region11: #{actor_forward.1} parent=1 // pred_check_branch
      %24 = sbr.rel (0) target = $region13
    $region12: #{actor_forward.1} parent=1 // pred_region
      _
    $region13: #{actor_forward.1} parent=1 // pred_fallthru
      _
    // Predicated region
    $region14: #{actor_forward.1} parent=1 // pred_check
      _
    $region15: #{actor_forward.1} parent=1 // pred_check_branch
      %26 = sbr.rel (0) target = $region17
    $region16: #{actor_forward.1} parent=1 // pred_region
      _
    $region17: #{actor_forward.1} parent=1 // pred_fallthru
      _
    // Predicated region
    $region18: #{actor_forward.1} parent=1 // pred_check
      _
    $region19: #{actor_forward.1} parent=1 // pred_check_branch
      %28 = sbr.rel (0) target = $region21
    $region20: #{actor_forward.1} parent=1 // pred_region
      %s30 = ssub.s32 8192, 8192
      %31 = vsyncadd [#allocation5], %s30
      %s32 = sshll.u32 [#allocation4], 4
      %s33 = int_to_ptr.vmem [resolvable:$true] %s32
      %38 = dma.hbm_to_vmem [thread:$0]  %s4, 8192, %s33, [#allocation5], 512, 512, 32
    $region21: #{actor_forward.1} parent=1 // pred_fallthru
      _
    // Predicated region
    $region22: #{actor_forward.1} parent=1 // pred_check
      _
    $region23: #{actor_forward.1} parent=1 // pred_check_branch
      %40 = sbr.rel (0) target = $region25
    $region24: #{actor_forward.1} parent=1 // pred_region
      %s42 = ssub.s32 2048, 2048
      %43 = vsyncadd [#allocation7], %s42
      %s44 = sshll.u32 [#allocation6], 4
      %s45 = int_to_ptr.vmem [resolvable:$true] %s44
      %50 = dma.hbm_to_vmem [thread:$0]  %s5, 2048, %s45, [#allocation7], 128, 128, 8
    $region25: #{actor_forward.1} parent=1 // pred_fallthru
      _
    // Predicated region
    $region26: #{actor_forward.1} parent=1 // pred_check
      _
    $region27: #{actor_forward.1} parent=1 // pred_check_branch
      %52 = sbr.rel (0) target = $region29
    $region28: #{actor_forward.1} parent=1 // pred_region
      _
    $region29: #{actor_forward.1} parent=1 // pred_fallthru
      _
    // Predicated region
    $region30: #{actor_forward.1} parent=1 // pred_check
      _
    $region31: #{actor_forward.1} parent=1 // pred_check_branch
      %54 = sbr.rel (0) target = $region33
    $region32: #{actor_forward.1} parent=1 // pred_region
      _
    $region33: #{actor_forward.1} parent=1 // pred_fallthru
      _
    // Predicated region
    $region34: #{actor_forward.1} parent=1 // pred_check
      _
    $region35: #{actor_forward.1} parent=1 // pred_check_branch
      %56 = sbr.rel (0) target = $region37
    $region36: #{actor_forward.1} parent=1 // pred_region
      _
    $region37: #{actor_forward.1} parent=1 // pred_fallthru
      _
    // Predicated region
    $region38: #{actor_forward.1} parent=1 // pred_check
      _
    $region39: #{actor_forward.1} parent=1 // pred_check_branch
      %58 = sbr.rel (0) target = $region41
    $region40: #{actor_forward.1} parent=1 // pred_region
      %59 = dma.done [#allocation5], 8192
    $region41: #{actor_forward.1} parent=1 // pred_fallthru
      _
    // Predicated region
    $region42: #{actor_forward.1} parent=1 // pred_check
      _
    $region43: #{actor_forward.1} parent=1 // pred_check_branch
      %61 = sbr.rel (0) target = $region45
    $region44: #{actor_forward.1} parent=1 // pred_region
      %62 = dma.done [#allocation7], 2048
    $region45: #{actor_forward.1} parent=1 // pred_fallthru
      _
    %v63 = vld [vmem:[%s6] sm:$0x1]
    %v64 = vld [vmem:[%s6 + $0x1] sm:$0x1]
    %s65 = scalar_lea.vmem %s6, 2
    %v66 = vld [vmem:[%s65] ss:$4 sm:$0xf]
    %v67 = vld [vmem:[%s6 + $0x3] sm:$0x1]
    %v68 = vld [vmem:[%s0] sm:$0xff]
    %v69 = vld [vmem:[%s0 + $0x8] sm:$0xff]
    %v70 = vld [vmem:[%s0 + $0x10] sm:$0xff]
    %v71 = vld [vmem:[%s0 + $0x18] sm:$0xff]
    %v72 = vld [vmem:[%s0 + $0x20] sm:$0xff]
    %v73 = vld [vmem:[%s0 + $0x28] sm:$0xff]
    %v74 = vld [vmem:[%s0 + $0x30] sm:$0xff]
    %v75 = vld [vmem:[%s0 + $0x38] sm:$0xff]
    %v76 = vld [vmem:[%s1] sm:$0xff]
    %v77 = vld [vmem:[%s1 + $0x8] sm:$0xff]
    %v78 = vlaneseq
    %v79 = vshrl.u32 %v78, 7
    %v80 = vsub.s32 0, %v79
    %v81 = vrot.slane %v63, %v80
    %vm82 = vcmask 130048
    %v84 = vsel %vm82, %v68, 0
    %v87 = vsel %vm82, %v69, 0
    %v90 = vsel %vm82, %v70, 0
    %v93 = vsel %vm82, %v71, 0
    %v96 = vsel %vm82, %v72, 0
    %v99 = vsel %vm82, %v73, 0
    %v102 = vsel %vm82, %v74, 0
    %v105 = vsel %vm82, %v75, 0
    %107 = vmatprep.subr.mxu0 0.0
    %108 = vmatpush1.msra.mxu0 0.0
    %109 = vmatprep.subr.mxu0 0.0
    %110 = vmatpush1.msra.mxu0 0.0
    %111 = vmatprep.subr.mxu0 0.0
    %112 = vmatpush1.msra.mxu0 0.0
    %113 = vmatprep.subr.mxu0 0.0
    %114 = vmatpush1.msra.mxu0 0.0
    %115 = vmatprep.subr.mxu0 0.0
    %116 = vmatpush1.msra.mxu0 0.0
    %117 = vmatprep.subr.mxu0 0.0
    %118 = vmatpush1.msra.mxu0 0.0
    %119 = vmatprep.subr.mxu0 0.0
    %120 = vmatpush1.msra.mxu0 0.0
    %121 = vmatprep.subr.mxu0 0.0
    %122 = vmatpush1.msra.mxu0 0.0
    %123 = vmatprep.subr.mxu0 0.0
    %124 = vmatpush1.msra.mxu0 0.0
    %125 = vmatprep.subr.mxu0 0.0
    %126 = vmatpush1.msra.mxu0 0.0
    %127 = vmatprep.subr.mxu0 0.0
    %128 = vmatpush1.msra.mxu0 0.0
    %129 = vmatprep.subr.mxu0 0.0
    %130 = vmatpush1.msra.mxu0 0.0
    %131 = vmatprep.subr.mxu0 0.0
    %132 = vmatpush1.msra.mxu0 0.0
    %133 = vmatprep.subr.mxu0 0.0
    %134 = vmatpush1.msra.mxu0 0.0
    %135 = vmatprep.subr.mxu0 0.0
    %136 = vmatpush1.msra.mxu0 %v77
    %137 = vmatprep.subr.mxu0 0.0
    %138 = vmatpush1.msra.mxu0 %v76
    %139 = vmatprep.subr.mxu0 0.0
    %140 = vmatpush2.msra.mxu0 0.0
    %141 = vmatprep.subr.mxu0 0.0
    %142 = vmatpush2.msra.mxu0 0.0
    %143 = vmatprep.subr.mxu0 0.0
    %144 = vmatpush2.msra.mxu0 0.0
    %145 = vmatprep.subr.mxu0 0.0
    %146 = vmatpush2.msra.mxu0 0.0
    %147 = vmatprep.subr.mxu0 0.0
    %148 = vmatpush2.msra.mxu0 0.0
    %149 = vmatprep.subr.mxu0 0.0
    %150 = vmatpush2.msra.mxu0 0.0
    %151 = vmatprep.subr.mxu0 0.0
    %152 = vmatpush2.msra.mxu0 0.0
    %153 = vmatprep.subr.mxu0 0.0
    %154 = vmatpush2.msra.mxu0 0.0
    %155 = vmatprep.subr.mxu0 0.0
    %156 = vmatpush2.msra.mxu0 0.0
    %157 = vmatprep.subr.mxu0 0.0
    %158 = vmatpush2.msra.mxu0 0.0
    %159 = vmatprep.subr.mxu0 0.0
    %160 = vmatpush2.msra.mxu0 0.0
    %161 = vmatprep.subr.mxu0 0.0
    %162 = vmatpush2.msra.mxu0 0.0
    %163 = vmatprep.subr.mxu0 0.0
    %164 = vmatpush2.msra.mxu0 0.0
    %165 = vmatprep.subr.mxu0 0.0
    %166 = vmatpush2.msra.mxu0 0.0
    %167 = vmatprep.subr.mxu0 0.0
    %168 = vmatpush2.msra.mxu0 0.0
    %169 = vmatprep.subr.mxu0 0.0
    %170 = vmatpush2.msra.mxu0 0.0
    %171 = vmatprep.mubr.f32.mxu0 0.0
    %172 = vmatmul.mubr.f32.gmra.mxu0 %v84
    %v173 = vpop.f32.mrf.mxu0
    %v174 = vadd.f32 %v81, %v173
    %v175 = vpop.f32.mrf.mxu0
    %176 = vmatprep.mubr.f32.mxu0 0.0
    %177 = vmatmul.mubr.f32.gmra.mxu0 %v87
    %v178 = vpop.f32.mrf.mxu0
    %v179 = vadd.f32 %v81, %v178
    %v180 = vpop.f32.mrf.mxu0
    %181 = vmatprep.mubr.f32.mxu0 0.0
    %182 = vmatmul.mubr.f32.gmra.mxu0 %v90
    %v183 = vpop.f32.mrf.mxu0
    %v184 = vadd.f32 %v81, %v183
    %v185 = vpop.f32.mrf.mxu0
    %186 = vmatprep.mubr.f32.mxu0 0.0
    %187 = vmatmul.mubr.f32.gmra.mxu0 %v93
    %v188 = vpop.f32.mrf.mxu0
    %v189 = vadd.f32 %v81, %v188
    %v190 = vpop.f32.mrf.mxu0
    %191 = vmatprep.mubr.f32.mxu0 0.0
    %192 = vmatmul.mubr.f32.gmra.mxu0 %v96
    %v193 = vpop.f32.mrf.mxu0
    %v194 = vadd.f32 %v81, %v193
    %v195 = vpop.f32.mrf.mxu0
    %196 = vmatprep.mubr.f32.mxu0 0.0
    %197 = vmatmul.mubr.f32.gmra.mxu0 %v99
    %v198 = vpop.f32.mrf.mxu0
    %v199 = vadd.f32 %v81, %v198
    %v200 = vpop.f32.mrf.mxu0
    %201 = vmatprep.mubr.f32.mxu0 0.0
    %202 = vmatmul.mubr.f32.gmra.mxu0 %v102
    %v203 = vpop.f32.mrf.mxu0
    %v204 = vadd.f32 %v81, %v203
    %v205 = vpop.f32.mrf.mxu0
    %206 = vmatprep.mubr.f32.mxu0 0.0
    %207 = vmatmul.mubr.f32.gmra.mxu0 %v105
    %v208 = vpop.f32.mrf.mxu0
    %v209 = vadd.f32 %v81, %v208
    %v210 = vpop.f32.mrf.mxu0
    %211 = vdwg.mxu0
    %v212 = vtanh.pop %v174
    %v213 = vtanh.pop %v179
    %v214 = vtanh.pop %v184
    %v215 = vtanh.pop %v189
    %v216 = vtanh.pop %v194
    %v217 = vtanh.pop %v199
    %v218 = vtanh.pop %v204
    %v219 = vtanh.pop %v209
    %v220 = vld [vmem:[%s2] sm:$0xff]
    %v221 = vld [vmem:[%s2 + $0x8] sm:$0xff]
    %v222 = vld [vmem:[%s2 + $0x10] sm:$0xff]
    %v223 = vld [vmem:[%s2 + $0x18] sm:$0xff]
    %v224 = vld [vmem:[%s2 + $0x20] sm:$0xff]
    %v225 = vld [vmem:[%s2 + $0x28] sm:$0xff]
    %v226 = vld [vmem:[%s2 + $0x30] sm:$0xff]
    %v227 = vld [vmem:[%s2 + $0x38] sm:$0xff]
    %v228 = vld [vmem:[%s2 + $0x40] sm:$0xff]
    %v229 = vld [vmem:[%s2 + $0x48] sm:$0xff]
    %v230 = vld [vmem:[%s2 + $0x50] sm:$0xff]
    %v231 = vld [vmem:[%s2 + $0x58] sm:$0xff]
    %v232 = vld [vmem:[%s2 + $0x60] sm:$0xff]
    %v233 = vld [vmem:[%s2 + $0x68] sm:$0xff]
    %v234 = vld [vmem:[%s2 + $0x70] sm:$0xff]
    %v235 = vld [vmem:[%s2 + $0x78] sm:$0xff]
    %v236 = vlaneseq
    %v237 = vshrl.u32 %v236, 7
    %v238 = vsub.s32 0, %v237
    %v239 = vrot.slane %v64, %v238
    %240 = vmatprep.subr.mxu0 0.0
    %241 = vmatpush1.msra.mxu0 %v235
    %242 = vmatprep.subr.mxu0 0.0
    %243 = vmatpush1.msra.mxu0 %v234
    %244 = vmatprep.subr.mxu0 0.0
    %245 = vmatpush1.msra.mxu0 %v233
    %246 = vmatprep.subr.mxu0 0.0
    %247 = vmatpush1.msra.mxu0 %v232
    %248 = vmatprep.subr.mxu0 0.0
    %249 = vmatpush1.msra.mxu0 %v231
    %250 = vmatprep.subr.mxu0 0.0
    %251 = vmatpush1.msra.mxu0 %v230
    %252 = vmatprep.subr.mxu0 0.0
    %253 = vmatpush1.msra.mxu0 %v229
    %254 = vmatprep.subr.mxu0 0.0
    %255 = vmatpush1.msra.mxu0 %v228
    %256 = vmatprep.subr.mxu0 0.0
    %257 = vmatpush1.msra.mxu0 %v227
    %258 = vmatprep.subr.mxu0 0.0
    %259 = vmatpush1.msra.mxu0 %v226
    %260 = vmatprep.subr.mxu0 0.0
    %261 = vmatpush1.msra.mxu0 %v225
    %262 = vmatprep.subr.mxu0 0.0
    %263 = vmatpush1.msra.mxu0 %v224
    %264 = vmatprep.subr.mxu0 0.0
    %265 = vmatpush1.msra.mxu0 %v223
    %266 = vmatprep.subr.mxu0 0.0
    %267 = vmatpush1.msra.mxu0 %v222
    %268 = vmatprep.subr.mxu0 0.0
    %269 = vmatpush1.msra.mxu0 %v221
    %270 = vmatprep.subr.mxu0 0.0
    %271 = vmatpush1.msra.mxu0 %v220
    %272 = vmatprep.subr.mxu0 0.0
    %273 = vmatpush2.msra.mxu0 0.0
    %274 = vmatprep.subr.mxu0 0.0
    %275 = vmatpush2.msra.mxu0 0.0
    %276 = vmatprep.subr.mxu0 0.0
    %277 = vmatpush2.msra.mxu0 0.0
    %278 = vmatprep.subr.mxu0 0.0
    %279 = vmatpush2.msra.mxu0 0.0
    %280 = vmatprep.subr.mxu0 0.0
    %281 = vmatpush2.msra.mxu0 0.0
    %282 = vmatprep.subr.mxu0 0.0
    %283 = vmatpush2.msra.mxu0 0.0
    %284 = vmatprep.subr.mxu0 0.0
    %285 = vmatpush2.msra.mxu0 0.0
    %286 = vmatprep.subr.mxu0 0.0
    %287 = vmatpush2.msra.mxu0 0.0
    %288 = vmatprep.subr.mxu0 0.0
    %289 = vmatpush2.msra.mxu0 0.0
    %290 = vmatprep.subr.mxu0 0.0
    %291 = vmatpush2.msra.mxu0 0.0
    %292 = vmatprep.subr.mxu0 0.0
    %293 = vmatpush2.msra.mxu0 0.0
    %294 = vmatprep.subr.mxu0 0.0
    %295 = vmatpush2.msra.mxu0 0.0
    %296 = vmatprep.subr.mxu0 0.0
    %297 = vmatpush2.msra.mxu0 0.0
    %298 = vmatprep.subr.mxu0 0.0
    %299 = vmatpush2.msra.mxu0 0.0
    %300 = vmatprep.subr.mxu0 0.0
    %301 = vmatpush2.msra.mxu0 0.0
    %302 = vmatprep.subr.mxu0 0.0
    %303 = vmatpush2.msra.mxu0 0.0
    %304 = vmatprep.mubr.f32.mxu0 0.0
    %305 = vmatmul.mubr.f32.gmra.mxu0 %v212
    %v306 = vpop.f32.mrf.mxu0
    %v307 = vadd.f32 %v239, %v306
    %v308 = vpop.f32.mrf.mxu0
    %309 = vmatprep.mubr.f32.mxu0 0.0
    %310 = vmatmul.mubr.f32.gmra.mxu0 %v213
    %v311 = vpop.f32.mrf.mxu0
    %v312 = vadd.f32 %v239, %v311
    %v313 = vpop.f32.mrf.mxu0
    %314 = vmatprep.mubr.f32.mxu0 0.0
    %315 = vmatmul.mubr.f32.gmra.mxu0 %v214
    %v316 = vpop.f32.mrf.mxu0
    %v317 = vadd.f32 %v239, %v316
    %v318 = vpop.f32.mrf.mxu0
    %319 = vmatprep.mubr.f32.mxu0 0.0
    %320 = vmatmul.mubr.f32.gmra.mxu0 %v215
    %v321 = vpop.f32.mrf.mxu0
    %v322 = vadd.f32 %v239, %v321
    %v323 = vpop.f32.mrf.mxu0
    %324 = vmatprep.mubr.f32.mxu0 0.0
    %325 = vmatmul.mubr.f32.gmra.mxu0 %v216
    %v326 = vpop.f32.mrf.mxu0
    %v327 = vadd.f32 %v239, %v326
    %v328 = vpop.f32.mrf.mxu0
    %329 = vmatprep.mubr.f32.mxu0 0.0
    %330 = vmatmul.mubr.f32.gmra.mxu0 %v217
    %v331 = vpop.f32.mrf.mxu0
    %v332 = vadd.f32 %v239, %v331
    %v333 = vpop.f32.mrf.mxu0
    %334 = vmatprep.mubr.f32.mxu0 0.0
    %335 = vmatmul.mubr.f32.gmra.mxu0 %v218
    %v336 = vpop.f32.mrf.mxu0
    %v337 = vadd.f32 %v239, %v336
    %v338 = vpop.f32.mrf.mxu0
    %339 = vmatprep.mubr.f32.mxu0 0.0
    %340 = vmatmul.mubr.f32.gmra.mxu0 %v219
    %v341 = vpop.f32.mrf.mxu0
    %v342 = vadd.f32 %v239, %v341
    %v343 = vpop.f32.mrf.mxu0
    %344 = vdwg.mxu0
    %v345 = vtanh.pop %v307
    %v346 = vtanh.pop %v312
    %v347 = vtanh.pop %v317
    %v348 = vtanh.pop %v322
    %v349 = vtanh.pop %v327
    %v350 = vtanh.pop %v332
    %v351 = vtanh.pop %v337
    %v352 = vtanh.pop %v342
    %v353 = vld [vmem:[%s3] sm:$0xff]
    %v354 = vld [vmem:[%s3 + $0x8] sm:$0xff]
    %v355 = vld [vmem:[%s3 + $0x10] sm:$0xff]
    %v356 = vld [vmem:[%s3 + $0x18] sm:$0xff]
    %v357 = vld [vmem:[%s3 + $0x20] sm:$0xff]
    %v358 = vld [vmem:[%s3 + $0x28] sm:$0xff]
    %v359 = vld [vmem:[%s3 + $0x30] sm:$0xff]
    %v360 = vld [vmem:[%s3 + $0x38] sm:$0xff]
    %v361 = vld [vmem:[%s3 + $0x40] sm:$0xff]
    %v362 = vld [vmem:[%s3 + $0x48] sm:$0xff]
    %v363 = vld [vmem:[%s3 + $0x50] sm:$0xff]
    %v364 = vld [vmem:[%s3 + $0x58] sm:$0xff]
    %v365 = vld [vmem:[%s3 + $0x60] sm:$0xff]
    %v366 = vld [vmem:[%s3 + $0x68] sm:$0xff]
    %v367 = vld [vmem:[%s3 + $0x70] sm:$0xff]
    %v368 = vld [vmem:[%s3 + $0x78] sm:$0xff]
    %v369 = vld [vmem:[%s3 + $0x80] sm:$0xff]
    %v370 = vld [vmem:[%s3 + $0x88] sm:$0xff]
    %v371 = vld [vmem:[%s3 + $0x90] sm:$0xff]
    %v372 = vld [vmem:[%s3 + $0x98] sm:$0xff]
    %v373 = vld [vmem:[%s3 + $0xa0] sm:$0xff]
    %v374 = vld [vmem:[%s3 + $0xa8] sm:$0xff]
    %v375 = vld [vmem:[%s3 + $0xb0] sm:$0xff]
    %v376 = vld [vmem:[%s3 + $0xb8] sm:$0xff]
    %v377 = vld [vmem:[%s3 + $0xc0] sm:$0xff]
    %v378 = vld [vmem:[%s3 + $0xc8] sm:$0xff]
    %v379 = vld [vmem:[%s3 + $0xd0] sm:$0xff]
    %v380 = vld [vmem:[%s3 + $0xd8] sm:$0xff]
    %v381 = vld [vmem:[%s3 + $0xe0] sm:$0xff]
    %v382 = vld [vmem:[%s3 + $0xe8] sm:$0xff]
    %v383 = vld [vmem:[%s3 + $0xf0] sm:$0xff]
    %v384 = vld [vmem:[%s3 + $0xf8] sm:$0xff]
    %v386 = vlaneseq
    %v387 = vshrl.u32 %v386, 7
    %v388 = vsub.s32 0, %v387
    %v389 = vrot.slane %v66, %v388
    %v390 = vlaneseq
    %v391 = vshrl.u32 %v390, 7
    %v392 = vsub.s32 1, %v391
    %v393 = vrot.slane %v66, %v392
    %v394 = vlaneseq
    %v395 = vshrl.u32 %v394, 7
    %v396 = vsub.s32 2, %v395
    %v397 = vrot.slane %v66, %v396
    %v398 = vlaneseq
    %v399 = vshrl.u32 %v398, 7
    %v400 = vsub.s32 3, %v399
    %v401 = vrot.slane %v66, %v400
    %vm406 = vcmask 523264
    %v408 = vsel %vm406, %v345, 0
    %v411 = vsel %vm406, %v346, 0
    %v414 = vsel %vm406, %v347, 0
    %v417 = vsel %vm406, %v348, 0
    %v420 = vsel %vm406, %v349, 0
    %v423 = vsel %vm406, %v350, 0
    %v426 = vsel %vm406, %v351, 0
    %v429 = vsel %vm406, %v352, 0
    %431 = vmatprep.subr.mxu0 0.0
    %432 = vmatpush1.msra.mxu0 0.0
    %433 = vmatprep.subr.mxu0 0.0
    %434 = vmatpush1.msra.mxu0 0.0
    %435 = vmatprep.subr.mxu0 0.0
    %436 = vmatpush1.msra.mxu0 0.0
    %437 = vmatprep.subr.mxu0 0.0
    %438 = vmatpush1.msra.mxu0 0.0
    %439 = vmatprep.subr.mxu0 0.0
    %440 = vmatpush1.msra.mxu0 0.0
    %441 = vmatprep.subr.mxu0 0.0
    %442 = vmatpush1.msra.mxu0 0.0
    %443 = vmatprep.subr.mxu0 0.0
    %444 = vmatpush1.msra.mxu0 0.0
    %445 = vmatprep.subr.mxu0 0.0
    %446 = vmatpush1.msra.mxu0 0.0
    %447 = vmatprep.subr.mxu0 %v382
    %448 = vmatpush1.msra.mxu0 %v381
    %449 = vmatprep.subr.mxu0 %v378
    %450 = vmatpush1.msra.mxu0 %v377
    %451 = vmatprep.subr.mxu0 %v374
    %452 = vmatpush1.msra.mxu0 %v373
    %453 = vmatprep.subr.mxu0 %v370
    %454 = vmatpush1.msra.mxu0 %v369
    %455 = vmatprep.subr.mxu0 %v366
    %456 = vmatpush1.msra.mxu0 %v365
    %457 = vmatprep.subr.mxu0 %v362
    %458 = vmatpush1.msra.mxu0 %v361
    %459 = vmatprep.subr.mxu0 %v358
    %460 = vmatpush1.msra.mxu0 %v357
    %461 = vmatprep.subr.mxu0 %v354
    %462 = vmatpush1.msra.mxu0 %v353
    %463 = vmatprep.subr.mxu0 0.0
    %464 = vmatpush2.msra.mxu0 0.0
    %465 = vmatprep.subr.mxu0 0.0
    %466 = vmatpush2.msra.mxu0 0.0
    %467 = vmatprep.subr.mxu0 0.0
    %468 = vmatpush2.msra.mxu0 0.0
    %469 = vmatprep.subr.mxu0 0.0
    %470 = vmatpush2.msra.mxu0 0.0
    %471 = vmatprep.subr.mxu0 0.0
    %472 = vmatpush2.msra.mxu0 0.0
    %473 = vmatprep.subr.mxu0 0.0
    %474 = vmatpush2.msra.mxu0 0.0
    %475 = vmatprep.subr.mxu0 0.0
    %476 = vmatpush2.msra.mxu0 0.0
    %477 = vmatprep.subr.mxu0 0.0
    %478 = vmatpush2.msra.mxu0 0.0
    %479 = vmatprep.subr.mxu0 0.0
    %480 = vmatpush2.msra.mxu0 0.0
    %481 = vmatprep.subr.mxu0 0.0
    %482 = vmatpush2.msra.mxu0 0.0
    %483 = vmatprep.subr.mxu0 0.0
    %484 = vmatpush2.msra.mxu0 0.0
    %485 = vmatprep.subr.mxu0 0.0
    %486 = vmatpush2.msra.mxu0 0.0
    %487 = vmatprep.subr.mxu0 0.0
    %488 = vmatpush2.msra.mxu0 0.0
    %489 = vmatprep.subr.mxu0 0.0
    %490 = vmatpush2.msra.mxu0 0.0
    %491 = vmatprep.subr.mxu0 0.0
    %492 = vmatpush2.msra.mxu0 0.0
    %493 = vmatprep.subr.mxu0 0.0
    %494 = vmatpush2.msra.mxu0 0.0
    %495 = vmatprep.mubr.f32.mxu0 0.0
    %496 = vmatmul.mubr.f32.gmra.mxu0 %v408
    %v497 = vpop.f32.mrf.mxu0
    %v498 = vadd.f32 %v389, %v497
    %v499 = vpop.f32.mrf.mxu0
    %v500 = vadd.f32 %v393, %v499
    %501 = vmatprep.mubr.f32.mxu0 0.0
    %502 = vmatmul.mubr.f32.gmra.mxu0 %v411
    %v503 = vpop.f32.mrf.mxu0
    %v504 = vadd.f32 %v389, %v503
    %v505 = vpop.f32.mrf.mxu0
    %v506 = vadd.f32 %v393, %v505
    %507 = vmatprep.mubr.f32.mxu0 0.0
    %508 = vmatmul.mubr.f32.gmra.mxu0 %v414
    %v509 = vpop.f32.mrf.mxu0
    %v510 = vadd.f32 %v389, %v509
    %v511 = vpop.f32.mrf.mxu0
    %v512 = vadd.f32 %v393, %v511
    %513 = vmatprep.mubr.f32.mxu0 0.0
    %514 = vmatmul.mubr.f32.gmra.mxu0 %v417
    %v515 = vpop.f32.mrf.mxu0
    %v516 = vadd.f32 %v389, %v515
    %v517 = vpop.f32.mrf.mxu0
    %v518 = vadd.f32 %v393, %v517
    %519 = vmatprep.mubr.f32.mxu0 0.0
    %520 = vmatmul.mubr.f32.gmra.mxu0 %v420
    %v521 = vpop.f32.mrf.mxu0
    %v522 = vadd.f32 %v389, %v521
    %v523 = vpop.f32.mrf.mxu0
    %v524 = vadd.f32 %v393, %v523
    %525 = vmatprep.mubr.f32.mxu0 0.0
    %526 = vmatmul.mubr.f32.gmra.mxu0 %v423
    %v527 = vpop.f32.mrf.mxu0
    %v528 = vadd.f32 %v389, %v527
    %v529 = vpop.f32.mrf.mxu0
    %v530 = vadd.f32 %v393, %v529
    %531 = vmatprep.mubr.f32.mxu0 0.0
    %532 = vmatmul.mubr.f32.gmra.mxu0 %v426
    %v533 = vpop.f32.mrf.mxu0
    %v534 = vadd.f32 %v389, %v533
    %v535 = vpop.f32.mrf.mxu0
    %v536 = vadd.f32 %v393, %v535
    %537 = vmatprep.mubr.f32.mxu0 0.0
    %538 = vmatmul.mubr.f32.gmra.mxu0 %v429
    %v539 = vpop.f32.mrf.mxu0
    %v540 = vadd.f32 %v389, %v539
    %v541 = vpop.f32.mrf.mxu0
    %v542 = vadd.f32 %v393, %v541
    %543 = vdwg.mxu0
    %544 = vmatprep.subr.mxu0 0.0
    %545 = vmatpush1.msra.mxu0 0.0
    %546 = vmatprep.subr.mxu0 0.0
    %547 = vmatpush1.msra.mxu0 0.0
    %548 = vmatprep.subr.mxu0 0.0
    %549 = vmatpush1.msra.mxu0 0.0
    %550 = vmatprep.subr.mxu0 0.0
    %551 = vmatpush1.msra.mxu0 0.0
    %552 = vmatprep.subr.mxu0 0.0
    %553 = vmatpush1.msra.mxu0 0.0
    %554 = vmatprep.subr.mxu0 0.0
    %555 = vmatpush1.msra.mxu0 0.0
    %556 = vmatprep.subr.mxu0 0.0
    %557 = vmatpush1.msra.mxu0 0.0
    %558 = vmatprep.subr.mxu0 0.0
    %559 = vmatpush1.msra.mxu0 0.0
    %560 = vmatprep.subr.mxu0 %v384
    %561 = vmatpush1.msra.mxu0 %v383
    %562 = vmatprep.subr.mxu0 %v380
    %563 = vmatpush1.msra.mxu0 %v379
    %564 = vmatprep.subr.mxu0 %v376
    %565 = vmatpush1.msra.mxu0 %v375
    %566 = vmatprep.subr.mxu0 %v372
    %567 = vmatpush1.msra.mxu0 %v371
    %568 = vmatprep.subr.mxu0 %v368
    %569 = vmatpush1.msra.mxu0 %v367
    %570 = vmatprep.subr.mxu0 %v364
    %571 = vmatpush1.msra.mxu0 %v363
    %572 = vmatprep.subr.mxu0 %v360
    %573 = vmatpush1.msra.mxu0 %v359
    %574 = vmatprep.subr.mxu0 %v356
    %575 = vmatpush1.msra.mxu0 %v355
    %576 = vmatprep.subr.mxu0 0.0
    %577 = vmatpush2.msra.mxu0 0.0
    %578 = vmatprep.subr.mxu0 0.0
    %579 = vmatpush2.msra.mxu0 0.0
    %580 = vmatprep.subr.mxu0 0.0
    %581 = vmatpush2.msra.mxu0 0.0
    %582 = vmatprep.subr.mxu0 0.0
    %583 = vmatpush2.msra.mxu0 0.0
    %584 = vmatprep.subr.mxu0 0.0
    %585 = vmatpush2.msra.mxu0 0.0
    %586 = vmatprep.subr.mxu0 0.0
    %587 = vmatpush2.msra.mxu0 0.0
    %588 = vmatprep.subr.mxu0 0.0
    %589 = vmatpush2.msra.mxu0 0.0
    %590 = vmatprep.subr.mxu0 0.0
    %591 = vmatpush2.msra.mxu0 0.0
    %592 = vmatprep.subr.mxu0 0.0
    %593 = vmatpush2.msra.mxu0 0.0
    %594 = vmatprep.subr.mxu0 0.0
    %595 = vmatpush2.msra.mxu0 0.0
    %596 = vmatprep.subr.mxu0 0.0
    %597 = vmatpush2.msra.mxu0 0.0
    %598 = vmatprep.subr.mxu0 0.0
    %599 = vmatpush2.msra.mxu0 0.0
    %600 = vmatprep.subr.mxu0 0.0
    %601 = vmatpush2.msra.mxu0 0.0
    %602 = vmatprep.subr.mxu0 0.0
    %603 = vmatpush2.msra.mxu0 0.0
    %604 = vmatprep.subr.mxu0 0.0
    %605 = vmatpush2.msra.mxu0 0.0
    %606 = vmatprep.subr.mxu0 0.0
    %607 = vmatpush2.msra.mxu0 0.0
    %608 = vmatprep.mubr.f32.mxu0 0.0
    %609 = vmatmul.mubr.f32.gmra.mxu0 %v408
    %v610 = vpop.f32.mrf.mxu0
    %v611 = vadd.f32 %v397, %v610
    %v612 = vpop.f32.mrf.mxu0
    %v613 = vadd.f32 %v401, %v612
    %614 = vmatprep.mubr.f32.mxu0 0.0
    %615 = vmatmul.mubr.f32.gmra.mxu0 %v411
    %v616 = vpop.f32.mrf.mxu0
    %v617 = vadd.f32 %v397, %v616
    %v618 = vpop.f32.mrf.mxu0
    %v619 = vadd.f32 %v401, %v618
    %620 = vmatprep.mubr.f32.mxu0 0.0
    %621 = vmatmul.mubr.f32.gmra.mxu0 %v414
    %v622 = vpop.f32.mrf.mxu0
    %v623 = vadd.f32 %v397, %v622
    %v624 = vpop.f32.mrf.mxu0
    %v625 = vadd.f32 %v401, %v624
    %626 = vmatprep.mubr.f32.mxu0 0.0
    %627 = vmatmul.mubr.f32.gmra.mxu0 %v417
    %v628 = vpop.f32.mrf.mxu0
    %v629 = vadd.f32 %v397, %v628
    %v630 = vpop.f32.mrf.mxu0
    %v631 = vadd.f32 %v401, %v630
    %632 = vmatprep.mubr.f32.mxu0 0.0
    %633 = vmatmul.mubr.f32.gmra.mxu0 %v420
    %v634 = vpop.f32.mrf.mxu0
    %v635 = vadd.f32 %v397, %v634
    %v636 = vpop.f32.mrf.mxu0
    %v637 = vadd.f32 %v401, %v636
    %638 = vmatprep.mubr.f32.mxu0 0.0
    %639 = vmatmul.mubr.f32.gmra.mxu0 %v423
    %v640 = vpop.f32.mrf.mxu0
    %v641 = vadd.f32 %v397, %v640
    %v642 = vpop.f32.mrf.mxu0
    %v643 = vadd.f32 %v401, %v642
    %644 = vmatprep.mubr.f32.mxu0 0.0
    %645 = vmatmul.mubr.f32.gmra.mxu0 %v426
    %v646 = vpop.f32.mrf.mxu0
    %v647 = vadd.f32 %v397, %v646
    %v648 = vpop.f32.mrf.mxu0
    %v649 = vadd.f32 %v401, %v648
    %650 = vmatprep.mubr.f32.mxu0 0.0
    %651 = vmatmul.mubr.f32.gmra.mxu0 %v429
    %v652 = vpop.f32.mrf.mxu0
    %v653 = vadd.f32 %v397, %v652
    %v654 = vpop.f32.mrf.mxu0
    %v655 = vadd.f32 %v401, %v654
    %656 = vdwg.mxu0
    %657 = vst [vmem:[#allocation2] sm:$0xff] %v498
    %658 = vst [vmem:[#allocation2 + $0x8] sm:$0xff] %v500
    %659 = vst [vmem:[#allocation2 + $0x10] sm:$0xff] %v611
    %660 = vst [vmem:[#allocation2 + $0x18] sm:$0xff] %v613
    %661 = vst [vmem:[#allocation2 + $0x20] sm:$0xff] %v504
    %662 = vst [vmem:[#allocation2 + $0x28] sm:$0xff] %v506
    %663 = vst [vmem:[#allocation2 + $0x30] sm:$0xff] %v617
    %664 = vst [vmem:[#allocation2 + $0x38] sm:$0xff] %v619
    %665 = vst [vmem:[#allocation2 + $0x40] sm:$0xff] %v510
    %666 = vst [vmem:[#allocation2 + $0x48] sm:$0xff] %v512
    %667 = vst [vmem:[#allocation2 + $0x50] sm:$0xff] %v623
    %668 = vst [vmem:[#allocation2 + $0x58] sm:$0xff] %v625
    %669 = vst [vmem:[#allocation2 + $0x60] sm:$0xff] %v516
    %670 = vst [vmem:[#allocation2 + $0x68] sm:$0xff] %v518
    %671 = vst [vmem:[#allocation2 + $0x70] sm:$0xff] %v629
    %672 = vst [vmem:[#allocation2 + $0x78] sm:$0xff] %v631
    %673 = vst [vmem:[#allocation2 + $0x80] sm:$0xff] %v522
    %674 = vst [vmem:[#allocation2 + $0x88] sm:$0xff] %v524
    %675 = vst [vmem:[#allocation2 + $0x90] sm:$0xff] %v635
    %676 = vst [vmem:[#allocation2 + $0x98] sm:$0xff] %v637
    %677 = vst [vmem:[#allocation2 + $0xa0] sm:$0xff] %v528
    %678 = vst [vmem:[#allocation2 + $0xa8] sm:$0xff] %v530
    %679 = vst [vmem:[#allocation2 + $0xb0] sm:$0xff] %v641
    %680 = vst [vmem:[#allocation2 + $0xb8] sm:$0xff] %v643
    %681 = vst [vmem:[#allocation2 + $0xc0] sm:$0xff] %v534
    %682 = vst [vmem:[#allocation2 + $0xc8] sm:$0xff] %v536
    %683 = vst [vmem:[#allocation2 + $0xd0] sm:$0xff] %v647
    %684 = vst [vmem:[#allocation2 + $0xd8] sm:$0xff] %v649
    %685 = vst [vmem:[#allocation2 + $0xe0] sm:$0xff] %v540
    %686 = vst [vmem:[#allocation2 + $0xe8] sm:$0xff] %v542
    %687 = vst [vmem:[#allocation2 + $0xf0] sm:$0xff] %v653
    %688 = vst [vmem:[#allocation2 + $0xf8] sm:$0xff] %v655
    %v689 = vld [vmem:[%s7] sm:$0xff]
    %v690 = vld [vmem:[%s8] sm:$0xff]
    %v691 = vld [vmem:[#allocation4] sm:$0xff]
    %v692 = vld [vmem:[#allocation4 + $0x8] sm:$0xff]
    %v693 = vld [vmem:[#allocation4 + $0x10] sm:$0xff]
    %v694 = vld [vmem:[#allocation4 + $0x18] sm:$0xff]
    %v695 = vld [vmem:[#allocation4 + $0x20] sm:$0xff]
    %v696 = vld [vmem:[#allocation4 + $0x28] sm:$0xff]
    %v697 = vld [vmem:[#allocation4 + $0x30] sm:$0xff]
    %v698 = vld [vmem:[#allocation4 + $0x38] sm:$0xff]
    %v699 = vld [vmem:[#allocation4 + $0x40] sm:$0xff]
    %v700 = vld [vmem:[#allocation4 + $0x48] sm:$0xff]
    %v701 = vld [vmem:[#allocation4 + $0x50] sm:$0xff]
    %v702 = vld [vmem:[#allocation4 + $0x58] sm:$0xff]
    %v703 = vld [vmem:[#allocation4 + $0x60] sm:$0xff]
    %v704 = vld [vmem:[#allocation4 + $0x68] sm:$0xff]
    %v705 = vld [vmem:[#allocation4 + $0x70] sm:$0xff]
    %v706 = vld [vmem:[#allocation4 + $0x78] sm:$0xff]
    %v707 = vld [vmem:[#allocation4 + $0x80] sm:$0xff]
    %v708 = vld [vmem:[#allocation4 + $0x88] sm:$0xff]
    %v709 = vld [vmem:[#allocation4 + $0x90] sm:$0xff]
    %v710 = vld [vmem:[#allocation4 + $0x98] sm:$0xff]
    %v711 = vld [vmem:[#allocation4 + $0xa0] sm:$0xff]
    %v712 = vld [vmem:[#allocation4 + $0xa8] sm:$0xff]
    %v713 = vld [vmem:[#allocation4 + $0xb0] sm:$0xff]
    %v714 = vld [vmem:[#allocation4 + $0xb8] sm:$0xff]
    %v715 = vld [vmem:[#allocation4 + $0xc0] sm:$0xff]
    %v716 = vld [vmem:[#allocation4 + $0xc8] sm:$0xff]
    %v717 = vld [vmem:[#allocation4 + $0xd0] sm:$0xff]
    %v718 = vld [vmem:[#allocation4 + $0xd8] sm:$0xff]
    %v719 = vld [vmem:[#allocation4 + $0xe0] sm:$0xff]
    %v720 = vld [vmem:[#allocation4 + $0xe8] sm:$0xff]
    %v721 = vld [vmem:[#allocation4 + $0xf0] sm:$0xff]
    %v722 = vld [vmem:[#allocation4 + $0xf8] sm:$0xff]
    %v723 = vld [vmem:[#allocation4 + $0x100] sm:$0xff]
    %v724 = vld [vmem:[#allocation4 + $0x108] sm:$0xff]
    %v725 = vld [vmem:[#allocation4 + $0x110] sm:$0xff]
    %v726 = vld [vmem:[#allocation4 + $0x118] sm:$0xff]
    %v727 = vld [vmem:[#allocation4 + $0x120] sm:$0xff]
    %v728 = vld [vmem:[#allocation4 + $0x128] sm:$0xff]
    %v729 = vld [vmem:[#allocation4 + $0x130] sm:$0xff]
    %v730 = vld [vmem:[#allocation4 + $0x138] sm:$0xff]
    %v731 = vld [vmem:[#allocation4 + $0x140] sm:$0xff]
    %v732 = vld [vmem:[#allocation4 + $0x148] sm:$0xff]
    %v733 = vld [vmem:[#allocation4 + $0x150] sm:$0xff]
    %v734 = vld [vmem:[#allocation4 + $0x158] sm:$0xff]
    %v735 = vld [vmem:[#allocation4 + $0x160] sm:$0xff]
    %v736 = vld [vmem:[#allocation4 + $0x168] sm:$0xff]
    %v737 = vld [vmem:[#allocation4 + $0x170] sm:$0xff]
    %v738 = vld [vmem:[#allocation4 + $0x178] sm:$0xff]
    %v739 = vld [vmem:[#allocation4 + $0x180] sm:$0xff]
    %v740 = vld [vmem:[#allocation4 + $0x188] sm:$0xff]
    %v741 = vld [vmem:[#allocation4 + $0x190] sm:$0xff]
    %v742 = vld [vmem:[#allocation4 + $0x198] sm:$0xff]
    %v743 = vld [vmem:[#allocation4 + $0x1a0] sm:$0xff]
    %v744 = vld [vmem:[#allocation4 + $0x1a8] sm:$0xff]
    %v745 = vld [vmem:[#allocation4 + $0x1b0] sm:$0xff]
    %v746 = vld [vmem:[#allocation4 + $0x1b8] sm:$0xff]
    %v747 = vld [vmem:[#allocation4 + $0x1c0] sm:$0xff]
    %v748 = vld [vmem:[#allocation4 + $0x1c8] sm:$0xff]
    %v749 = vld [vmem:[#allocation4 + $0x1d0] sm:$0xff]
    %v750 = vld [vmem:[#allocation4 + $0x1d8] sm:$0xff]
    %v751 = vld [vmem:[#allocation4 + $0x1e0] sm:$0xff]
    %v752 = vld [vmem:[#allocation4 + $0x1e8] sm:$0xff]
    %v753 = vld [vmem:[#allocation4 + $0x1f0] sm:$0xff]
    %v754 = vld [vmem:[#allocation4 + $0x1f8] sm:$0xff]
    %v755 = vld [vmem:[#allocation2] sm:$0xff]
    %v756 = vld [vmem:[#allocation2 + $0x8] sm:$0xff]
    %v757 = vld [vmem:[#allocation2 + $0x10] sm:$0xff]
    %v758 = vld [vmem:[#allocation2 + $0x18] sm:$0xff]
    %759 = vmatprep.subr.mxu0 %v752
    %760 = vmatpush1.msra.mxu0 %v751
    %761 = vmatprep.subr.mxu0 %v748
    %762 = vmatpush1.msra.mxu0 %v747
    %763 = vmatprep.subr.mxu0 %v744
    %764 = vmatpush1.msra.mxu0 %v743
    %765 = vmatprep.subr.mxu0 %v740
    %766 = vmatpush1.msra.mxu0 %v739
    %767 = vmatprep.subr.mxu0 %v736
    %768 = vmatpush1.msra.mxu0 %v735
    %769 = vmatprep.subr.mxu0 %v732
    %770 = vmatpush1.msra.mxu0 %v731
    %771 = vmatprep.subr.mxu0 %v728
    %772 = vmatpush1.msra.mxu0 %v727
    %773 = vmatprep.subr.mxu0 %v724
    %774 = vmatpush1.msra.mxu0 %v723
    %775 = vmatprep.subr.mxu0 %v720
    %776 = vmatpush1.msra.mxu0 %v719
    %777 = vmatprep.subr.mxu0 %v716
    %778 = vmatpush1.msra.mxu0 %v715
    %779 = vmatprep.subr.mxu0 %v712
    %780 = vmatpush1.msra.mxu0 %v711
    %781 = vmatprep.subr.mxu0 %v708
    %782 = vmatpush1.msra.mxu0 %v707
    %783 = vmatprep.subr.mxu0 %v704
    %784 = vmatpush1.msra.mxu0 %v703
    %785 = vmatprep.subr.mxu0 %v700
    %786 = vmatpush1.msra.mxu0 %v699
    %787 = vmatprep.subr.mxu0 %v696
    %788 = vmatpush1.msra.mxu0 %v695
    %789 = vmatprep.subr.mxu0 %v692
    %790 = vmatpush1.msra.mxu0 %v691
    %791 = vmatprep.subr.mxu0 0.0
    %792 = vmatpush2.msra.mxu0 0.0
    %793 = vmatprep.subr.mxu0 0.0
    %794 = vmatpush2.msra.mxu0 0.0
    %795 = vmatprep.subr.mxu0 0.0
    %796 = vmatpush2.msra.mxu0 0.0
    %797 = vmatprep.subr.mxu0 0.0
    %798 = vmatpush2.msra.mxu0 0.0
    %799 = vmatprep.subr.mxu0 0.0
    %800 = vmatpush2.msra.mxu0 0.0
    %801 = vmatprep.subr.mxu0 0.0
    %802 = vmatpush2.msra.mxu0 0.0
    %803 = vmatprep.subr.mxu0 0.0
    %804 = vmatpush2.msra.mxu0 0.0
    %805 = vmatprep.subr.mxu0 0.0
    %806 = vmatpush2.msra.mxu0 0.0
    %807 = vmatprep.subr.mxu0 0.0
    %808 = vmatpush2.msra.mxu0 0.0
    %809 = vmatprep.subr.mxu0 0.0
    %810 = vmatpush2.msra.mxu0 0.0
    %811 = vmatprep.subr.mxu0 0.0
    %812 = vmatpush2.msra.mxu0 0.0
    %813 = vmatprep.subr.mxu0 0.0
    %814 = vmatpush2.msra.mxu0 0.0
    %815 = vmatprep.subr.mxu0 0.0
    %816 = vmatpush2.msra.mxu0 0.0
    %817 = vmatprep.subr.mxu0 0.0
    %818 = vmatpush2.msra.mxu0 0.0
    %819 = vmatprep.subr.mxu0 0.0
    %820 = vmatpush2.msra.mxu0 0.0
    %821 = vmatprep.subr.mxu0 0.0
    %822 = vmatpush2.msra.mxu0 0.0
    %823 = vmatprep.mubr.f32.mxu0 0.0
    %824 = vmatmul.mubr.f32.gmra.mxu0 %v689
    %v825 = vpop.f32.mrf.mxu0
    %v826 = vadd.f32 %v755, %v825
    %v827 = vpop.f32.mrf.mxu0
    %v828 = vadd.f32 %v756, %v827
    %829 = vdwg.mxu0
    %830 = vmatprep.subr.mxu0 %v754
    %831 = vmatpush1.msra.mxu0 %v753
    %832 = vmatprep.subr.mxu0 %v750
    %833 = vmatpush1.msra.mxu0 %v749
    %834 = vmatprep.subr.mxu0 %v746
    %835 = vmatpush1.msra.mxu0 %v745
    %836 = vmatprep.subr.mxu0 %v742
    %837 = vmatpush1.msra.mxu0 %v741
    %838 = vmatprep.subr.mxu0 %v738
    %839 = vmatpush1.msra.mxu0 %v737
    %840 = vmatprep.subr.mxu0 %v734
    %841 = vmatpush1.msra.mxu0 %v733
    %842 = vmatprep.subr.mxu0 %v730
    %843 = vmatpush1.msra.mxu0 %v729
    %844 = vmatprep.subr.mxu0 %v726
    %845 = vmatpush1.msra.mxu0 %v725
    %846 = vmatprep.subr.mxu0 %v722
    %847 = vmatpush1.msra.mxu0 %v721
    %848 = vmatprep.subr.mxu0 %v718
    %849 = vmatpush1.msra.mxu0 %v717
    %850 = vmatprep.subr.mxu0 %v714
    %851 = vmatpush1.msra.mxu0 %v713
    %852 = vmatprep.subr.mxu0 %v710
    %853 = vmatpush1.msra.mxu0 %v709
    %854 = vmatprep.subr.mxu0 %v706
    %855 = vmatpush1.msra.mxu0 %v705
    %856 = vmatprep.subr.mxu0 %v702
    %857 = vmatpush1.msra.mxu0 %v701
    %858 = vmatprep.subr.mxu0 %v698
    %859 = vmatpush1.msra.mxu0 %v697
    %860 = vmatprep.subr.mxu0 %v694
    %861 = vmatpush1.msra.mxu0 %v693
    %862 = vmatprep.subr.mxu0 0.0
    %863 = vmatpush2.msra.mxu0 0.0
    %864 = vmatprep.subr.mxu0 0.0
    %865 = vmatpush2.msra.mxu0 0.0
    %866 = vmatprep.subr.mxu0 0.0
    %867 = vmatpush2.msra.mxu0 0.0
    %868 = vmatprep.subr.mxu0 0.0
    %869 = vmatpush2.msra.mxu0 0.0
    %870 = vmatprep.subr.mxu0 0.0
    %871 = vmatpush2.msra.mxu0 0.0
    %872 = vmatprep.subr.mxu0 0.0
    %873 = vmatpush2.msra.mxu0 0.0
    %874 = vmatprep.subr.mxu0 0.0
    %875 = vmatpush2.msra.mxu0 0.0
    %876 = vmatprep.subr.mxu0 0.0
    %877 = vmatpush2.msra.mxu0 0.0
    %878 = vmatprep.subr.mxu0 0.0
    %879 = vmatpush2.msra.mxu0 0.0
    %880 = vmatprep.subr.mxu0 0.0
    %881 = vmatpush2.msra.mxu0 0.0
    %882 = vmatprep.subr.mxu0 0.0
    %883 = vmatpush2.msra.mxu0 0.0
    %884 = vmatprep.subr.mxu0 0.0
    %885 = vmatpush2.msra.mxu0 0.0
    %886 = vmatprep.subr.mxu0 0.0
    %887 = vmatpush2.msra.mxu0 0.0
    %888 = vmatprep.subr.mxu0 0.0
    %889 = vmatpush2.msra.mxu0 0.0
    %890 = vmatprep.subr.mxu0 0.0
    %891 = vmatpush2.msra.mxu0 0.0
    %892 = vmatprep.subr.mxu0 0.0
    %893 = vmatpush2.msra.mxu0 0.0
    %894 = vmatprep.mubr.f32.mxu0 0.0
    %895 = vmatmul.mubr.f32.gmra.mxu0 %v689
    %v896 = vpop.f32.mrf.mxu0
    %v897 = vadd.f32 %v757, %v896
    %v898 = vpop.f32.mrf.mxu0
    %v899 = vadd.f32 %v758, %v898
    %900 = vdwg.mxu0
    %v901 = vmul.f32 %v826, 0.5
    %v902 = vtanh.pop %v901
    %v903 = vadd.f32 %v902, 1.0
    %v904 = vmul.f32 %v903, 0.5
    %v905 = vmul.f32 %v828, 0.5
    %v906 = vtanh.pop %v905
    %v907 = vadd.f32 %v906, 1.0
    %v908 = vmul.f32 %v907, 0.5
    %v909 = vtanh.pop %v897
    %v910 = vmul.f32 %v899, 0.5
    %v911 = vtanh.pop %v910
    %v912 = vadd.f32 %v911, 1.0
    %v913 = vmul.f32 %v912, 0.5
    %v914 = vmul.f32 %v908, %v690
    %v915 = vmul.f32 %v904, %v909
    %v916 = vadd.f32 %v914, %v915
    %v917 = vtanh.pop %v916
    %v918 = vmul.f32 %v913, %v917
    %919 = vst [vmem:[#allocation3] sm:$0xff] %v918
    %v920 = vld [vmem:[#allocation4] sm:$0xff]
    %v921 = vld [vmem:[#allocation4 + $0x8] sm:$0xff]
    %v922 = vld [vmem:[#allocation4 + $0x10] sm:$0xff]
    %v923 = vld [vmem:[#allocation4 + $0x18] sm:$0xff]
    %v924 = vld [vmem:[#allocation4 + $0x20] sm:$0xff]
    %v925 = vld [vmem:[#allocation4 + $0x28] sm:$0xff]
    %v926 = vld [vmem:[#allocation4 + $0x30] sm:$0xff]
    %v927 = vld [vmem:[#allocation4 + $0x38] sm:$0xff]
    %v928 = vld [vmem:[#allocation4 + $0x40] sm:$0xff]
    %v929 = vld [vmem:[#allocation4 + $0x48] sm:$0xff]
    %v930 = vld [vmem:[#allocation4 + $0x50] sm:$0xff]
    %v931 = vld [vmem:[#allocation4 + $0x58] sm:$0xff]
    %v932 = vld [vmem:[#allocation4 + $0x60] sm:$0xff]
    %v933 = vld [vmem:[#allocation4 + $0x68] sm:$0xff]
    %v934 = vld [vmem:[#allocation4 + $0x70] sm:$0xff]
    %v935 = vld [vmem:[#allocation4 + $0x78] sm:$0xff]
    %v936 = vld [vmem:[#allocation4 + $0x80] sm:$0xff]
    %v937 = vld [vmem:[#allocation4 + $0x88] sm:$0xff]
    %v938 = vld [vmem:[#allocation4 + $0x90] sm:$0xff]
    %v939 = vld [vmem:[#allocation4 + $0x98] sm:$0xff]
    %v940 = vld [vmem:[#allocation4 + $0xa0] sm:$0xff]
    %v941 = vld [vmem:[#allocation4 + $0xa8] sm:$0xff]
    %v942 = vld [vmem:[#allocation4 + $0xb0] sm:$0xff]
    %v943 = vld [vmem:[#allocation4 + $0xb8] sm:$0xff]
    %v944 = vld [vmem:[#allocation4 + $0xc0] sm:$0xff]
    %v945 = vld [vmem:[#allocation4 + $0xc8] sm:$0xff]
    %v946 = vld [vmem:[#allocation4 + $0xd0] sm:$0xff]
    %v947 = vld [vmem:[#allocation4 + $0xd8] sm:$0xff]
    %v948 = vld [vmem:[#allocation4 + $0xe0] sm:$0xff]
    %v949 = vld [vmem:[#allocation4 + $0xe8] sm:$0xff]
    %v950 = vld [vmem:[#allocation4 + $0xf0] sm:$0xff]
    %v951 = vld [vmem:[#allocation4 + $0xf8] sm:$0xff]
    %v952 = vld [vmem:[#allocation4 + $0x100] sm:$0xff]
    %v953 = vld [vmem:[#allocation4 + $0x108] sm:$0xff]
    %v954 = vld [vmem:[#allocation4 + $0x110] sm:$0xff]
    %v955 = vld [vmem:[#allocation4 + $0x118] sm:$0xff]
    %v956 = vld [vmem:[#allocation4 + $0x120] sm:$0xff]
    %v957 = vld [vmem:[#allocation4 + $0x128] sm:$0xff]
    %v958 = vld [vmem:[#allocation4 + $0x130] sm:$0xff]
    %v959 = vld [vmem:[#allocation4 + $0x138] sm:$0xff]
    %v960 = vld [vmem:[#allocation4 + $0x140] sm:$0xff]
    %v961 = vld [vmem:[#allocation4 + $0x148] sm:$0xff]
    %v962 = vld [vmem:[#allocation4 + $0x150] sm:$0xff]
    %v963 = vld [vmem:[#allocation4 + $0x158] sm:$0xff]
    %v964 = vld [vmem:[#allocation4 + $0x160] sm:$0xff]
    %v965 = vld [vmem:[#allocation4 + $0x168] sm:$0xff]
    %v966 = vld [vmem:[#allocation4 + $0x170] sm:$0xff]
    %v967 = vld [vmem:[#allocation4 + $0x178] sm:$0xff]
    %v968 = vld [vmem:[#allocation4 + $0x180] sm:$0xff]
    %v969 = vld [vmem:[#allocation4 + $0x188] sm:$0xff]
    %v970 = vld [vmem:[#allocation4 + $0x190] sm:$0xff]
    %v971 = vld [vmem:[#allocation4 + $0x198] sm:$0xff]
    %v972 = vld [vmem:[#allocation4 + $0x1a0] sm:$0xff]
    %v973 = vld [vmem:[#allocation4 + $0x1a8] sm:$0xff]
    %v974 = vld [vmem:[#allocation4 + $0x1b0] sm:$0xff]
    %v975 = vld [vmem:[#allocation4 + $0x1b8] sm:$0xff]
    %v976 = vld [vmem:[#allocation4 + $0x1c0] sm:$0xff]
    %v977 = vld [vmem:[#allocation4 + $0x1c8] sm:$0xff]
    %v978 = vld [vmem:[#allocation4 + $0x1d0] sm:$0xff]
    %v979 = vld [vmem:[#allocation4 + $0x1d8] sm:$0xff]
    %v980 = vld [vmem:[#allocation4 + $0x1e0] sm:$0xff]
    %v981 = vld [vmem:[#allocation4 + $0x1e8] sm:$0xff]
    %v982 = vld [vmem:[#allocation4 + $0x1f0] sm:$0xff]
    %v983 = vld [vmem:[#allocation4 + $0x1f8] sm:$0xff]
    %s984 = scalar_lea.vmem [#allocation2], 32
    %v985 = vld [vmem:[%s984] sm:$0xff]
    %v986 = vld [vmem:[%s984 + $0x8] sm:$0xff]
    %v987 = vld [vmem:[%s984 + $0x10] sm:$0xff]
    %v988 = vld [vmem:[%s984 + $0x18] sm:$0xff]
    %989 = vmatprep.subr.mxu0 %v981
    %990 = vmatpush1.msra.mxu0 %v980
    %991 = vmatprep.subr.mxu0 %v977
    %992 = vmatpush1.msra.mxu0 %v976
    %993 = vmatprep.subr.mxu0 %v973
    %994 = vmatpush1.msra.mxu0 %v972
    %995 = vmatprep.subr.mxu0 %v969
    %996 = vmatpush1.msra.mxu0 %v968
    %997 = vmatprep.subr.mxu0 %v965
    %998 = vmatpush1.msra.mxu0 %v964
    %999 = vmatprep.subr.mxu0 %v961
    %1000 = vmatpush1.msra.mxu0 %v960
    %1001 = vmatprep.subr.mxu0 %v957
    %1002 = vmatpush1.msra.mxu0 %v956
    %1003 = vmatprep.subr.mxu0 %v953
    %1004 = vmatpush1.msra.mxu0 %v952
    %1005 = vmatprep.subr.mxu0 %v949
    %1006 = vmatpush1.msra.mxu0 %v948
    %1007 = vmatprep.subr.mxu0 %v945
    %1008 = vmatpush1.msra.mxu0 %v944
    %1009 = vmatprep.subr.mxu0 %v941
    %1010 = vmatpush1.msra.mxu0 %v940
    %1011 = vmatprep.subr.mxu0 %v937
    %1012 = vmatpush1.msra.mxu0 %v936
    %1013 = vmatprep.subr.mxu0 %v933
    %1014 = vmatpush1.msra.mxu0 %v932
    %1015 = vmatprep.subr.mxu0 %v929
    %1016 = vmatpush1.msra.mxu0 %v928
    %1017 = vmatprep.subr.mxu0 %v925
    %1018 = vmatpush1.msra.mxu0 %v924
    %1019 = vmatprep.subr.mxu0 %v921
    %1020 = vmatpush1.msra.mxu0 %v920
    %1021 = vmatprep.subr.mxu0 0.0
    %1022 = vmatpush2.msra.mxu0 0.0
    %1023 = vmatprep.subr.mxu0 0.0
    %1024 = vmatpush2.msra.mxu0 0.0
    %1025 = vmatprep.subr.mxu0 0.0
    %1026 = vmatpush2.msra.mxu0 0.0
    %1027 = vmatprep.subr.mxu0 0.0
    %1028 = vmatpush2.msra.mxu0 0.0
    %1029 = vmatprep.subr.mxu0 0.0
    %1030 = vmatpush2.msra.mxu0 0.0
    %1031 = vmatprep.subr.mxu0 0.0
    %1032 = vmatpush2.msra.mxu0 0.0
    %1033 = vmatprep.subr.mxu0 0.0
    %1034 = vmatpush2.msra.mxu0 0.0
    %1035 = vmatprep.subr.mxu0 0.0
    %1036 = vmatpush2.msra.mxu0 0.0
    %1037 = vmatprep.subr.mxu0 0.0
    %1038 = vmatpush2.msra.mxu0 0.0
    %1039 = vmatprep.subr.mxu0 0.0
    %1040 = vmatpush2.msra.mxu0 0.0
    %1041 = vmatprep.subr.mxu0 0.0
    %1042 = vmatpush2.msra.mxu0 0.0
    %1043 = vmatprep.subr.mxu0 0.0
    %1044 = vmatpush2.msra.mxu0 0.0
    %1045 = vmatprep.subr.mxu0 0.0
    %1046 = vmatpush2.msra.mxu0 0.0
    %1047 = vmatprep.subr.mxu0 0.0
    %1048 = vmatpush2.msra.mxu0 0.0
    %1049 = vmatprep.subr.mxu0 0.0
    %1050 = vmatpush2.msra.mxu0 0.0
    %1051 = vmatprep.subr.mxu0 0.0
    %1052 = vmatpush2.msra.mxu0 0.0
    %1053 = vmatprep.mubr.f32.mxu0 0.0
    %1054 = vmatmul.mubr.f32.gmra.mxu0 %v918
    %v1055 = vpop.f32.mrf.mxu0
    %v1056 = vadd.f32 %v985, %v1055
    %v1057 = vpop.f32.mrf.mxu0
    %v1058 = vadd.f32 %v986, %v1057
    %1059 = vdwg.mxu0
    %1060 = vmatprep.subr.mxu0 %v983
    %1061 = vmatpush1.msra.mxu0 %v982
    %1062 = vmatprep.subr.mxu0 %v979
    %1063 = vmatpush1.msra.mxu0 %v978
    %1064 = vmatprep.subr.mxu0 %v975
    %1065 = vmatpush1.msra.mxu0 %v974
    %1066 = vmatprep.subr.mxu0 %v971
    %1067 = vmatpush1.msra.mxu0 %v970
    %1068 = vmatprep.subr.mxu0 %v967
    %1069 = vmatpush1.msra.mxu0 %v966
    %1070 = vmatprep.subr.mxu0 %v963
    %1071 = vmatpush1.msra.mxu0 %v962
    %1072 = vmatprep.subr.mxu0 %v959
    %1073 = vmatpush1.msra.mxu0 %v958
    %1074 = vmatprep.subr.mxu0 %v955
    %1075 = vmatpush1.msra.mxu0 %v954
    %1076 = vmatprep.subr.mxu0 %v951
    %1077 = vmatpush1.msra.mxu0 %v950
    %1078 = vmatprep.subr.mxu0 %v947
    %1079 = vmatpush1.msra.mxu0 %v946
    %1080 = vmatprep.subr.mxu0 %v943
    %1081 = vmatpush1.msra.mxu0 %v942
    %1082 = vmatprep.subr.mxu0 %v939
    %1083 = vmatpush1.msra.mxu0 %v938
    %1084 = vmatprep.subr.mxu0 %v935
    %1085 = vmatpush1.msra.mxu0 %v934
    %1086 = vmatprep.subr.mxu0 %v931
    %1087 = vmatpush1.msra.mxu0 %v930
    %1088 = vmatprep.subr.mxu0 %v927
    %1089 = vmatpush1.msra.mxu0 %v926
    %1090 = vmatprep.subr.mxu0 %v923
    %1091 = vmatpush1.msra.mxu0 %v922
    %1092 = vmatprep.subr.mxu0 0.0
    %1093 = vmatpush2.msra.mxu0 0.0
    %1094 = vmatprep.subr.mxu0 0.0
    %1095 = vmatpush2.msra.mxu0 0.0
    %1096 = vmatprep.subr.mxu0 0.0
    %1097 = vmatpush2.msra.mxu0 0.0
    %1098 = vmatprep.subr.mxu0 0.0
    %1099 = vmatpush2.msra.mxu0 0.0
    %1100 = vmatprep.subr.mxu0 0.0
    %1101 = vmatpush2.msra.mxu0 0.0
    %1102 = vmatprep.subr.mxu0 0.0
    %1103 = vmatpush2.msra.mxu0 0.0
    %1104 = vmatprep.subr.mxu0 0.0
    %1105 = vmatpush2.msra.mxu0 0.0
    %1106 = vmatprep.subr.mxu0 0.0
    %1107 = vmatpush2.msra.mxu0 0.0
    %1108 = vmatprep.subr.mxu0 0.0
    %1109 = vmatpush2.msra.mxu0 0.0
    %1110 = vmatprep.subr.mxu0 0.0
    %1111 = vmatpush2.msra.mxu0 0.0
    %1112 = vmatprep.subr.mxu0 0.0
    %1113 = vmatpush2.msra.mxu0 0.0
    %1114 = vmatprep.subr.mxu0 0.0
    %1115 = vmatpush2.msra.mxu0 0.0
    %1116 = vmatprep.subr.mxu0 0.0
    %1117 = vmatpush2.msra.mxu0 0.0
    %1118 = vmatprep.subr.mxu0 0.0
    %1119 = vmatpush2.msra.mxu0 0.0
    %1120 = vmatprep.subr.mxu0 0.0
    %1121 = vmatpush2.msra.mxu0 0.0
    %1122 = vmatprep.subr.mxu0 0.0
    %1123 = vmatpush2.msra.mxu0 0.0
    %1124 = vmatprep.mubr.f32.mxu0 0.0
    %1125 = vmatmul.mubr.f32.gmra.mxu0 %v918
    %v1126 = vpop.f32.mrf.mxu0
    %v1127 = vadd.f32 %v987, %v1126
    %v1128 = vpop.f32.mrf.mxu0
    %v1129 = vadd.f32 %v988, %v1128
    %1130 = vdwg.mxu0
    %v1131 = vmul.f32 %v1056, 0.5
    %v1132 = vtanh.pop %v1131
    %v1133 = vadd.f32 %v1132, 1.0
    %v1134 = vmul.f32 %v1133, 0.5
    %v1135 = vmul.f32 %v1058, 0.5
    %v1136 = vtanh.pop %v1135
    %v1137 = vadd.f32 %v1136, 1.0
    %v1138 = vmul.f32 %v1137, 0.5
    %v1139 = vtanh.pop %v1127
    %v1140 = vmul.f32 %v1129, 0.5
    %v1141 = vtanh.pop %v1140
    %v1142 = vadd.f32 %v1141, 1.0
    %v1143 = vmul.f32 %v1142, 0.5
    %v1144 = vmul.f32 %v1138, %v916
    %v1145 = vmul.f32 %v1134, %v1139
    %v1146 = vadd.f32 %v1144, %v1145
    %v1147 = vtanh.pop %v1146
    %v1148 = vmul.f32 %v1143, %v1147
    %s1149 = scalar_lea.vmem [#allocation3], 8
    %1150 = vst [vmem:[%s1149] sm:$0xff] %v1148
    %v1151 = vld [vmem:[#allocation4] sm:$0xff]
    %v1152 = vld [vmem:[#allocation4 + $0x8] sm:$0xff]
    %v1153 = vld [vmem:[#allocation4 + $0x10] sm:$0xff]
    %v1154 = vld [vmem:[#allocation4 + $0x18] sm:$0xff]
    %v1155 = vld [vmem:[#allocation4 + $0x20] sm:$0xff]
    %v1156 = vld [vmem:[#allocation4 + $0x28] sm:$0xff]
    %v1157 = vld [vmem:[#allocation4 + $0x30] sm:$0xff]
    %v1158 = vld [vmem:[#allocation4 + $0x38] sm:$0xff]
    %v1159 = vld [vmem:[#allocation4 + $0x40] sm:$0xff]
    %v1160 = vld [vmem:[#allocation4 + $0x48] sm:$0xff]
    %v1161 = vld [vmem:[#allocation4 + $0x50] sm:$0xff]
    %v1162 = vld [vmem:[#allocation4 + $0x58] sm:$0xff]
    %v1163 = vld [vmem:[#allocation4 + $0x60] sm:$0xff]
    %v1164 = vld [vmem:[#allocation4 + $0x68] sm:$0xff]
    %v1165 = vld [vmem:[#allocation4 + $0x70] sm:$0xff]
    %v1166 = vld [vmem:[#allocation4 + $0x78] sm:$0xff]
    %v1167 = vld [vmem:[#allocation4 + $0x80] sm:$0xff]
    %v1168 = vld [vmem:[#allocation4 + $0x88] sm:$0xff]
    %v1169 = vld [vmem:[#allocation4 + $0x90] sm:$0xff]
    %v1170 = vld [vmem:[#allocation4 + $0x98] sm:$0xff]
    %v1171 = vld [vmem:[#allocation4 + $0xa0] sm:$0xff]
    %v1172 = vld [vmem:[#allocation4 + $0xa8] sm:$0xff]
    %v1173 = vld [vmem:[#allocation4 + $0xb0] sm:$0xff]
    %v1174 = vld [vmem:[#allocation4 + $0xb8] sm:$0xff]
    %v1175 = vld [vmem:[#allocation4 + $0xc0] sm:$0xff]
    %v1176 = vld [vmem:[#allocation4 + $0xc8] sm:$0xff]
    %v1177 = vld [vmem:[#allocation4 + $0xd0] sm:$0xff]
    %v1178 = vld [vmem:[#allocation4 + $0xd8] sm:$0xff]
    %v1179 = vld [vmem:[#allocation4 + $0xe0] sm:$0xff]
    %v1180 = vld [vmem:[#allocation4 + $0xe8] sm:$0xff]
    %v1181 = vld [vmem:[#allocation4 + $0xf0] sm:$0xff]
    %v1182 = vld [vmem:[#allocation4 + $0xf8] sm:$0xff]
    %v1183 = vld [vmem:[#allocation4 + $0x100] sm:$0xff]
    %v1184 = vld [vmem:[#allocation4 + $0x108] sm:$0xff]
    %v1185 = vld [vmem:[#allocation4 + $0x110] sm:$0xff]
    %v1186 = vld [vmem:[#allocation4 + $0x118] sm:$0xff]
    %v1187 = vld [vmem:[#allocation4 + $0x120] sm:$0xff]
    %v1188 = vld [vmem:[#allocation4 + $0x128] sm:$0xff]
    %v1189 = vld [vmem:[#allocation4 + $0x130] sm:$0xff]
    %v1190 = vld [vmem:[#allocation4 + $0x138] sm:$0xff]
    %v1191 = vld [vmem:[#allocation4 + $0x140] sm:$0xff]
    %v1192 = vld [vmem:[#allocation4 + $0x148] sm:$0xff]
    %v1193 = vld [vmem:[#allocation4 + $0x150] sm:$0xff]
    %v1194 = vld [vmem:[#allocation4 + $0x158] sm:$0xff]
    %v1195 = vld [vmem:[#allocation4 + $0x160] sm:$0xff]
    %v1196 = vld [vmem:[#allocation4 + $0x168] sm:$0xff]
    %v1197 = vld [vmem:[#allocation4 + $0x170] sm:$0xff]
    %v1198 = vld [vmem:[#allocation4 + $0x178] sm:$0xff]
    %v1199 = vld [vmem:[#allocation4 + $0x180] sm:$0xff]
    %v1200 = vld [vmem:[#allocation4 + $0x188] sm:$0xff]
    %v1201 = vld [vmem:[#allocation4 + $0x190] sm:$0xff]
    %v1202 = vld [vmem:[#allocation4 + $0x198] sm:$0xff]
    %v1203 = vld [vmem:[#allocation4 + $0x1a0] sm:$0xff]
    %v1204 = vld [vmem:[#allocation4 + $0x1a8] sm:$0xff]
    %v1205 = vld [vmem:[#allocation4 + $0x1b0] sm:$0xff]
    %v1206 = vld [vmem:[#allocation4 + $0x1b8] sm:$0xff]
    %v1207 = vld [vmem:[#allocation4 + $0x1c0] sm:$0xff]
    %v1208 = vld [vmem:[#allocation4 + $0x1c8] sm:$0xff]
    %v1209 = vld [vmem:[#allocation4 + $0x1d0] sm:$0xff]
    %v1210 = vld [vmem:[#allocation4 + $0x1d8] sm:$0xff]
    %v1211 = vld [vmem:[#allocation4 + $0x1e0] sm:$0xff]
    %v1212 = vld [vmem:[#allocation4 + $0x1e8] sm:$0xff]
    %v1213 = vld [vmem:[#allocation4 + $0x1f0] sm:$0xff]
    %v1214 = vld [vmem:[#allocation4 + $0x1f8] sm:$0xff]
    %s1215 = scalar_lea.vmem [#allocation2], 64
    %v1216 = vld [vmem:[%s1215] sm:$0xff]
    %v1217 = vld [vmem:[%s1215 + $0x8] sm:$0xff]
    %v1218 = vld [vmem:[%s1215 + $0x10] sm:$0xff]
    %v1219 = vld [vmem:[%s1215 + $0x18] sm:$0xff]
    %1220 = vmatprep.subr.mxu0 %v1212
    %1221 = vmatpush1.msra.mxu0 %v1211
    %1222 = vmatprep.subr.mxu0 %v1208
    %1223 = vmatpush1.msra.mxu0 %v1207
    %1224 = vmatprep.subr.mxu0 %v1204
    %1225 = vmatpush1.msra.mxu0 %v1203
    %1226 = vmatprep.subr.mxu0 %v1200
    %1227 = vmatpush1.msra.mxu0 %v1199
    %1228 = vmatprep.subr.mxu0 %v1196
    %1229 = vmatpush1.msra.mxu0 %v1195
    %1230 = vmatprep.subr.mxu0 %v1192
    %1231 = vmatpush1.msra.mxu0 %v1191
    %1232 = vmatprep.subr.mxu0 %v1188
    %1233 = vmatpush1.msra.mxu0 %v1187
    %1234 = vmatprep.subr.mxu0 %v1184
    %1235 = vmatpush1.msra.mxu0 %v1183
    %1236 = vmatprep.subr.mxu0 %v1180
    %1237 = vmatpush1.msra.mxu0 %v1179
    %1238 = vmatprep.subr.mxu0 %v1176
    %1239 = vmatpush1.msra.mxu0 %v1175
    %1240 = vmatprep.subr.mxu0 %v1172
    %1241 = vmatpush1.msra.mxu0 %v1171
    %1242 = vmatprep.subr.mxu0 %v1168
    %1243 = vmatpush1.msra.mxu0 %v1167
    %1244 = vmatprep.subr.mxu0 %v1164
    %1245 = vmatpush1.msra.mxu0 %v1163
    %1246 = vmatprep.subr.mxu0 %v1160
    %1247 = vmatpush1.msra.mxu0 %v1159
    %1248 = vmatprep.subr.mxu0 %v1156
    %1249 = vmatpush1.msra.mxu0 %v1155
    %1250 = vmatprep.subr.mxu0 %v1152
    %1251 = vmatpush1.msra.mxu0 %v1151
    %1252 = vmatprep.subr.mxu0 0.0
    %1253 = vmatpush2.msra.mxu0 0.0
    %1254 = vmatprep.subr.mxu0 0.0
    %1255 = vmatpush2.msra.mxu0 0.0
    %1256 = vmatprep.subr.mxu0 0.0
    %1257 = vmatpush2.msra.mxu0 0.0
    %1258 = vmatprep.subr.mxu0 0.0
    %1259 = vmatpush2.msra.mxu0 0.0
    %1260 = vmatprep.subr.mxu0 0.0
    %1261 = vmatpush2.msra.mxu0 0.0
    %1262 = vmatprep.subr.mxu0 0.0
    %1263 = vmatpush2.msra.mxu0 0.0
    %1264 = vmatprep.subr.mxu0 0.0
    %1265 = vmatpush2.msra.mxu0 0.0
    %1266 = vmatprep.subr.mxu0 0.0
    %1267 = vmatpush2.msra.mxu0 0.0
    %1268 = vmatprep.subr.mxu0 0.0
    %1269 = vmatpush2.msra.mxu0 0.0
    %1270 = vmatprep.subr.mxu0 0.0
    %1271 = vmatpush2.msra.mxu0 0.0
    %1272 = vmatprep.subr.mxu0 0.0
    %1273 = vmatpush2.msra.mxu0 0.0
    %1274 = vmatprep.subr.mxu0 0.0
    %1275 = vmatpush2.msra.mxu0 0.0
    %1276 = vmatprep.subr.mxu0 0.0
    %1277 = vmatpush2.msra.mxu0 0.0
    %1278 = vmatprep.subr.mxu0 0.0
    %1279 = vmatpush2.msra.mxu0 0.0
    %1280 = vmatprep.subr.mxu0 0.0
    %1281 = vmatpush2.msra.mxu0 0.0
    %1282 = vmatprep.subr.mxu0 0.0
    %1283 = vmatpush2.msra.mxu0 0.0
    %1284 = vmatprep.mubr.f32.mxu0 0.0
    %1285 = vmatmul.mubr.f32.gmra.mxu0 %v1148
    %v1286 = vpop.f32.mrf.mxu0
    %v1287 = vadd.f32 %v1216, %v1286
    %v1288 = vpop.f32.mrf.mxu0
    %v1289 = vadd.f32 %v1217, %v1288
    %1290 = vdwg.mxu0
    %1291 = vmatprep.subr.mxu0 %v1214
    %1292 = vmatpush1.msra.mxu0 %v1213
    %1293 = vmatprep.subr.mxu0 %v1210
    %1294 = vmatpush1.msra.mxu0 %v1209
    %1295 = vmatprep.subr.mxu0 %v1206
    %1296 = vmatpush1.msra.mxu0 %v1205
    %1297 = vmatprep.subr.mxu0 %v1202
    %1298 = vmatpush1.msra.mxu0 %v1201
    %1299 = vmatprep.subr.mxu0 %v1198
    %1300 = vmatpush1.msra.mxu0 %v1197
    %1301 = vmatprep.subr.mxu0 %v1194
    %1302 = vmatpush1.msra.mxu0 %v1193
    %1303 = vmatprep.subr.mxu0 %v1190
    %1304 = vmatpush1.msra.mxu0 %v1189
    %1305 = vmatprep.subr.mxu0 %v1186
    %1306 = vmatpush1.msra.mxu0 %v1185
    %1307 = vmatprep.subr.mxu0 %v1182
    %1308 = vmatpush1.msra.mxu0 %v1181
    %1309 = vmatprep.subr.mxu0 %v1178
    %1310 = vmatpush1.msra.mxu0 %v1177
    %1311 = vmatprep.subr.mxu0 %v1174
    %1312 = vmatpush1.msra.mxu0 %v1173
    %1313 = vmatprep.subr.mxu0 %v1170
    %1314 = vmatpush1.msra.mxu0 %v1169
    %1315 = vmatprep.subr.mxu0 %v1166
    %1316 = vmatpush1.msra.mxu0 %v1165
    %1317 = vmatprep.subr.mxu0 %v1162
    %1318 = vmatpush1.msra.mxu0 %v1161
    %1319 = vmatprep.subr.mxu0 %v1158
    %1320 = vmatpush1.msra.mxu0 %v1157
    %1321 = vmatprep.subr.mxu0 %v1154
    %1322 = vmatpush1.msra.mxu0 %v1153
    %1323 = vmatprep.subr.mxu0 0.0
    %1324 = vmatpush2.msra.mxu0 0.0
    %1325 = vmatprep.subr.mxu0 0.0
    %1326 = vmatpush2.msra.mxu0 0.0
    %1327 = vmatprep.subr.mxu0 0.0
    %1328 = vmatpush2.msra.mxu0 0.0
    %1329 = vmatprep.subr.mxu0 0.0
    %1330 = vmatpush2.msra.mxu0 0.0
    %1331 = vmatprep.subr.mxu0 0.0
    %1332 = vmatpush2.msra.mxu0 0.0
    %1333 = vmatprep.subr.mxu0 0.0
    %1334 = vmatpush2.msra.mxu0 0.0
    %1335 = vmatprep.subr.mxu0 0.0
    %1336 = vmatpush2.msra.mxu0 0.0
    %1337 = vmatprep.subr.mxu0 0.0
    %1338 = vmatpush2.msra.mxu0 0.0
    %1339 = vmatprep.subr.mxu0 0.0
    %1340 = vmatpush2.msra.mxu0 0.0
    %1341 = vmatprep.subr.mxu0 0.0
    %1342 = vmatpush2.msra.mxu0 0.0
    %1343 = vmatprep.subr.mxu0 0.0
    %1344 = vmatpush2.msra.mxu0 0.0
    %1345 = vmatprep.subr.mxu0 0.0
    %1346 = vmatpush2.msra.mxu0 0.0
    %1347 = vmatprep.subr.mxu0 0.0
    %1348 = vmatpush2.msra.mxu0 0.0
    %1349 = vmatprep.subr.mxu0 0.0
    %1350 = vmatpush2.msra.mxu0 0.0
    %1351 = vmatprep.subr.mxu0 0.0
    %1352 = vmatpush2.msra.mxu0 0.0
    %1353 = vmatprep.subr.mxu0 0.0
    %1354 = vmatpush2.msra.mxu0 0.0
    %1355 = vmatprep.mubr.f32.mxu0 0.0
    %1356 = vmatmul.mubr.f32.gmra.mxu0 %v1148
    %v1357 = vpop.f32.mrf.mxu0
    %v1358 = vadd.f32 %v1218, %v1357
    %v1359 = vpop.f32.mrf.mxu0
    %v1360 = vadd.f32 %v1219, %v1359
    %1361 = vdwg.mxu0
    %v1362 = vmul.f32 %v1287, 0.5
    %v1363 = vtanh.pop %v1362
    %v1364 = vadd.f32 %v1363, 1.0
    %v1365 = vmul.f32 %v1364, 0.5
    %v1366 = vmul.f32 %v1289, 0.5
    %v1367 = vtanh.pop %v1366
    %v1368 = vadd.f32 %v1367, 1.0
    %v1369 = vmul.f32 %v1368, 0.5
    %v1370 = vtanh.pop %v1358
    %v1371 = vmul.f32 %v1360, 0.5
    %v1372 = vtanh.pop %v1371
    %v1373 = vadd.f32 %v1372, 1.0
    %v1374 = vmul.f32 %v1373, 0.5
    %v1375 = vmul.f32 %v1369, %v1146
    %v1376 = vmul.f32 %v1365, %v1370
    %v1377 = vadd.f32 %v1375, %v1376
    %v1378 = vtanh.pop %v1377
    %v1379 = vmul.f32 %v1374, %v1378
    %s1380 = scalar_lea.vmem [#allocation3], 16
    %1381 = vst [vmem:[%s1380] sm:$0xff] %v1379
    %v1382 = vld [vmem:[#allocation4] sm:$0xff]
    %v1383 = vld [vmem:[#allocation4 + $0x8] sm:$0xff]
    %v1384 = vld [vmem:[#allocation4 + $0x10] sm:$0xff]
    %v1385 = vld [vmem:[#allocation4 + $0x18] sm:$0xff]
    %v1386 = vld [vmem:[#allocation4 + $0x20] sm:$0xff]
    %v1387 = vld [vmem:[#allocation4 + $0x28] sm:$0xff]
    %v1388 = vld [vmem:[#allocation4 + $0x30] sm:$0xff]
    %v1389 = vld [vmem:[#allocation4 + $0x38] sm:$0xff]
    %v1390 = vld [vmem:[#allocation4 + $0x40] sm:$0xff]
    %v1391 = vld [vmem:[#allocation4 + $0x48] sm:$0xff]
    %v1392 = vld [vmem:[#allocation4 + $0x50] sm:$0xff]
    %v1393 = vld [vmem:[#allocation4 + $0x58] sm:$0xff]
    %v1394 = vld [vmem:[#allocation4 + $0x60] sm:$0xff]
    %v1395 = vld [vmem:[#allocation4 + $0x68] sm:$0xff]
    %v1396 = vld [vmem:[#allocation4 + $0x70] sm:$0xff]
    %v1397 = vld [vmem:[#allocation4 + $0x78] sm:$0xff]
    %v1398 = vld [vmem:[#allocation4 + $0x80] sm:$0xff]
    %v1399 = vld [vmem:[#allocation4 + $0x88] sm:$0xff]
    %v1400 = vld [vmem:[#allocation4 + $0x90] sm:$0xff]
    %v1401 = vld [vmem:[#allocation4 + $0x98] sm:$0xff]
    %v1402 = vld [vmem:[#allocation4 + $0xa0] sm:$0xff]
    %v1403 = vld [vmem:[#allocation4 + $0xa8] sm:$0xff]
    %v1404 = vld [vmem:[#allocation4 + $0xb0] sm:$0xff]
    %v1405 = vld [vmem:[#allocation4 + $0xb8] sm:$0xff]
    %v1406 = vld [vmem:[#allocation4 + $0xc0] sm:$0xff]
    %v1407 = vld [vmem:[#allocation4 + $0xc8] sm:$0xff]
    %v1408 = vld [vmem:[#allocation4 + $0xd0] sm:$0xff]
    %v1409 = vld [vmem:[#allocation4 + $0xd8] sm:$0xff]
    %v1410 = vld [vmem:[#allocation4 + $0xe0] sm:$0xff]
    %v1411 = vld [vmem:[#allocation4 + $0xe8] sm:$0xff]
    %v1412 = vld [vmem:[#allocation4 + $0xf0] sm:$0xff]
    %v1413 = vld [vmem:[#allocation4 + $0xf8] sm:$0xff]
    %v1414 = vld [vmem:[#allocation4 + $0x100] sm:$0xff]
    %v1415 = vld [vmem:[#allocation4 + $0x108] sm:$0xff]
    %v1416 = vld [vmem:[#allocation4 + $0x110] sm:$0xff]
    %v1417 = vld [vmem:[#allocation4 + $0x118] sm:$0xff]
    %v1418 = vld [vmem:[#allocation4 + $0x120] sm:$0xff]
    %v1419 = vld [vmem:[#allocation4 + $0x128] sm:$0xff]
    %v1420 = vld [vmem:[#allocation4 + $0x130] sm:$0xff]
    %v1421 = vld [vmem:[#allocation4 + $0x138] sm:$0xff]
    %v1422 = vld [vmem:[#allocation4 + $0x140] sm:$0xff]
    %v1423 = vld [vmem:[#allocation4 + $0x148] sm:$0xff]
    %v1424 = vld [vmem:[#allocation4 + $0x150] sm:$0xff]
    %v1425 = vld [vmem:[#allocation4 + $0x158] sm:$0xff]
    %v1426 = vld [vmem:[#allocation4 + $0x160] sm:$0xff]
    %v1427 = vld [vmem:[#allocation4 + $0x168] sm:$0xff]
    %v1428 = vld [vmem:[#allocation4 + $0x170] sm:$0xff]
    %v1429 = vld [vmem:[#allocation4 + $0x178] sm:$0xff]
    %v1430 = vld [vmem:[#allocation4 + $0x180] sm:$0xff]
    %v1431 = vld [vmem:[#allocation4 + $0x188] sm:$0xff]
    %v1432 = vld [vmem:[#allocation4 + $0x190] sm:$0xff]
    %v1433 = vld [vmem:[#allocation4 + $0x198] sm:$0xff]
    %v1434 = vld [vmem:[#allocation4 + $0x1a0] sm:$0xff]
    %v1435 = vld [vmem:[#allocation4 + $0x1a8] sm:$0xff]
    %v1436 = vld [vmem:[#allocation4 + $0x1b0] sm:$0xff]
    %v1437 = vld [vmem:[#allocation4 + $0x1b8] sm:$0xff]
    %v1438 = vld [vmem:[#allocation4 + $0x1c0] sm:$0xff]
    %v1439 = vld [vmem:[#allocation4 + $0x1c8] sm:$0xff]
    %v1440 = vld [vmem:[#allocation4 + $0x1d0] sm:$0xff]
    %v1441 = vld [vmem:[#allocation4 + $0x1d8] sm:$0xff]
    %v1442 = vld [vmem:[#allocation4 + $0x1e0] sm:$0xff]
    %v1443 = vld [vmem:[#allocation4 + $0x1e8] sm:$0xff]
    %v1444 = vld [vmem:[#allocation4 + $0x1f0] sm:$0xff]
    %v1445 = vld [vmem:[#allocation4 + $0x1f8] sm:$0xff]
    %s1446 = scalar_lea.vmem [#allocation2], 96
    %v1447 = vld [vmem:[%s1446] sm:$0xff]
    %v1448 = vld [vmem:[%s1446 + $0x8] sm:$0xff]
    %v1449 = vld [vmem:[%s1446 + $0x10] sm:$0xff]
    %v1450 = vld [vmem:[%s1446 + $0x18] sm:$0xff]
    %1451 = vmatprep.subr.mxu0 %v1443
    %1452 = vmatpush1.msra.mxu0 %v1442
    %1453 = vmatprep.subr.mxu0 %v1439
    %1454 = vmatpush1.msra.mxu0 %v1438
    %1455 = vmatprep.subr.mxu0 %v1435
    %1456 = vmatpush1.msra.mxu0 %v1434
    %1457 = vmatprep.subr.mxu0 %v1431
    %1458 = vmatpush1.msra.mxu0 %v1430
    %1459 = vmatprep.subr.mxu0 %v1427
    %1460 = vmatpush1.msra.mxu0 %v1426
    %1461 = vmatprep.subr.mxu0 %v1423
    %1462 = vmatpush1.msra.mxu0 %v1422
    %1463 = vmatprep.subr.mxu0 %v1419
    %1464 = vmatpush1.msra.mxu0 %v1418
    %1465 = vmatprep.subr.mxu0 %v1415
    %1466 = vmatpush1.msra.mxu0 %v1414
    %1467 = vmatprep.subr.mxu0 %v1411
    %1468 = vmatpush1.msra.mxu0 %v1410
    %1469 = vmatprep.subr.mxu0 %v1407
    %1470 = vmatpush1.msra.mxu0 %v1406
    %1471 = vmatprep.subr.mxu0 %v1403
    %1472 = vmatpush1.msra.mxu0 %v1402
    %1473 = vmatprep.subr.mxu0 %v1399
    %1474 = vmatpush1.msra.mxu0 %v1398
    %1475 = vmatprep.subr.mxu0 %v1395
    %1476 = vmatpush1.msra.mxu0 %v1394
    %1477 = vmatprep.subr.mxu0 %v1391
    %1478 = vmatpush1.msra.mxu0 %v1390
    %1479 = vmatprep.subr.mxu0 %v1387
    %1480 = vmatpush1.msra.mxu0 %v1386
    %1481 = vmatprep.subr.mxu0 %v1383
    %1482 = vmatpush1.msra.mxu0 %v1382
    %1483 = vmatprep.subr.mxu0 0.0
    %1484 = vmatpush2.msra.mxu0 0.0
    %1485 = vmatprep.subr.mxu0 0.0
    %1486 = vmatpush2.msra.mxu0 0.0
    %1487 = vmatprep.subr.mxu0 0.0
    %1488 = vmatpush2.msra.mxu0 0.0
    %1489 = vmatprep.subr.mxu0 0.0
    %1490 = vmatpush2.msra.mxu0 0.0
    %1491 = vmatprep.subr.mxu0 0.0
    %1492 = vmatpush2.msra.mxu0 0.0
    %1493 = vmatprep.subr.mxu0 0.0
    %1494 = vmatpush2.msra.mxu0 0.0
    %1495 = vmatprep.subr.mxu0 0.0
    %1496 = vmatpush2.msra.mxu0 0.0
    %1497 = vmatprep.subr.mxu0 0.0
    %1498 = vmatpush2.msra.mxu0 0.0
    %1499 = vmatprep.subr.mxu0 0.0
    %1500 = vmatpush2.msra.mxu0 0.0
    %1501 = vmatprep.subr.mxu0 0.0
    %1502 = vmatpush2.msra.mxu0 0.0
    %1503 = vmatprep.subr.mxu0 0.0
    %1504 = vmatpush2.msra.mxu0 0.0
    %1505 = vmatprep.subr.mxu0 0.0
    %1506 = vmatpush2.msra.mxu0 0.0
    %1507 = vmatprep.subr.mxu0 0.0
    %1508 = vmatpush2.msra.mxu0 0.0
    %1509 = vmatprep.subr.mxu0 0.0
    %1510 = vmatpush2.msra.mxu0 0.0
    %1511 = vmatprep.subr.mxu0 0.0
    %1512 = vmatpush2.msra.mxu0 0.0
    %1513 = vmatprep.subr.mxu0 0.0
    %1514 = vmatpush2.msra.mxu0 0.0
    %1515 = vmatprep.mubr.f32.mxu0 0.0
    %1516 = vmatmul.mubr.f32.gmra.mxu0 %v1379
    %v1517 = vpop.f32.mrf.mxu0
    %v1518 = vadd.f32 %v1447, %v1517
    %v1519 = vpop.f32.mrf.mxu0
    %v1520 = vadd.f32 %v1448, %v1519
    %1521 = vdwg.mxu0
    %1522 = vmatprep.subr.mxu0 %v1445
    %1523 = vmatpush1.msra.mxu0 %v1444
    %1524 = vmatprep.subr.mxu0 %v1441
    %1525 = vmatpush1.msra.mxu0 %v1440
    %1526 = vmatprep.subr.mxu0 %v1437
    %1527 = vmatpush1.msra.mxu0 %v1436
    %1528 = vmatprep.subr.mxu0 %v1433
    %1529 = vmatpush1.msra.mxu0 %v1432
    %1530 = vmatprep.subr.mxu0 %v1429
    %1531 = vmatpush1.msra.mxu0 %v1428
    %1532 = vmatprep.subr.mxu0 %v1425
    %1533 = vmatpush1.msra.mxu0 %v1424
    %1534 = vmatprep.subr.mxu0 %v1421
    %1535 = vmatpush1.msra.mxu0 %v1420
    %1536 = vmatprep.subr.mxu0 %v1417
    %1537 = vmatpush1.msra.mxu0 %v1416
    %1538 = vmatprep.subr.mxu0 %v1413
    %1539 = vmatpush1.msra.mxu0 %v1412
    %1540 = vmatprep.subr.mxu0 %v1409
    %1541 = vmatpush1.msra.mxu0 %v1408
    %1542 = vmatprep.subr.mxu0 %v1405
    %1543 = vmatpush1.msra.mxu0 %v1404
    %1544 = vmatprep.subr.mxu0 %v1401
    %1545 = vmatpush1.msra.mxu0 %v1400
    %1546 = vmatprep.subr.mxu0 %v1397
    %1547 = vmatpush1.msra.mxu0 %v1396
    %1548 = vmatprep.subr.mxu0 %v1393
    %1549 = vmatpush1.msra.mxu0 %v1392
    %1550 = vmatprep.subr.mxu0 %v1389
    %1551 = vmatpush1.msra.mxu0 %v1388
    %1552 = vmatprep.subr.mxu0 %v1385
    %1553 = vmatpush1.msra.mxu0 %v1384
    %1554 = vmatprep.subr.mxu0 0.0
    %1555 = vmatpush2.msra.mxu0 0.0
    %1556 = vmatprep.subr.mxu0 0.0
    %1557 = vmatpush2.msra.mxu0 0.0
    %1558 = vmatprep.subr.mxu0 0.0
    %1559 = vmatpush2.msra.mxu0 0.0
    %1560 = vmatprep.subr.mxu0 0.0
    %1561 = vmatpush2.msra.mxu0 0.0
    %1562 = vmatprep.subr.mxu0 0.0
    %1563 = vmatpush2.msra.mxu0 0.0
    %1564 = vmatprep.subr.mxu0 0.0
    %1565 = vmatpush2.msra.mxu0 0.0
    %1566 = vmatprep.subr.mxu0 0.0
    %1567 = vmatpush2.msra.mxu0 0.0
    %1568 = vmatprep.subr.mxu0 0.0
    %1569 = vmatpush2.msra.mxu0 0.0
    %1570 = vmatprep.subr.mxu0 0.0
    %1571 = vmatpush2.msra.mxu0 0.0
    %1572 = vmatprep.subr.mxu0 0.0
    %1573 = vmatpush2.msra.mxu0 0.0
    %1574 = vmatprep.subr.mxu0 0.0
    %1575 = vmatpush2.msra.mxu0 0.0
    %1576 = vmatprep.subr.mxu0 0.0
    %1577 = vmatpush2.msra.mxu0 0.0
    %1578 = vmatprep.subr.mxu0 0.0
    %1579 = vmatpush2.msra.mxu0 0.0
    %1580 = vmatprep.subr.mxu0 0.0
    %1581 = vmatpush2.msra.mxu0 0.0
    %1582 = vmatprep.subr.mxu0 0.0
    %1583 = vmatpush2.msra.mxu0 0.0
    %1584 = vmatprep.subr.mxu0 0.0
    %1585 = vmatpush2.msra.mxu0 0.0
    %1586 = vmatprep.mubr.f32.mxu0 0.0
    %1587 = vmatmul.mubr.f32.gmra.mxu0 %v1379
    %v1588 = vpop.f32.mrf.mxu0
    %v1589 = vadd.f32 %v1449, %v1588
    %v1590 = vpop.f32.mrf.mxu0
    %v1591 = vadd.f32 %v1450, %v1590
    %1592 = vdwg.mxu0
    %v1593 = vmul.f32 %v1518, 0.5
    %v1594 = vtanh.pop %v1593
    %v1595 = vadd.f32 %v1594, 1.0
    %v1596 = vmul.f32 %v1595, 0.5
    %v1597 = vmul.f32 %v1520, 0.5
    %v1598 = vtanh.pop %v1597
    %v1599 = vadd.f32 %v1598, 1.0
    %v1600 = vmul.f32 %v1599, 0.5
    %v1601 = vtanh.pop %v1589
    %v1602 = vmul.f32 %v1591, 0.5
    %v1603 = vtanh.pop %v1602
    %v1604 = vadd.f32 %v1603, 1.0
    %v1605 = vmul.f32 %v1604, 0.5
    %v1606 = vmul.f32 %v1600, %v1377
    %v1607 = vmul.f32 %v1596, %v1601
    %v1608 = vadd.f32 %v1606, %v1607
    %v1609 = vtanh.pop %v1608
    %v1610 = vmul.f32 %v1605, %v1609
    %s1611 = scalar_lea.vmem [#allocation3], 24
    %1612 = vst [vmem:[%s1611] sm:$0xff] %v1610
    %v1613 = vld [vmem:[#allocation4] sm:$0xff]
    %v1614 = vld [vmem:[#allocation4 + $0x8] sm:$0xff]
    %v1615 = vld [vmem:[#allocation4 + $0x10] sm:$0xff]
    %v1616 = vld [vmem:[#allocation4 + $0x18] sm:$0xff]
    %v1617 = vld [vmem:[#allocation4 + $0x20] sm:$0xff]
    %v1618 = vld [vmem:[#allocation4 + $0x28] sm:$0xff]
    %v1619 = vld [vmem:[#allocation4 + $0x30] sm:$0xff]
    %v1620 = vld [vmem:[#allocation4 + $0x38] sm:$0xff]
    %v1621 = vld [vmem:[#allocation4 + $0x40] sm:$0xff]
    %v1622 = vld [vmem:[#allocation4 + $0x48] sm:$0xff]
    %v1623 = vld [vmem:[#allocation4 + $0x50] sm:$0xff]
    %v1624 = vld [vmem:[#allocation4 + $0x58] sm:$0xff]
    %v1625 = vld [vmem:[#allocation4 + $0x60] sm:$0xff]
    %v1626 = vld [vmem:[#allocation4 + $0x68] sm:$0xff]
    %v1627 = vld [vmem:[#allocation4 + $0x70] sm:$0xff]
    %v1628 = vld [vmem:[#allocation4 + $0x78] sm:$0xff]
    %v1629 = vld [vmem:[#allocation4 + $0x80] sm:$0xff]
    %v1630 = vld [vmem:[#allocation4 + $0x88] sm:$0xff]
    %v1631 = vld [vmem:[#allocation4 + $0x90] sm:$0xff]
    %v1632 = vld [vmem:[#allocation4 + $0x98] sm:$0xff]
    %v1633 = vld [vmem:[#allocation4 + $0xa0] sm:$0xff]
    %v1634 = vld [vmem:[#allocation4 + $0xa8] sm:$0xff]
    %v1635 = vld [vmem:[#allocation4 + $0xb0] sm:$0xff]
    %v1636 = vld [vmem:[#allocation4 + $0xb8] sm:$0xff]
    %v1637 = vld [vmem:[#allocation4 + $0xc0] sm:$0xff]
    %v1638 = vld [vmem:[#allocation4 + $0xc8] sm:$0xff]
    %v1639 = vld [vmem:[#allocation4 + $0xd0] sm:$0xff]
    %v1640 = vld [vmem:[#allocation4 + $0xd8] sm:$0xff]
    %v1641 = vld [vmem:[#allocation4 + $0xe0] sm:$0xff]
    %v1642 = vld [vmem:[#allocation4 + $0xe8] sm:$0xff]
    %v1643 = vld [vmem:[#allocation4 + $0xf0] sm:$0xff]
    %v1644 = vld [vmem:[#allocation4 + $0xf8] sm:$0xff]
    %v1645 = vld [vmem:[#allocation4 + $0x100] sm:$0xff]
    %v1646 = vld [vmem:[#allocation4 + $0x108] sm:$0xff]
    %v1647 = vld [vmem:[#allocation4 + $0x110] sm:$0xff]
    %v1648 = vld [vmem:[#allocation4 + $0x118] sm:$0xff]
    %v1649 = vld [vmem:[#allocation4 + $0x120] sm:$0xff]
    %v1650 = vld [vmem:[#allocation4 + $0x128] sm:$0xff]
    %v1651 = vld [vmem:[#allocation4 + $0x130] sm:$0xff]
    %v1652 = vld [vmem:[#allocation4 + $0x138] sm:$0xff]
    %v1653 = vld [vmem:[#allocation4 + $0x140] sm:$0xff]
    %v1654 = vld [vmem:[#allocation4 + $0x148] sm:$0xff]
    %v1655 = vld [vmem:[#allocation4 + $0x150] sm:$0xff]
    %v1656 = vld [vmem:[#allocation4 + $0x158] sm:$0xff]
    %v1657 = vld [vmem:[#allocation4 + $0x160] sm:$0xff]
    %v1658 = vld [vmem:[#allocation4 + $0x168] sm:$0xff]
    %v1659 = vld [vmem:[#allocation4 + $0x170] sm:$0xff]
    %v1660 = vld [vmem:[#allocation4 + $0x178] sm:$0xff]
    %v1661 = vld [vmem:[#allocation4 + $0x180] sm:$0xff]
    %v1662 = vld [vmem:[#allocation4 + $0x188] sm:$0xff]
    %v1663 = vld [vmem:[#allocation4 + $0x190] sm:$0xff]
    %v1664 = vld [vmem:[#allocation4 + $0x198] sm:$0xff]
    %v1665 = vld [vmem:[#allocation4 + $0x1a0] sm:$0xff]
    %v1666 = vld [vmem:[#allocation4 + $0x1a8] sm:$0xff]
    %v1667 = vld [vmem:[#allocation4 + $0x1b0] sm:$0xff]
    %v1668 = vld [vmem:[#allocation4 + $0x1b8] sm:$0xff]
    %v1669 = vld [vmem:[#allocation4 + $0x1c0] sm:$0xff]
    %v1670 = vld [vmem:[#allocation4 + $0x1c8] sm:$0xff]
    %v1671 = vld [vmem:[#allocation4 + $0x1d0] sm:$0xff]
    %v1672 = vld [vmem:[#allocation4 + $0x1d8] sm:$0xff]
    %v1673 = vld [vmem:[#allocation4 + $0x1e0] sm:$0xff]
    %v1674 = vld [vmem:[#allocation4 + $0x1e8] sm:$0xff]
    %v1675 = vld [vmem:[#allocation4 + $0x1f0] sm:$0xff]
    %v1676 = vld [vmem:[#allocation4 + $0x1f8] sm:$0xff]
    %s1677 = scalar_lea.vmem [#allocation2], 128
    %v1678 = vld [vmem:[%s1677] sm:$0xff]
    %v1679 = vld [vmem:[%s1677 + $0x8] sm:$0xff]
    %v1680 = vld [vmem:[%s1677 + $0x10] sm:$0xff]
    %v1681 = vld [vmem:[%s1677 + $0x18] sm:$0xff]
    %1682 = vmatprep.subr.mxu0 %v1674
    %1683 = vmatpush1.msra.mxu0 %v1673
    %1684 = vmatprep.subr.mxu0 %v1670
    %1685 = vmatpush1.msra.mxu0 %v1669
    %1686 = vmatprep.subr.mxu0 %v1666
    %1687 = vmatpush1.msra.mxu0 %v1665
    %1688 = vmatprep.subr.mxu0 %v1662
    %1689 = vmatpush1.msra.mxu0 %v1661
    %1690 = vmatprep.subr.mxu0 %v1658
    %1691 = vmatpush1.msra.mxu0 %v1657
    %1692 = vmatprep.subr.mxu0 %v1654
    %1693 = vmatpush1.msra.mxu0 %v1653
    %1694 = vmatprep.subr.mxu0 %v1650
    %1695 = vmatpush1.msra.mxu0 %v1649
    %1696 = vmatprep.subr.mxu0 %v1646
    %1697 = vmatpush1.msra.mxu0 %v1645
    %1698 = vmatprep.subr.mxu0 %v1642
    %1699 = vmatpush1.msra.mxu0 %v1641
    %1700 = vmatprep.subr.mxu0 %v1638
    %1701 = vmatpush1.msra.mxu0 %v1637
    %1702 = vmatprep.subr.mxu0 %v1634
    %1703 = vmatpush1.msra.mxu0 %v1633
    %1704 = vmatprep.subr.mxu0 %v1630
    %1705 = vmatpush1.msra.mxu0 %v1629
    %1706 = vmatprep.subr.mxu0 %v1626
    %1707 = vmatpush1.msra.mxu0 %v1625
    %1708 = vmatprep.subr.mxu0 %v1622
    %1709 = vmatpush1.msra.mxu0 %v1621
    %1710 = vmatprep.subr.mxu0 %v1618
    %1711 = vmatpush1.msra.mxu0 %v1617
    %1712 = vmatprep.subr.mxu0 %v1614
    %1713 = vmatpush1.msra.mxu0 %v1613
    %1714 = vmatprep.subr.mxu0 0.0
    %1715 = vmatpush2.msra.mxu0 0.0
    %1716 = vmatprep.subr.mxu0 0.0
    %1717 = vmatpush2.msra.mxu0 0.0
    %1718 = vmatprep.subr.mxu0 0.0
    %1719 = vmatpush2.msra.mxu0 0.0
    %1720 = vmatprep.subr.mxu0 0.0
    %1721 = vmatpush2.msra.mxu0 0.0
    %1722 = vmatprep.subr.mxu0 0.0
    %1723 = vmatpush2.msra.mxu0 0.0
    %1724 = vmatprep.subr.mxu0 0.0
    %1725 = vmatpush2.msra.mxu0 0.0
    %1726 = vmatprep.subr.mxu0 0.0
    %1727 = vmatpush2.msra.mxu0 0.0
    %1728 = vmatprep.subr.mxu0 0.0
    %1729 = vmatpush2.msra.mxu0 0.0
    %1730 = vmatprep.subr.mxu0 0.0
    %1731 = vmatpush2.msra.mxu0 0.0
    %1732 = vmatprep.subr.mxu0 0.0
    %1733 = vmatpush2.msra.mxu0 0.0
    %1734 = vmatprep.subr.mxu0 0.0
    %1735 = vmatpush2.msra.mxu0 0.0
    %1736 = vmatprep.subr.mxu0 0.0
    %1737 = vmatpush2.msra.mxu0 0.0
    %1738 = vmatprep.subr.mxu0 0.0
    %1739 = vmatpush2.msra.mxu0 0.0
    %1740 = vmatprep.subr.mxu0 0.0
    %1741 = vmatpush2.msra.mxu0 0.0
    %1742 = vmatprep.subr.mxu0 0.0
    %1743 = vmatpush2.msra.mxu0 0.0
    %1744 = vmatprep.subr.mxu0 0.0
    %1745 = vmatpush2.msra.mxu0 0.0
    %1746 = vmatprep.mubr.f32.mxu0 0.0
    %1747 = vmatmul.mubr.f32.gmra.mxu0 %v1610
    %v1748 = vpop.f32.mrf.mxu0
    %v1749 = vadd.f32 %v1678, %v1748
    %v1750 = vpop.f32.mrf.mxu0
    %v1751 = vadd.f32 %v1679, %v1750
    %1752 = vdwg.mxu0
    %1753 = vmatprep.subr.mxu0 %v1676
    %1754 = vmatpush1.msra.mxu0 %v1675
    %1755 = vmatprep.subr.mxu0 %v1672
    %1756 = vmatpush1.msra.mxu0 %v1671
    %1757 = vmatprep.subr.mxu0 %v1668
    %1758 = vmatpush1.msra.mxu0 %v1667
    %1759 = vmatprep.subr.mxu0 %v1664
    %1760 = vmatpush1.msra.mxu0 %v1663
    %1761 = vmatprep.subr.mxu0 %v1660
    %1762 = vmatpush1.msra.mxu0 %v1659
    %1763 = vmatprep.subr.mxu0 %v1656
    %1764 = vmatpush1.msra.mxu0 %v1655
    %1765 = vmatprep.subr.mxu0 %v1652
    %1766 = vmatpush1.msra.mxu0 %v1651
    %1767 = vmatprep.subr.mxu0 %v1648
    %1768 = vmatpush1.msra.mxu0 %v1647
    %1769 = vmatprep.subr.mxu0 %v1644
    %1770 = vmatpush1.msra.mxu0 %v1643
    %1771 = vmatprep.subr.mxu0 %v1640
    %1772 = vmatpush1.msra.mxu0 %v1639
    %1773 = vmatprep.subr.mxu0 %v1636
    %1774 = vmatpush1.msra.mxu0 %v1635
    %1775 = vmatprep.subr.mxu0 %v1632
    %1776 = vmatpush1.msra.mxu0 %v1631
    %1777 = vmatprep.subr.mxu0 %v1628
    %1778 = vmatpush1.msra.mxu0 %v1627
    %1779 = vmatprep.subr.mxu0 %v1624
    %1780 = vmatpush1.msra.mxu0 %v1623
    %1781 = vmatprep.subr.mxu0 %v1620
    %1782 = vmatpush1.msra.mxu0 %v1619
    %1783 = vmatprep.subr.mxu0 %v1616
    %1784 = vmatpush1.msra.mxu0 %v1615
    %1785 = vmatprep.subr.mxu0 0.0
    %1786 = vmatpush2.msra.mxu0 0.0
    %1787 = vmatprep.subr.mxu0 0.0
    %1788 = vmatpush2.msra.mxu0 0.0
    %1789 = vmatprep.subr.mxu0 0.0
    %1790 = vmatpush2.msra.mxu0 0.0
    %1791 = vmatprep.subr.mxu0 0.0
    %1792 = vmatpush2.msra.mxu0 0.0
    %1793 = vmatprep.subr.mxu0 0.0
    %1794 = vmatpush2.msra.mxu0 0.0
    %1795 = vmatprep.subr.mxu0 0.0
    %1796 = vmatpush2.msra.mxu0 0.0
    %1797 = vmatprep.subr.mxu0 0.0
    %1798 = vmatpush2.msra.mxu0 0.0
    %1799 = vmatprep.subr.mxu0 0.0
    %1800 = vmatpush2.msra.mxu0 0.0
    %1801 = vmatprep.subr.mxu0 0.0
    %1802 = vmatpush2.msra.mxu0 0.0
    %1803 = vmatprep.subr.mxu0 0.0
    %1804 = vmatpush2.msra.mxu0 0.0
    %1805 = vmatprep.subr.mxu0 0.0
    %1806 = vmatpush2.msra.mxu0 0.0
    %1807 = vmatprep.subr.mxu0 0.0
    %1808 = vmatpush2.msra.mxu0 0.0
    %1809 = vmatprep.subr.mxu0 0.0
    %1810 = vmatpush2.msra.mxu0 0.0
    %1811 = vmatprep.subr.mxu0 0.0
    %1812 = vmatpush2.msra.mxu0 0.0
    %1813 = vmatprep.subr.mxu0 0.0
    %1814 = vmatpush2.msra.mxu0 0.0
    %1815 = vmatprep.subr.mxu0 0.0
    %1816 = vmatpush2.msra.mxu0 0.0
    %1817 = vmatprep.mubr.f32.mxu0 0.0
    %1818 = vmatmul.mubr.f32.gmra.mxu0 %v1610
    %v1819 = vpop.f32.mrf.mxu0
    %v1820 = vadd.f32 %v1680, %v1819
    %v1821 = vpop.f32.mrf.mxu0
    %v1822 = vadd.f32 %v1681, %v1821
    %1823 = vdwg.mxu0
    %v1824 = vmul.f32 %v1749, 0.5
    %v1825 = vtanh.pop %v1824
    %v1826 = vadd.f32 %v1825, 1.0
    %v1827 = vmul.f32 %v1826, 0.5
    %v1828 = vmul.f32 %v1751, 0.5
    %v1829 = vtanh.pop %v1828
    %v1830 = vadd.f32 %v1829, 1.0
    %v1831 = vmul.f32 %v1830, 0.5
    %v1832 = vtanh.pop %v1820
    %v1833 = vmul.f32 %v1822, 0.5
    %v1834 = vtanh.pop %v1833
    %v1835 = vadd.f32 %v1834, 1.0
    %v1836 = vmul.f32 %v1835, 0.5
    %v1837 = vmul.f32 %v1831, %v1608
    %v1838 = vmul.f32 %v1827, %v1832
    %v1839 = vadd.f32 %v1837, %v1838
    %v1840 = vtanh.pop %v1839
    %v1841 = vmul.f32 %v1836, %v1840
    %s1842 = scalar_lea.vmem [#allocation3], 32
    %1843 = vst [vmem:[%s1842] sm:$0xff] %v1841
    %v1844 = vld [vmem:[#allocation4] sm:$0xff]
    %v1845 = vld [vmem:[#allocation4 + $0x8] sm:$0xff]
    %v1846 = vld [vmem:[#allocation4 + $0x10] sm:$0xff]
    %v1847 = vld [vmem:[#allocation4 + $0x18] sm:$0xff]
    %v1848 = vld [vmem:[#allocation4 + $0x20] sm:$0xff]
    %v1849 = vld [vmem:[#allocation4 + $0x28] sm:$0xff]
    %v1850 = vld [vmem:[#allocation4 + $0x30] sm:$0xff]
    %v1851 = vld [vmem:[#allocation4 + $0x38] sm:$0xff]
    %v1852 = vld [vmem:[#allocation4 + $0x40] sm:$0xff]
    %v1853 = vld [vmem:[#allocation4 + $0x48] sm:$0xff]
    %v1854 = vld [vmem:[#allocation4 + $0x50] sm:$0xff]
    %v1855 = vld [vmem:[#allocation4 + $0x58] sm:$0xff]
    %v1856 = vld [vmem:[#allocation4 + $0x60] sm:$0xff]
    %v1857 = vld [vmem:[#allocation4 + $0x68] sm:$0xff]
    %v1858 = vld [vmem:[#allocation4 + $0x70] sm:$0xff]
    %v1859 = vld [vmem:[#allocation4 + $0x78] sm:$0xff]
    %v1860 = vld [vmem:[#allocation4 + $0x80] sm:$0xff]
    %v1861 = vld [vmem:[#allocation4 + $0x88] sm:$0xff]
    %v1862 = vld [vmem:[#allocation4 + $0x90] sm:$0xff]
    %v1863 = vld [vmem:[#allocation4 + $0x98] sm:$0xff]
    %v1864 = vld [vmem:[#allocation4 + $0xa0] sm:$0xff]
    %v1865 = vld [vmem:[#allocation4 + $0xa8] sm:$0xff]
    %v1866 = vld [vmem:[#allocation4 + $0xb0] sm:$0xff]
    %v1867 = vld [vmem:[#allocation4 + $0xb8] sm:$0xff]
    %v1868 = vld [vmem:[#allocation4 + $0xc0] sm:$0xff]
    %v1869 = vld [vmem:[#allocation4 + $0xc8] sm:$0xff]
    %v1870 = vld [vmem:[#allocation4 + $0xd0] sm:$0xff]
    %v1871 = vld [vmem:[#allocation4 + $0xd8] sm:$0xff]
    %v1872 = vld [vmem:[#allocation4 + $0xe0] sm:$0xff]
    %v1873 = vld [vmem:[#allocation4 + $0xe8] sm:$0xff]
    %v1874 = vld [vmem:[#allocation4 + $0xf0] sm:$0xff]
    %v1875 = vld [vmem:[#allocation4 + $0xf8] sm:$0xff]
    %v1876 = vld [vmem:[#allocation4 + $0x100] sm:$0xff]
    %v1877 = vld [vmem:[#allocation4 + $0x108] sm:$0xff]
    %v1878 = vld [vmem:[#allocation4 + $0x110] sm:$0xff]
    %v1879 = vld [vmem:[#allocation4 + $0x118] sm:$0xff]
    %v1880 = vld [vmem:[#allocation4 + $0x120] sm:$0xff]
    %v1881 = vld [vmem:[#allocation4 + $0x128] sm:$0xff]
    %v1882 = vld [vmem:[#allocation4 + $0x130] sm:$0xff]
    %v1883 = vld [vmem:[#allocation4 + $0x138] sm:$0xff]
    %v1884 = vld [vmem:[#allocation4 + $0x140] sm:$0xff]
    %v1885 = vld [vmem:[#allocation4 + $0x148] sm:$0xff]
    %v1886 = vld [vmem:[#allocation4 + $0x150] sm:$0xff]
    %v1887 = vld [vmem:[#allocation4 + $0x158] sm:$0xff]
    %v1888 = vld [vmem:[#allocation4 + $0x160] sm:$0xff]
    %v1889 = vld [vmem:[#allocation4 + $0x168] sm:$0xff]
    %v1890 = vld [vmem:[#allocation4 + $0x170] sm:$0xff]
    %v1891 = vld [vmem:[#allocation4 + $0x178] sm:$0xff]
    %v1892 = vld [vmem:[#allocation4 + $0x180] sm:$0xff]
    %v1893 = vld [vmem:[#allocation4 + $0x188] sm:$0xff]
    %v1894 = vld [vmem:[#allocation4 + $0x190] sm:$0xff]
    %v1895 = vld [vmem:[#allocation4 + $0x198] sm:$0xff]
    %v1896 = vld [vmem:[#allocation4 + $0x1a0] sm:$0xff]
    %v1897 = vld [vmem:[#allocation4 + $0x1a8] sm:$0xff]
    %v1898 = vld [vmem:[#allocation4 + $0x1b0] sm:$0xff]
    %v1899 = vld [vmem:[#allocation4 + $0x1b8] sm:$0xff]
    %v1900 = vld [vmem:[#allocation4 + $0x1c0] sm:$0xff]
    %v1901 = vld [vmem:[#allocation4 + $0x1c8] sm:$0xff]
    %v1902 = vld [vmem:[#allocation4 + $0x1d0] sm:$0xff]
    %v1903 = vld [vmem:[#allocation4 + $0x1d8] sm:$0xff]
    %v1904 = vld [vmem:[#allocation4 + $0x1e0] sm:$0xff]
    %v1905 = vld [vmem:[#allocation4 + $0x1e8] sm:$0xff]
    %v1906 = vld [vmem:[#allocation4 + $0x1f0] sm:$0xff]
    %v1907 = vld [vmem:[#allocation4 + $0x1f8] sm:$0xff]
    %s1908 = scalar_lea.vmem [#allocation2], 160
    %v1909 = vld [vmem:[%s1908] sm:$0xff]
    %v1910 = vld [vmem:[%s1908 + $0x8] sm:$0xff]
    %v1911 = vld [vmem:[%s1908 + $0x10] sm:$0xff]
    %v1912 = vld [vmem:[%s1908 + $0x18] sm:$0xff]
    %1913 = vmatprep.subr.mxu0 %v1905
    %1914 = vmatpush1.msra.mxu0 %v1904
    %1915 = vmatprep.subr.mxu0 %v1901
    %1916 = vmatpush1.msra.mxu0 %v1900
    %1917 = vmatprep.subr.mxu0 %v1897
    %1918 = vmatpush1.msra.mxu0 %v1896
    %1919 = vmatprep.subr.mxu0 %v1893
    %1920 = vmatpush1.msra.mxu0 %v1892
    %1921 = vmatprep.subr.mxu0 %v1889
    %1922 = vmatpush1.msra.mxu0 %v1888
    %1923 = vmatprep.subr.mxu0 %v1885
    %1924 = vmatpush1.msra.mxu0 %v1884
    %1925 = vmatprep.subr.mxu0 %v1881
    %1926 = vmatpush1.msra.mxu0 %v1880
    %1927 = vmatprep.subr.mxu0 %v1877
    %1928 = vmatpush1.msra.mxu0 %v1876
    %1929 = vmatprep.subr.mxu0 %v1873
    %1930 = vmatpush1.msra.mxu0 %v1872
    %1931 = vmatprep.subr.mxu0 %v1869
    %1932 = vmatpush1.msra.mxu0 %v1868
    %1933 = vmatprep.subr.mxu0 %v1865
    %1934 = vmatpush1.msra.mxu0 %v1864
    %1935 = vmatprep.subr.mxu0 %v1861
    %1936 = vmatpush1.msra.mxu0 %v1860
    %1937 = vmatprep.subr.mxu0 %v1857
    %1938 = vmatpush1.msra.mxu0 %v1856
    %1939 = vmatprep.subr.mxu0 %v1853
    %1940 = vmatpush1.msra.mxu0 %v1852
    %1941 = vmatprep.subr.mxu0 %v1849
    %1942 = vmatpush1.msra.mxu0 %v1848
    %1943 = vmatprep.subr.mxu0 %v1845
    %1944 = vmatpush1.msra.mxu0 %v1844
    %1945 = vmatprep.subr.mxu0 0.0
    %1946 = vmatpush2.msra.mxu0 0.0
    %1947 = vmatprep.subr.mxu0 0.0
    %1948 = vmatpush2.msra.mxu0 0.0
    %1949 = vmatprep.subr.mxu0 0.0
    %1950 = vmatpush2.msra.mxu0 0.0
    %1951 = vmatprep.subr.mxu0 0.0
    %1952 = vmatpush2.msra.mxu0 0.0
    %1953 = vmatprep.subr.mxu0 0.0
    %1954 = vmatpush2.msra.mxu0 0.0
    %1955 = vmatprep.subr.mxu0 0.0
    %1956 = vmatpush2.msra.mxu0 0.0
    %1957 = vmatprep.subr.mxu0 0.0
    %1958 = vmatpush2.msra.mxu0 0.0
    %1959 = vmatprep.subr.mxu0 0.0
    %1960 = vmatpush2.msra.mxu0 0.0
    %1961 = vmatprep.subr.mxu0 0.0
    %1962 = vmatpush2.msra.mxu0 0.0
    %1963 = vmatprep.subr.mxu0 0.0
    %1964 = vmatpush2.msra.mxu0 0.0
    %1965 = vmatprep.subr.mxu0 0.0
    %1966 = vmatpush2.msra.mxu0 0.0
    %1967 = vmatprep.subr.mxu0 0.0
    %1968 = vmatpush2.msra.mxu0 0.0
    %1969 = vmatprep.subr.mxu0 0.0
    %1970 = vmatpush2.msra.mxu0 0.0
    %1971 = vmatprep.subr.mxu0 0.0
    %1972 = vmatpush2.msra.mxu0 0.0
    %1973 = vmatprep.subr.mxu0 0.0
    %1974 = vmatpush2.msra.mxu0 0.0
    %1975 = vmatprep.subr.mxu0 0.0
    %1976 = vmatpush2.msra.mxu0 0.0
    %1977 = vmatprep.mubr.f32.mxu0 0.0
    %1978 = vmatmul.mubr.f32.gmra.mxu0 %v1841
    %v1979 = vpop.f32.mrf.mxu0
    %v1980 = vadd.f32 %v1909, %v1979
    %v1981 = vpop.f32.mrf.mxu0
    %v1982 = vadd.f32 %v1910, %v1981
    %1983 = vdwg.mxu0
    %1984 = vmatprep.subr.mxu0 %v1907
    %1985 = vmatpush1.msra.mxu0 %v1906
    %1986 = vmatprep.subr.mxu0 %v1903
    %1987 = vmatpush1.msra.mxu0 %v1902
    %1988 = vmatprep.subr.mxu0 %v1899
    %1989 = vmatpush1.msra.mxu0 %v1898
    %1990 = vmatprep.subr.mxu0 %v1895
    %1991 = vmatpush1.msra.mxu0 %v1894
    %1992 = vmatprep.subr.mxu0 %v1891
    %1993 = vmatpush1.msra.mxu0 %v1890
    %1994 = vmatprep.subr.mxu0 %v1887
    %1995 = vmatpush1.msra.mxu0 %v1886
    %1996 = vmatprep.subr.mxu0 %v1883
    %1997 = vmatpush1.msra.mxu0 %v1882
    %1998 = vmatprep.subr.mxu0 %v1879
    %1999 = vmatpush1.msra.mxu0 %v1878
    %2000 = vmatprep.subr.mxu0 %v1875
    %2001 = vmatpush1.msra.mxu0 %v1874
    %2002 = vmatprep.subr.mxu0 %v1871
    %2003 = vmatpush1.msra.mxu0 %v1870
    %2004 = vmatprep.subr.mxu0 %v1867
    %2005 = vmatpush1.msra.mxu0 %v1866
    %2006 = vmatprep.subr.mxu0 %v1863
    %2007 = vmatpush1.msra.mxu0 %v1862
    %2008 = vmatprep.subr.mxu0 %v1859
    %2009 = vmatpush1.msra.mxu0 %v1858
    %2010 = vmatprep.subr.mxu0 %v1855
    %2011 = vmatpush1.msra.mxu0 %v1854
    %2012 = vmatprep.subr.mxu0 %v1851
    %2013 = vmatpush1.msra.mxu0 %v1850
    %2014 = vmatprep.subr.mxu0 %v1847
    %2015 = vmatpush1.msra.mxu0 %v1846
    %2016 = vmatprep.subr.mxu0 0.0
    %2017 = vmatpush2.msra.mxu0 0.0
    %2018 = vmatprep.subr.mxu0 0.0
    %2019 = vmatpush2.msra.mxu0 0.0
    %2020 = vmatprep.subr.mxu0 0.0
    %2021 = vmatpush2.msra.mxu0 0.0
    %2022 = vmatprep.subr.mxu0 0.0
    %2023 = vmatpush2.msra.mxu0 0.0
    %2024 = vmatprep.subr.mxu0 0.0
    %2025 = vmatpush2.msra.mxu0 0.0
    %2026 = vmatprep.subr.mxu0 0.0
    %2027 = vmatpush2.msra.mxu0 0.0
    %2028 = vmatprep.subr.mxu0 0.0
    %2029 = vmatpush2.msra.mxu0 0.0
    %2030 = vmatprep.subr.mxu0 0.0
    %2031 = vmatpush2.msra.mxu0 0.0
    %2032 = vmatprep.subr.mxu0 0.0
    %2033 = vmatpush2.msra.mxu0 0.0
    %2034 = vmatprep.subr.mxu0 0.0
    %2035 = vmatpush2.msra.mxu0 0.0
    %2036 = vmatprep.subr.mxu0 0.0
    %2037 = vmatpush2.msra.mxu0 0.0
    %2038 = vmatprep.subr.mxu0 0.0
    %2039 = vmatpush2.msra.mxu0 0.0
    %2040 = vmatprep.subr.mxu0 0.0
    %2041 = vmatpush2.msra.mxu0 0.0
    %2042 = vmatprep.subr.mxu0 0.0
    %2043 = vmatpush2.msra.mxu0 0.0
    %2044 = vmatprep.subr.mxu0 0.0
    %2045 = vmatpush2.msra.mxu0 0.0
    %2046 = vmatprep.subr.mxu0 0.0
    %2047 = vmatpush2.msra.mxu0 0.0
    %2048 = vmatprep.mubr.f32.mxu0 0.0
    %2049 = vmatmul.mubr.f32.gmra.mxu0 %v1841
    %v2050 = vpop.f32.mrf.mxu0
    %v2051 = vadd.f32 %v1911, %v2050
    %v2052 = vpop.f32.mrf.mxu0
    %v2053 = vadd.f32 %v1912, %v2052
    %2054 = vdwg.mxu0
    %v2055 = vmul.f32 %v1980, 0.5
    %v2056 = vtanh.pop %v2055
    %v2057 = vadd.f32 %v2056, 1.0
    %v2058 = vmul.f32 %v2057, 0.5
    %v2059 = vmul.f32 %v1982, 0.5
    %v2060 = vtanh.pop %v2059
    %v2061 = vadd.f32 %v2060, 1.0
    %v2062 = vmul.f32 %v2061, 0.5
    %v2063 = vtanh.pop %v2051
    %v2064 = vmul.f32 %v2053, 0.5
    %v2065 = vtanh.pop %v2064
    %v2066 = vadd.f32 %v2065, 1.0
    %v2067 = vmul.f32 %v2066, 0.5
    %v2068 = vmul.f32 %v2062, %v1839
    %v2069 = vmul.f32 %v2058, %v2063
    %v2070 = vadd.f32 %v2068, %v2069
    %v2071 = vtanh.pop %v2070
    %v2072 = vmul.f32 %v2067, %v2071
    %s2073 = scalar_lea.vmem [#allocation3], 40
    %2074 = vst [vmem:[%s2073] sm:$0xff] %v2072
    %v2075 = vld [vmem:[#allocation4] sm:$0xff]
    %v2076 = vld [vmem:[#allocation4 + $0x8] sm:$0xff]
    %v2077 = vld [vmem:[#allocation4 + $0x10] sm:$0xff]
    %v2078 = vld [vmem:[#allocation4 + $0x18] sm:$0xff]
    %v2079 = vld [vmem:[#allocation4 + $0x20] sm:$0xff]
    %v2080 = vld [vmem:[#allocation4 + $0x28] sm:$0xff]
    %v2081 = vld [vmem:[#allocation4 + $0x30] sm:$0xff]
    %v2082 = vld [vmem:[#allocation4 + $0x38] sm:$0xff]
    %v2083 = vld [vmem:[#allocation4 + $0x40] sm:$0xff]
    %v2084 = vld [vmem:[#allocation4 + $0x48] sm:$0xff]
    %v2085 = vld [vmem:[#allocation4 + $0x50] sm:$0xff]
    %v2086 = vld [vmem:[#allocation4 + $0x58] sm:$0xff]
    %v2087 = vld [vmem:[#allocation4 + $0x60] sm:$0xff]
    %v2088 = vld [vmem:[#allocation4 + $0x68] sm:$0xff]
    %v2089 = vld [vmem:[#allocation4 + $0x70] sm:$0xff]
    %v2090 = vld [vmem:[#allocation4 + $0x78] sm:$0xff]
    %v2091 = vld [vmem:[#allocation4 + $0x80] sm:$0xff]
    %v2092 = vld [vmem:[#allocation4 + $0x88] sm:$0xff]
    %v2093 = vld [vmem:[#allocation4 + $0x90] sm:$0xff]
    %v2094 = vld [vmem:[#allocation4 + $0x98] sm:$0xff]
    %v2095 = vld [vmem:[#allocation4 + $0xa0] sm:$0xff]
    %v2096 = vld [vmem:[#allocation4 + $0xa8] sm:$0xff]
    %v2097 = vld [vmem:[#allocation4 + $0xb0] sm:$0xff]
    %v2098 = vld [vmem:[#allocation4 + $0xb8] sm:$0xff]
    %v2099 = vld [vmem:[#allocation4 + $0xc0] sm:$0xff]
    %v2100 = vld [vmem:[#allocation4 + $0xc8] sm:$0xff]
    %v2101 = vld [vmem:[#allocation4 + $0xd0] sm:$0xff]
    %v2102 = vld [vmem:[#allocation4 + $0xd8] sm:$0xff]
    %v2103 = vld [vmem:[#allocation4 + $0xe0] sm:$0xff]
    %v2104 = vld [vmem:[#allocation4 + $0xe8] sm:$0xff]
    %v2105 = vld [vmem:[#allocation4 + $0xf0] sm:$0xff]
    %v2106 = vld [vmem:[#allocation4 + $0xf8] sm:$0xff]
    %v2107 = vld [vmem:[#allocation4 + $0x100] sm:$0xff]
    %v2108 = vld [vmem:[#allocation4 + $0x108] sm:$0xff]
    %v2109 = vld [vmem:[#allocation4 + $0x110] sm:$0xff]
    %v2110 = vld [vmem:[#allocation4 + $0x118] sm:$0xff]
    %v2111 = vld [vmem:[#allocation4 + $0x120] sm:$0xff]
    %v2112 = vld [vmem:[#allocation4 + $0x128] sm:$0xff]
    %v2113 = vld [vmem:[#allocation4 + $0x130] sm:$0xff]
    %v2114 = vld [vmem:[#allocation4 + $0x138] sm:$0xff]
    %v2115 = vld [vmem:[#allocation4 + $0x140] sm:$0xff]
    %v2116 = vld [vmem:[#allocation4 + $0x148] sm:$0xff]
    %v2117 = vld [vmem:[#allocation4 + $0x150] sm:$0xff]
    %v2118 = vld [vmem:[#allocation4 + $0x158] sm:$0xff]
    %v2119 = vld [vmem:[#allocation4 + $0x160] sm:$0xff]
    %v2120 = vld [vmem:[#allocation4 + $0x168] sm:$0xff]
    %v2121 = vld [vmem:[#allocation4 + $0x170] sm:$0xff]
    %v2122 = vld [vmem:[#allocation4 + $0x178] sm:$0xff]
    %v2123 = vld [vmem:[#allocation4 + $0x180] sm:$0xff]
    %v2124 = vld [vmem:[#allocation4 + $0x188] sm:$0xff]
    %v2125 = vld [vmem:[#allocation4 + $0x190] sm:$0xff]
    %v2126 = vld [vmem:[#allocation4 + $0x198] sm:$0xff]
    %v2127 = vld [vmem:[#allocation4 + $0x1a0] sm:$0xff]
    %v2128 = vld [vmem:[#allocation4 + $0x1a8] sm:$0xff]
    %v2129 = vld [vmem:[#allocation4 + $0x1b0] sm:$0xff]
    %v2130 = vld [vmem:[#allocation4 + $0x1b8] sm:$0xff]
    %v2131 = vld [vmem:[#allocation4 + $0x1c0] sm:$0xff]
    %v2132 = vld [vmem:[#allocation4 + $0x1c8] sm:$0xff]
    %v2133 = vld [vmem:[#allocation4 + $0x1d0] sm:$0xff]
    %v2134 = vld [vmem:[#allocation4 + $0x1d8] sm:$0xff]
    %v2135 = vld [vmem:[#allocation4 + $0x1e0] sm:$0xff]
    %v2136 = vld [vmem:[#allocation4 + $0x1e8] sm:$0xff]
    %v2137 = vld [vmem:[#allocation4 + $0x1f0] sm:$0xff]
    %v2138 = vld [vmem:[#allocation4 + $0x1f8] sm:$0xff]
    %s2139 = scalar_lea.vmem [#allocation2], 192
    %v2140 = vld [vmem:[%s2139] sm:$0xff]
    %v2141 = vld [vmem:[%s2139 + $0x8] sm:$0xff]
    %v2142 = vld [vmem:[%s2139 + $0x10] sm:$0xff]
    %v2143 = vld [vmem:[%s2139 + $0x18] sm:$0xff]
    %2144 = vmatprep.subr.mxu0 %v2136
    %2145 = vmatpush1.msra.mxu0 %v2135
    %2146 = vmatprep.subr.mxu0 %v2132
    %2147 = vmatpush1.msra.mxu0 %v2131
    %2148 = vmatprep.subr.mxu0 %v2128
    %2149 = vmatpush1.msra.mxu0 %v2127
    %2150 = vmatprep.subr.mxu0 %v2124
    %2151 = vmatpush1.msra.mxu0 %v2123
    %2152 = vmatprep.subr.mxu0 %v2120
    %2153 = vmatpush1.msra.mxu0 %v2119
    %2154 = vmatprep.subr.mxu0 %v2116
    %2155 = vmatpush1.msra.mxu0 %v2115
    %2156 = vmatprep.subr.mxu0 %v2112
    %2157 = vmatpush1.msra.mxu0 %v2111
    %2158 = vmatprep.subr.mxu0 %v2108
    %2159 = vmatpush1.msra.mxu0 %v2107
    %2160 = vmatprep.subr.mxu0 %v2104
    %2161 = vmatpush1.msra.mxu0 %v2103
    %2162 = vmatprep.subr.mxu0 %v2100
    %2163 = vmatpush1.msra.mxu0 %v2099
    %2164 = vmatprep.subr.mxu0 %v2096
    %2165 = vmatpush1.msra.mxu0 %v2095
    %2166 = vmatprep.subr.mxu0 %v2092
    %2167 = vmatpush1.msra.mxu0 %v2091
    %2168 = vmatprep.subr.mxu0 %v2088
    %2169 = vmatpush1.msra.mxu0 %v2087
    %2170 = vmatprep.subr.mxu0 %v2084
    %2171 = vmatpush1.msra.mxu0 %v2083
    %2172 = vmatprep.subr.mxu0 %v2080
    %2173 = vmatpush1.msra.mxu0 %v2079
    %2174 = vmatprep.subr.mxu0 %v2076
    %2175 = vmatpush1.msra.mxu0 %v2075
    %2176 = vmatprep.subr.mxu0 0.0
    %2177 = vmatpush2.msra.mxu0 0.0
    %2178 = vmatprep.subr.mxu0 0.0
    %2179 = vmatpush2.msra.mxu0 0.0
    %2180 = vmatprep.subr.mxu0 0.0
    %2181 = vmatpush2.msra.mxu0 0.0
    %2182 = vmatprep.subr.mxu0 0.0
    %2183 = vmatpush2.msra.mxu0 0.0
    %2184 = vmatprep.subr.mxu0 0.0
    %2185 = vmatpush2.msra.mxu0 0.0
    %2186 = vmatprep.subr.mxu0 0.0
    %2187 = vmatpush2.msra.mxu0 0.0
    %2188 = vmatprep.subr.mxu0 0.0
    %2189 = vmatpush2.msra.mxu0 0.0
    %2190 = vmatprep.subr.mxu0 0.0
    %2191 = vmatpush2.msra.mxu0 0.0
    %2192 = vmatprep.subr.mxu0 0.0
    %2193 = vmatpush2.msra.mxu0 0.0
    %2194 = vmatprep.subr.mxu0 0.0
    %2195 = vmatpush2.msra.mxu0 0.0
    %2196 = vmatprep.subr.mxu0 0.0
    %2197 = vmatpush2.msra.mxu0 0.0
    %2198 = vmatprep.subr.mxu0 0.0
    %2199 = vmatpush2.msra.mxu0 0.0
    %2200 = vmatprep.subr.mxu0 0.0
    %2201 = vmatpush2.msra.mxu0 0.0
    %2202 = vmatprep.subr.mxu0 0.0
    %2203 = vmatpush2.msra.mxu0 0.0
    %2204 = vmatprep.subr.mxu0 0.0
    %2205 = vmatpush2.msra.mxu0 0.0
    %2206 = vmatprep.subr.mxu0 0.0
    %2207 = vmatpush2.msra.mxu0 0.0
    %2208 = vmatprep.mubr.f32.mxu0 0.0
    %2209 = vmatmul.mubr.f32.gmra.mxu0 %v2072
    %v2210 = vpop.f32.mrf.mxu0
    %v2211 = vadd.f32 %v2140, %v2210
    %v2212 = vpop.f32.mrf.mxu0
    %v2213 = vadd.f32 %v2141, %v2212
    %2214 = vdwg.mxu0
    %2215 = vmatprep.subr.mxu0 %v2138
    %2216 = vmatpush1.msra.mxu0 %v2137
    %2217 = vmatprep.subr.mxu0 %v2134
    %2218 = vmatpush1.msra.mxu0 %v2133
    %2219 = vmatprep.subr.mxu0 %v2130
    %2220 = vmatpush1.msra.mxu0 %v2129
    %2221 = vmatprep.subr.mxu0 %v2126
    %2222 = vmatpush1.msra.mxu0 %v2125
    %2223 = vmatprep.subr.mxu0 %v2122
    %2224 = vmatpush1.msra.mxu0 %v2121
    %2225 = vmatprep.subr.mxu0 %v2118
    %2226 = vmatpush1.msra.mxu0 %v2117
    %2227 = vmatprep.subr.mxu0 %v2114
    %2228 = vmatpush1.msra.mxu0 %v2113
    %2229 = vmatprep.subr.mxu0 %v2110
    %2230 = vmatpush1.msra.mxu0 %v2109
    %2231 = vmatprep.subr.mxu0 %v2106
    %2232 = vmatpush1.msra.mxu0 %v2105
    %2233 = vmatprep.subr.mxu0 %v2102
    %2234 = vmatpush1.msra.mxu0 %v2101
    %2235 = vmatprep.subr.mxu0 %v2098
    %2236 = vmatpush1.msra.mxu0 %v2097
    %2237 = vmatprep.subr.mxu0 %v2094
    %2238 = vmatpush1.msra.mxu0 %v2093
    %2239 = vmatprep.subr.mxu0 %v2090
    %2240 = vmatpush1.msra.mxu0 %v2089
    %2241 = vmatprep.subr.mxu0 %v2086
    %2242 = vmatpush1.msra.mxu0 %v2085
    %2243 = vmatprep.subr.mxu0 %v2082
    %2244 = vmatpush1.msra.mxu0 %v2081
    %2245 = vmatprep.subr.mxu0 %v2078
    %2246 = vmatpush1.msra.mxu0 %v2077
    %2247 = vmatprep.subr.mxu0 0.0
    %2248 = vmatpush2.msra.mxu0 0.0
    %2249 = vmatprep.subr.mxu0 0.0
    %2250 = vmatpush2.msra.mxu0 0.0
    %2251 = vmatprep.subr.mxu0 0.0
    %2252 = vmatpush2.msra.mxu0 0.0
    %2253 = vmatprep.subr.mxu0 0.0
    %2254 = vmatpush2.msra.mxu0 0.0
    %2255 = vmatprep.subr.mxu0 0.0
    %2256 = vmatpush2.msra.mxu0 0.0
    %2257 = vmatprep.subr.mxu0 0.0
    %2258 = vmatpush2.msra.mxu0 0.0
    %2259 = vmatprep.subr.mxu0 0.0
    %2260 = vmatpush2.msra.mxu0 0.0
    %2261 = vmatprep.subr.mxu0 0.0
    %2262 = vmatpush2.msra.mxu0 0.0
    %2263 = vmatprep.subr.mxu0 0.0
    %2264 = vmatpush2.msra.mxu0 0.0
    %2265 = vmatprep.subr.mxu0 0.0
    %2266 = vmatpush2.msra.mxu0 0.0
    %2267 = vmatprep.subr.mxu0 0.0
    %2268 = vmatpush2.msra.mxu0 0.0
    %2269 = vmatprep.subr.mxu0 0.0
    %2270 = vmatpush2.msra.mxu0 0.0
    %2271 = vmatprep.subr.mxu0 0.0
    %2272 = vmatpush2.msra.mxu0 0.0
    %2273 = vmatprep.subr.mxu0 0.0
    %2274 = vmatpush2.msra.mxu0 0.0
    %2275 = vmatprep.subr.mxu0 0.0
    %2276 = vmatpush2.msra.mxu0 0.0
    %2277 = vmatprep.subr.mxu0 0.0
    %2278 = vmatpush2.msra.mxu0 0.0
    %2279 = vmatprep.mubr.f32.mxu0 0.0
    %2280 = vmatmul.mubr.f32.gmra.mxu0 %v2072
    %v2281 = vpop.f32.mrf.mxu0
    %v2282 = vadd.f32 %v2142, %v2281
    %v2283 = vpop.f32.mrf.mxu0
    %v2284 = vadd.f32 %v2143, %v2283
    %2285 = vdwg.mxu0
    %v2286 = vmul.f32 %v2211, 0.5
    %v2287 = vtanh.pop %v2286
    %v2288 = vadd.f32 %v2287, 1.0
    %v2289 = vmul.f32 %v2288, 0.5
    %v2290 = vmul.f32 %v2213, 0.5
    %v2291 = vtanh.pop %v2290
    %v2292 = vadd.f32 %v2291, 1.0
    %v2293 = vmul.f32 %v2292, 0.5
    %v2294 = vtanh.pop %v2282
    %v2295 = vmul.f32 %v2284, 0.5
    %v2296 = vtanh.pop %v2295
    %v2297 = vadd.f32 %v2296, 1.0
    %v2298 = vmul.f32 %v2297, 0.5
    %v2299 = vmul.f32 %v2293, %v2070
    %v2300 = vmul.f32 %v2289, %v2294
    %v2301 = vadd.f32 %v2299, %v2300
    %v2302 = vtanh.pop %v2301
    %v2303 = vmul.f32 %v2298, %v2302
    %s2304 = scalar_lea.vmem [#allocation3], 48
    %2305 = vst [vmem:[%s2304] sm:$0xff] %v2303
    %v2306 = vld [vmem:[#allocation4] sm:$0xff]
    %v2307 = vld [vmem:[#allocation4 + $0x8] sm:$0xff]
    %v2308 = vld [vmem:[#allocation4 + $0x10] sm:$0xff]
    %v2309 = vld [vmem:[#allocation4 + $0x18] sm:$0xff]
    %v2310 = vld [vmem:[#allocation4 + $0x20] sm:$0xff]
    %v2311 = vld [vmem:[#allocation4 + $0x28] sm:$0xff]
    %v2312 = vld [vmem:[#allocation4 + $0x30] sm:$0xff]
    %v2313 = vld [vmem:[#allocation4 + $0x38] sm:$0xff]
    %v2314 = vld [vmem:[#allocation4 + $0x40] sm:$0xff]
    %v2315 = vld [vmem:[#allocation4 + $0x48] sm:$0xff]
    %v2316 = vld [vmem:[#allocation4 + $0x50] sm:$0xff]
    %v2317 = vld [vmem:[#allocation4 + $0x58] sm:$0xff]
    %v2318 = vld [vmem:[#allocation4 + $0x60] sm:$0xff]
    %v2319 = vld [vmem:[#allocation4 + $0x68] sm:$0xff]
    %v2320 = vld [vmem:[#allocation4 + $0x70] sm:$0xff]
    %v2321 = vld [vmem:[#allocation4 + $0x78] sm:$0xff]
    %v2322 = vld [vmem:[#allocation4 + $0x80] sm:$0xff]
    %v2323 = vld [vmem:[#allocation4 + $0x88] sm:$0xff]
    %v2324 = vld [vmem:[#allocation4 + $0x90] sm:$0xff]
    %v2325 = vld [vmem:[#allocation4 + $0x98] sm:$0xff]
    %v2326 = vld [vmem:[#allocation4 + $0xa0] sm:$0xff]
    %v2327 = vld [vmem:[#allocation4 + $0xa8] sm:$0xff]
    %v2328 = vld [vmem:[#allocation4 + $0xb0] sm:$0xff]
    %v2329 = vld [vmem:[#allocation4 + $0xb8] sm:$0xff]
    %v2330 = vld [vmem:[#allocation4 + $0xc0] sm:$0xff]
    %v2331 = vld [vmem:[#allocation4 + $0xc8] sm:$0xff]
    %v2332 = vld [vmem:[#allocation4 + $0xd0] sm:$0xff]
    %v2333 = vld [vmem:[#allocation4 + $0xd8] sm:$0xff]
    %v2334 = vld [vmem:[#allocation4 + $0xe0] sm:$0xff]
    %v2335 = vld [vmem:[#allocation4 + $0xe8] sm:$0xff]
    %v2336 = vld [vmem:[#allocation4 + $0xf0] sm:$0xff]
    %v2337 = vld [vmem:[#allocation4 + $0xf8] sm:$0xff]
    %v2338 = vld [vmem:[#allocation4 + $0x100] sm:$0xff]
    %v2339 = vld [vmem:[#allocation4 + $0x108] sm:$0xff]
    %v2340 = vld [vmem:[#allocation4 + $0x110] sm:$0xff]
    %v2341 = vld [vmem:[#allocation4 + $0x118] sm:$0xff]
    %v2342 = vld [vmem:[#allocation4 + $0x120] sm:$0xff]
    %v2343 = vld [vmem:[#allocation4 + $0x128] sm:$0xff]
    %v2344 = vld [vmem:[#allocation4 + $0x130] sm:$0xff]
    %v2345 = vld [vmem:[#allocation4 + $0x138] sm:$0xff]
    %v2346 = vld [vmem:[#allocation4 + $0x140] sm:$0xff]
    %v2347 = vld [vmem:[#allocation4 + $0x148] sm:$0xff]
    %v2348 = vld [vmem:[#allocation4 + $0x150] sm:$0xff]
    %v2349 = vld [vmem:[#allocation4 + $0x158] sm:$0xff]
    %v2350 = vld [vmem:[#allocation4 + $0x160] sm:$0xff]
    %v2351 = vld [vmem:[#allocation4 + $0x168] sm:$0xff]
    %v2352 = vld [vmem:[#allocation4 + $0x170] sm:$0xff]
    %v2353 = vld [vmem:[#allocation4 + $0x178] sm:$0xff]
    %v2354 = vld [vmem:[#allocation4 + $0x180] sm:$0xff]
    %v2355 = vld [vmem:[#allocation4 + $0x188] sm:$0xff]
    %v2356 = vld [vmem:[#allocation4 + $0x190] sm:$0xff]
    %v2357 = vld [vmem:[#allocation4 + $0x198] sm:$0xff]
    %v2358 = vld [vmem:[#allocation4 + $0x1a0] sm:$0xff]
    %v2359 = vld [vmem:[#allocation4 + $0x1a8] sm:$0xff]
    %v2360 = vld [vmem:[#allocation4 + $0x1b0] sm:$0xff]
    %v2361 = vld [vmem:[#allocation4 + $0x1b8] sm:$0xff]
    %v2362 = vld [vmem:[#allocation4 + $0x1c0] sm:$0xff]
    %v2363 = vld [vmem:[#allocation4 + $0x1c8] sm:$0xff]
    %v2364 = vld [vmem:[#allocation4 + $0x1d0] sm:$0xff]
    %v2365 = vld [vmem:[#allocation4 + $0x1d8] sm:$0xff]
    %v2366 = vld [vmem:[#allocation4 + $0x1e0] sm:$0xff]
    %v2367 = vld [vmem:[#allocation4 + $0x1e8] sm:$0xff]
    %v2368 = vld [vmem:[#allocation4 + $0x1f0] sm:$0xff]
    %v2369 = vld [vmem:[#allocation4 + $0x1f8] sm:$0xff]
    %s2370 = scalar_lea.vmem [#allocation2], 224
    %v2371 = vld [vmem:[%s2370] sm:$0xff]
    %v2372 = vld [vmem:[%s2370 + $0x8] sm:$0xff]
    %v2373 = vld [vmem:[%s2370 + $0x10] sm:$0xff]
    %v2374 = vld [vmem:[%s2370 + $0x18] sm:$0xff]
    %2375 = vmatprep.subr.mxu0 %v2367
    %2376 = vmatpush1.msra.mxu0 %v2366
    %2377 = vmatprep.subr.mxu0 %v2363
    %2378 = vmatpush1.msra.mxu0 %v2362
    %2379 = vmatprep.subr.mxu0 %v2359
    %2380 = vmatpush1.msra.mxu0 %v2358
    %2381 = vmatprep.subr.mxu0 %v2355
    %2382 = vmatpush1.msra.mxu0 %v2354
    %2383 = vmatprep.subr.mxu0 %v2351
    %2384 = vmatpush1.msra.mxu0 %v2350
    %2385 = vmatprep.subr.mxu0 %v2347
    %2386 = vmatpush1.msra.mxu0 %v2346
    %2387 = vmatprep.subr.mxu0 %v2343
    %2388 = vmatpush1.msra.mxu0 %v2342
    %2389 = vmatprep.subr.mxu0 %v2339
    %2390 = vmatpush1.msra.mxu0 %v2338
    %2391 = vmatprep.subr.mxu0 %v2335
    %2392 = vmatpush1.msra.mxu0 %v2334
    %2393 = vmatprep.subr.mxu0 %v2331
    %2394 = vmatpush1.msra.mxu0 %v2330
    %2395 = vmatprep.subr.mxu0 %v2327
    %2396 = vmatpush1.msra.mxu0 %v2326
    %2397 = vmatprep.subr.mxu0 %v2323
    %2398 = vmatpush1.msra.mxu0 %v2322
    %2399 = vmatprep.subr.mxu0 %v2319
    %2400 = vmatpush1.msra.mxu0 %v2318
    %2401 = vmatprep.subr.mxu0 %v2315
    %2402 = vmatpush1.msra.mxu0 %v2314
    %2403 = vmatprep.subr.mxu0 %v2311
    %2404 = vmatpush1.msra.mxu0 %v2310
    %2405 = vmatprep.subr.mxu0 %v2307
    %2406 = vmatpush1.msra.mxu0 %v2306
    %2407 = vmatprep.subr.mxu0 0.0
    %2408 = vmatpush2.msra.mxu0 0.0
    %2409 = vmatprep.subr.mxu0 0.0
    %2410 = vmatpush2.msra.mxu0 0.0
    %2411 = vmatprep.subr.mxu0 0.0
    %2412 = vmatpush2.msra.mxu0 0.0
    %2413 = vmatprep.subr.mxu0 0.0
    %2414 = vmatpush2.msra.mxu0 0.0
    %2415 = vmatprep.subr.mxu0 0.0
    %2416 = vmatpush2.msra.mxu0 0.0
    %2417 = vmatprep.subr.mxu0 0.0
    %2418 = vmatpush2.msra.mxu0 0.0
    %2419 = vmatprep.subr.mxu0 0.0
    %2420 = vmatpush2.msra.mxu0 0.0
    %2421 = vmatprep.subr.mxu0 0.0
    %2422 = vmatpush2.msra.mxu0 0.0
    %2423 = vmatprep.subr.mxu0 0.0
    %2424 = vmatpush2.msra.mxu0 0.0
    %2425 = vmatprep.subr.mxu0 0.0
    %2426 = vmatpush2.msra.mxu0 0.0
    %2427 = vmatprep.subr.mxu0 0.0
    %2428 = vmatpush2.msra.mxu0 0.0
    %2429 = vmatprep.subr.mxu0 0.0
    %2430 = vmatpush2.msra.mxu0 0.0
    %2431 = vmatprep.subr.mxu0 0.0
    %2432 = vmatpush2.msra.mxu0 0.0
    %2433 = vmatprep.subr.mxu0 0.0
    %2434 = vmatpush2.msra.mxu0 0.0
    %2435 = vmatprep.subr.mxu0 0.0
    %2436 = vmatpush2.msra.mxu0 0.0
    %2437 = vmatprep.subr.mxu0 0.0
    %2438 = vmatpush2.msra.mxu0 0.0
    %2439 = vmatprep.mubr.f32.mxu0 0.0
    %2440 = vmatmul.mubr.f32.gmra.mxu0 %v2303
    %v2441 = vpop.f32.mrf.mxu0
    %v2442 = vadd.f32 %v2371, %v2441
    %v2443 = vpop.f32.mrf.mxu0
    %v2444 = vadd.f32 %v2372, %v2443
    %2445 = vdwg.mxu0
    %2446 = vmatprep.subr.mxu0 %v2369
    %2447 = vmatpush1.msra.mxu0 %v2368
    %2448 = vmatprep.subr.mxu0 %v2365
    %2449 = vmatpush1.msra.mxu0 %v2364
    %2450 = vmatprep.subr.mxu0 %v2361
    %2451 = vmatpush1.msra.mxu0 %v2360
    %2452 = vmatprep.subr.mxu0 %v2357
    %2453 = vmatpush1.msra.mxu0 %v2356
    %2454 = vmatprep.subr.mxu0 %v2353
    %2455 = vmatpush1.msra.mxu0 %v2352
    %2456 = vmatprep.subr.mxu0 %v2349
    %2457 = vmatpush1.msra.mxu0 %v2348
    %2458 = vmatprep.subr.mxu0 %v2345
    %2459 = vmatpush1.msra.mxu0 %v2344
    %2460 = vmatprep.subr.mxu0 %v2341
    %2461 = vmatpush1.msra.mxu0 %v2340
    %2462 = vmatprep.subr.mxu0 %v2337
    %2463 = vmatpush1.msra.mxu0 %v2336
    %2464 = vmatprep.subr.mxu0 %v2333
    %2465 = vmatpush1.msra.mxu0 %v2332
    %2466 = vmatprep.subr.mxu0 %v2329
    %2467 = vmatpush1.msra.mxu0 %v2328
    %2468 = vmatprep.subr.mxu0 %v2325
    %2469 = vmatpush1.msra.mxu0 %v2324
    %2470 = vmatprep.subr.mxu0 %v2321
    %2471 = vmatpush1.msra.mxu0 %v2320
    %2472 = vmatprep.subr.mxu0 %v2317
    %2473 = vmatpush1.msra.mxu0 %v2316
    %2474 = vmatprep.subr.mxu0 %v2313
    %2475 = vmatpush1.msra.mxu0 %v2312
    %2476 = vmatprep.subr.mxu0 %v2309
    %2477 = vmatpush1.msra.mxu0 %v2308
    %2478 = vmatprep.subr.mxu0 0.0
    %2479 = vmatpush2.msra.mxu0 0.0
    %2480 = vmatprep.subr.mxu0 0.0
    %2481 = vmatpush2.msra.mxu0 0.0
    %2482 = vmatprep.subr.mxu0 0.0
    %2483 = vmatpush2.msra.mxu0 0.0
    %2484 = vmatprep.subr.mxu0 0.0
    %2485 = vmatpush2.msra.mxu0 0.0
    %2486 = vmatprep.subr.mxu0 0.0
    %2487 = vmatpush2.msra.mxu0 0.0
    %2488 = vmatprep.subr.mxu0 0.0
    %2489 = vmatpush2.msra.mxu0 0.0
    %2490 = vmatprep.subr.mxu0 0.0
    %2491 = vmatpush2.msra.mxu0 0.0
    %2492 = vmatprep.subr.mxu0 0.0
    %2493 = vmatpush2.msra.mxu0 0.0
    %2494 = vmatprep.subr.mxu0 0.0
    %2495 = vmatpush2.msra.mxu0 0.0
    %2496 = vmatprep.subr.mxu0 0.0
    %2497 = vmatpush2.msra.mxu0 0.0
    %2498 = vmatprep.subr.mxu0 0.0
    %2499 = vmatpush2.msra.mxu0 0.0
    %2500 = vmatprep.subr.mxu0 0.0
    %2501 = vmatpush2.msra.mxu0 0.0
    %2502 = vmatprep.subr.mxu0 0.0
    %2503 = vmatpush2.msra.mxu0 0.0
    %2504 = vmatprep.subr.mxu0 0.0
    %2505 = vmatpush2.msra.mxu0 0.0
    %2506 = vmatprep.subr.mxu0 0.0
    %2507 = vmatpush2.msra.mxu0 0.0
    %2508 = vmatprep.subr.mxu0 0.0
    %2509 = vmatpush2.msra.mxu0 0.0
    %2510 = vmatprep.mubr.f32.mxu0 0.0
    %2511 = vmatmul.mubr.f32.gmra.mxu0 %v2303
    %v2512 = vpop.f32.mrf.mxu0
    %v2513 = vadd.f32 %v2373, %v2512
    %v2514 = vpop.f32.mrf.mxu0
    %v2515 = vadd.f32 %v2374, %v2514
    %2516 = vdwg.mxu0
    %v2517 = vmul.f32 %v2442, 0.5
    %v2518 = vtanh.pop %v2517
    %v2519 = vadd.f32 %v2518, 1.0
    %v2520 = vmul.f32 %v2519, 0.5
    %v2521 = vmul.f32 %v2444, 0.5
    %v2522 = vtanh.pop %v2521
    %v2523 = vadd.f32 %v2522, 1.0
    %v2524 = vmul.f32 %v2523, 0.5
    %v2525 = vtanh.pop %v2513
    %v2526 = vmul.f32 %v2515, 0.5
    %v2527 = vtanh.pop %v2526
    %v2528 = vadd.f32 %v2527, 1.0
    %v2529 = vmul.f32 %v2528, 0.5
    %v2530 = vmul.f32 %v2524, %v2301
    %v2531 = vmul.f32 %v2520, %v2525
    %v2532 = vadd.f32 %v2530, %v2531
    %v2533 = vtanh.pop %v2532
    %v2534 = vmul.f32 %v2529, %v2533
    %s2535 = scalar_lea.vmem [#allocation3], 56
    %2536 = vst [vmem:[%s2535] sm:$0xff] %v2534
    %2537 = vst [vmem:[%s10] sm:$0xff] %v2534
    %2538 = vst [vmem:[%s11] sm:$0xff] %v2532
    %v2539 = vld [vmem:[#allocation3] sm:$0xff]
    %v2540 = vld [vmem:[#allocation3 + $0x8] sm:$0xff]
    %v2541 = vld [vmem:[#allocation3 + $0x10] sm:$0xff]
    %v2542 = vld [vmem:[#allocation3 + $0x18] sm:$0xff]
    %v2543 = vld [vmem:[#allocation3 + $0x20] sm:$0xff]
    %v2544 = vld [vmem:[#allocation3 + $0x28] sm:$0xff]
    %v2545 = vld [vmem:[#allocation3 + $0x30] sm:$0xff]
    %v2546 = vld [vmem:[#allocation3 + $0x38] sm:$0xff]
    %v2547 = vld [vmem:[#allocation6] sm:$0xff]
    %v2548 = vld [vmem:[#allocation6 + $0x8] sm:$0xff]
    %v2549 = vld [vmem:[#allocation6 + $0x10] sm:$0xff]
    %v2550 = vld [vmem:[#allocation6 + $0x18] sm:$0xff]
    %v2551 = vld [vmem:[#allocation6 + $0x20] sm:$0xff]
    %v2552 = vld [vmem:[#allocation6 + $0x28] sm:$0xff]
    %v2553 = vld [vmem:[#allocation6 + $0x30] sm:$0xff]
    %v2554 = vld [vmem:[#allocation6 + $0x38] sm:$0xff]
    %v2555 = vld [vmem:[#allocation6 + $0x40] sm:$0xff]
    %v2556 = vld [vmem:[#allocation6 + $0x48] sm:$0xff]
    %v2557 = vld [vmem:[#allocation6 + $0x50] sm:$0xff]
    %v2558 = vld [vmem:[#allocation6 + $0x58] sm:$0xff]
    %v2559 = vld [vmem:[#allocation6 + $0x60] sm:$0xff]
    %v2560 = vld [vmem:[#allocation6 + $0x68] sm:$0xff]
    %v2561 = vld [vmem:[#allocation6 + $0x70] sm:$0xff]
    %v2562 = vld [vmem:[#allocation6 + $0x78] sm:$0xff]
    %v2563 = vlaneseq
    %v2564 = vshrl.u32 %v2563, 7
    %v2565 = vsub.s32 0, %v2564
    %v2566 = vrot.slane %v67, %v2565
    %2567 = vmatprep.subr.mxu0 0.0
    %2568 = vmatpush1.msra.mxu0 %v2562
    %2569 = vmatprep.subr.mxu0 0.0
    %2570 = vmatpush1.msra.mxu0 %v2561
    %2571 = vmatprep.subr.mxu0 0.0
    %2572 = vmatpush1.msra.mxu0 %v2560
    %2573 = vmatprep.subr.mxu0 0.0
    %2574 = vmatpush1.msra.mxu0 %v2559
    %2575 = vmatprep.subr.mxu0 0.0
    %2576 = vmatpush1.msra.mxu0 %v2558
    %2577 = vmatprep.subr.mxu0 0.0
    %2578 = vmatpush1.msra.mxu0 %v2557
    %2579 = vmatprep.subr.mxu0 0.0
    %2580 = vmatpush1.msra.mxu0 %v2556
    %2581 = vmatprep.subr.mxu0 0.0
    %2582 = vmatpush1.msra.mxu0 %v2555
    %2583 = vmatprep.subr.mxu0 0.0
    %2584 = vmatpush1.msra.mxu0 %v2554
    %2585 = vmatprep.subr.mxu0 0.0
    %2586 = vmatpush1.msra.mxu0 %v2553
    %2587 = vmatprep.subr.mxu0 0.0
    %2588 = vmatpush1.msra.mxu0 %v2552
    %2589 = vmatprep.subr.mxu0 0.0
    %2590 = vmatpush1.msra.mxu0 %v2551
    %2591 = vmatprep.subr.mxu0 0.0
    %2592 = vmatpush1.msra.mxu0 %v2550
    %2593 = vmatprep.subr.mxu0 0.0
    %2594 = vmatpush1.msra.mxu0 %v2549
    %2595 = vmatprep.subr.mxu0 0.0
    %2596 = vmatpush1.msra.mxu0 %v2548
    %2597 = vmatprep.subr.mxu0 0.0
    %2598 = vmatpush1.msra.mxu0 %v2547
    %2599 = vmatprep.subr.mxu0 0.0
    %2600 = vmatpush2.msra.mxu0 0.0
    %2601 = vmatprep.subr.mxu0 0.0
    %2602 = vmatpush2.msra.mxu0 0.0
    %2603 = vmatprep.subr.mxu0 0.0
    %2604 = vmatpush2.msra.mxu0 0.0
    %2605 = vmatprep.subr.mxu0 0.0
    %2606 = vmatpush2.msra.mxu0 0.0
    %2607 = vmatprep.subr.mxu0 0.0
    %2608 = vmatpush2.msra.mxu0 0.0
    %2609 = vmatprep.subr.mxu0 0.0
    %2610 = vmatpush2.msra.mxu0 0.0
    %2611 = vmatprep.subr.mxu0 0.0
    %2612 = vmatpush2.msra.mxu0 0.0
    %2613 = vmatprep.subr.mxu0 0.0
    %2614 = vmatpush2.msra.mxu0 0.0
    %2615 = vmatprep.subr.mxu0 0.0
    %2616 = vmatpush2.msra.mxu0 0.0
    %2617 = vmatprep.subr.mxu0 0.0
    %2618 = vmatpush2.msra.mxu0 0.0
    %2619 = vmatprep.subr.mxu0 0.0
    %2620 = vmatpush2.msra.mxu0 0.0
    %2621 = vmatprep.subr.mxu0 0.0
    %2622 = vmatpush2.msra.mxu0 0.0
    %2623 = vmatprep.subr.mxu0 0.0
    %2624 = vmatpush2.msra.mxu0 0.0
    %2625 = vmatprep.subr.mxu0 0.0
    %2626 = vmatpush2.msra.mxu0 0.0
    %2627 = vmatprep.subr.mxu0 0.0
    %2628 = vmatpush2.msra.mxu0 0.0
    %2629 = vmatprep.subr.mxu0 0.0
    %2630 = vmatpush2.msra.mxu0 0.0
    %2631 = vmatprep.mubr.f32.mxu0 0.0
    %2632 = vmatmul.mubr.f32.gmra.mxu0 %v2539
    %v2633 = vpop.f32.mrf.mxu0
    %v2634 = vadd.f32 %v2566, %v2633
    %v2635 = vpop.f32.mrf.mxu0
    %2636 = vmatprep.mubr.f32.mxu0 0.0
    %2637 = vmatmul.mubr.f32.gmra.mxu0 %v2540
    %v2638 = vpop.f32.mrf.mxu0
    %v2639 = vadd.f32 %v2566, %v2638
    %v2640 = vpop.f32.mrf.mxu0
    %2641 = vmatprep.mubr.f32.mxu0 0.0
    %2642 = vmatmul.mubr.f32.gmra.mxu0 %v2541
    %v2643 = vpop.f32.mrf.mxu0
    %v2644 = vadd.f32 %v2566, %v2643
    %v2645 = vpop.f32.mrf.mxu0
    %2646 = vmatprep.mubr.f32.mxu0 0.0
    %2647 = vmatmul.mubr.f32.gmra.mxu0 %v2542
    %v2648 = vpop.f32.mrf.mxu0
    %v2649 = vadd.f32 %v2566, %v2648
    %v2650 = vpop.f32.mrf.mxu0
    %2651 = vmatprep.mubr.f32.mxu0 0.0
    %2652 = vmatmul.mubr.f32.gmra.mxu0 %v2543
    %v2653 = vpop.f32.mrf.mxu0
    %v2654 = vadd.f32 %v2566, %v2653
    %v2655 = vpop.f32.mrf.mxu0
    %2656 = vmatprep.mubr.f32.mxu0 0.0
    %2657 = vmatmul.mubr.f32.gmra.mxu0 %v2544
    %v2658 = vpop.f32.mrf.mxu0
    %v2659 = vadd.f32 %v2566, %v2658
    %v2660 = vpop.f32.mrf.mxu0
    %2661 = vmatprep.mubr.f32.mxu0 0.0
    %2662 = vmatmul.mubr.f32.gmra.mxu0 %v2545
    %v2663 = vpop.f32.mrf.mxu0
    %v2664 = vadd.f32 %v2566, %v2663
    %v2665 = vpop.f32.mrf.mxu0
    %2666 = vmatprep.mubr.f32.mxu0 0.0
    %2667 = vmatmul.mubr.f32.gmra.mxu0 %v2546
    %v2668 = vpop.f32.mrf.mxu0
    %v2669 = vadd.f32 %v2566, %v2668
    %v2670 = vpop.f32.mrf.mxu0
    %2671 = vdwg.mxu0
    %2672 = vst [vmem:[%s9] sm:$0xff] %v2634
    %2673 = vst [vmem:[%s9 + $0x8] sm:$0xff] %v2639
    %2674 = vst [vmem:[%s9 + $0x10] sm:$0xff] %v2644
    %2675 = vst [vmem:[%s9 + $0x18] sm:$0xff] %v2649
    %2676 = vst [vmem:[%s9 + $0x20] sm:$0xff] %v2654
    %2677 = vst [vmem:[%s9 + $0x28] sm:$0xff] %v2659
    %2678 = vst [vmem:[%s9 + $0x30] sm:$0xff] %v2664
    %2679 = vst [vmem:[%s9 + $0x38] sm:$0xff] %v2669
    // Predicated region
    $region46: #{actor_forward.1} parent=1 // pred_check
      _
    $region47: #{actor_forward.1} parent=1 // pred_check_branch
      %2681 = sbr.rel (0) target = $region49
    $region48: #{actor_forward.1} parent=1 // pred_region
      _
    $region49: #{actor_forward.1} parent=1 // pred_fallthru
      _
    // Predicated region
    $region50: #{actor_forward.1} parent=1 // pred_check
      _
    $region51: #{actor_forward.1} parent=1 // pred_check_branch
      %2683 = sbr.rel (0) target = $region53
    $region52: #{actor_forward.1} parent=1 // pred_region
      _
    $region53: #{actor_forward.1} parent=1 // pred_fallthru
      _
    // Predicated region
    $region54: #{actor_forward.1} parent=1 // pred_check
      _
    $region55: #{actor_forward.1} parent=1 // pred_check_branch
      %2685 = sbr.rel (0) target = $region57
    $region56: #{actor_forward.1} parent=1 // pred_region
      _
    $region57: #{actor_forward.1} parent=1 // pred_fallthru
      _
    // Predicated region
    $region58: #{actor_forward.1} parent=1 // pred_check
      _
    $region59: #{actor_forward.1} parent=1 // pred_check_branch
      %2687 = sbr.rel (0) target = $region61
    $region60: #{actor_forward.1} parent=1 // pred_region
      _
    $region61: #{actor_forward.1} parent=1 // pred_fallthru
      _
    // Predicated region
    $region62: #{actor_forward.1} parent=1 // pred_check
      _
    $region63: #{actor_forward.1} parent=1 // pred_check_branch
      %2689 = sbr.rel (0) target = $region65
    $region64: #{actor_forward.1} parent=1 // pred_region
      _
    $region65: #{actor_forward.1} parent=1 // pred_fallthru
      _
    // Predicated region
    $region66: #{actor_forward.1} parent=1 // pred_check
      _
    $region67: #{actor_forward.1} parent=1 // pred_check_branch
      %2691 = sbr.rel (0) target = $region69
    $region68: #{actor_forward.1} parent=1 // pred_region
      _
    $region69: #{actor_forward.1} parent=1 // pred_fallthru
      _
    %2692 = vsyncpa [#allocation5], 1
    %2693 = vsyncpa [#allocation7], 1

</llo_original>
